<compile_context>
chip_gen: v6e
topology: v6e:2x2x1
jax: 0.10.0
libtpu: 0.0.40
codegen_flags: <defaults>
</compile_context>

<pallas_src>
import math
import functools

import jax
import jax.numpy as jnp
from jax import lax
from jax.experimental import pallas as pl
from jax.experimental.pallas import tpu as pltpu


_NEG_BIG = -1e30  # large finite negative; avoids exp(-inf - -inf) NaN pitfalls


def _pick_tile(dim, target, align=128):
    """Largest tile <= target that divides dim (prefer multiples of `align`)."""
    if dim <= target:
        return dim
    t = (target // align) * align
    while t >= align:
        if dim % t == 0:
            return t
        t -= align
    for t in range(target, 0, -1):      # fallback: any divisor
        if dim % t == 0:
            return t
    return dim


# ----------------------------------------------------------------------------
# Kernel 1: tiled linear layer  y = x @ W + b
# ----------------------------------------------------------------------------
def _linear_kernel(x_ref, w_ref, b_ref, o_ref, acc_ref):
    @pl.when(pl.program_id(2) == 0)
    def _():
        acc_ref[...] = jnp.zeros_like(acc_ref)

    acc_ref[...] += jnp.dot(x_ref[...], w_ref[...],
                            preferred_element_type=jnp.float32)

    @pl.when(pl.program_id(2) == pl.num_programs(2) - 1)
    def _():
        o_ref[...] = (acc_ref[...] + b_ref[...].astype(jnp.float32)
                      ).astype(o_ref.dtype)


def linear(x2d, w, b, *, tm=512, tn=512, tk=256):
    """x2d: (M, K), w: (K, N), b: (N,) -> (M, N)."""
    M, K = x2d.shape
    N = w.shape[1]
    tm, tn, tk = _pick_tile(M, tm), _pick_tile(N, tn), _pick_tile(K, tk)
    b2d = b.reshape(1, N)
    return pl.pallas_call(
        _linear_kernel,
        out_shape=jax.ShapeDtypeStruct((M, N), x2d.dtype),
        grid=(M // tm, N // tn, K // tk),
        in_specs=[
            pl.BlockSpec((tm, tk), lambda i, j, k: (i, k)),
            pl.BlockSpec((tk, tn), lambda i, j, k: (k, j)),
            pl.BlockSpec((1, tn), lambda i, j, k: (0, j)),
        ],
        out_specs=pl.BlockSpec((tm, tn), lambda i, j, k: (i, j)),
        scratch_shapes=[pltpu.VMEM((tm, tn), jnp.float32)],
        compiler_params=pltpu.CompilerParams(
            dimension_semantics=("parallel", "parallel", "arbitrary"),
            # kept <= 48 MiB so the same config stays safe on v7x (64 MiB VMEM)
            vmem_limit_bytes=48 * 1024 * 1024,
        ),
    )(x2d, w, b2d)


# ----------------------------------------------------------------------------
# Kernel 2: flash-style causal attention over a lower-triangular block schedule.
# Inputs are read straight from the fused qkv tensor of shape (B, T, 3C);
# along the last axis, block `h` (width hs) is Q-head h, `n_head + h` is
# K-head h, `2*n_head + h` is V-head h.
# ----------------------------------------------------------------------------
def _flash_causal_kernel(qi_tbl, ki_tbl, q_ref, k_ref, v_ref, o_ref,
                         m_ref, l_ref, acc_ref, *, scale):
    t = pl.program_id(2)
    qi = qi_tbl[t]
    ki = ki_tbl[t]

    @pl.when(ki == 0)            # first KV block of this query tile
    def _():
        m_ref[...] = jnp.full_like(m_ref, _NEG_BIG)
        l_ref[...] = jnp.zeros_like(l_ref)
        acc_ref[...] = jnp.zeros_like(acc_ref)

    def process(apply_mask):
        q = q_ref[0]             # (tq, hs)
        if scale != 1.0:         # normally folded into the Q projection weights
            q = q * jnp.asarray(scale, q.dtype)
        k = k_ref[0]             # (tk, hs)
        v = v_ref[0]             # (tk, hs)
        # q @ k^T without materializing a transpose: contract the last axes.
        s = lax.dot_general(q, k, (((1,), (1,)), ((), ())),
                            preferred_element_type=jnp.float32)
        if apply_mask:           # only the diagonal block needs the triangle
            tq_, tk_ = s.shape   # (requires tq == tk; asserted in the wrapper)
            row = lax.broadcasted_iota(jnp.int32, (tq_, tk_), 0)
            col = lax.broadcasted_iota(jnp.int32, (tq_, tk_), 1)
            s = jnp.where(row >= col, s, _NEG_BIG)
        m_prev = m_ref[...]
        m_new = jnp.maximum(m_prev, jnp.max(s, axis=-1, keepdims=True))
        alpha = jnp.exp(m_prev - m_new)
        p = jnp.exp(s - m_new)
        l_ref[...] = alpha * l_ref[...] + jnp.sum(p, axis=-1, keepdims=True)
        acc_ref[...] = alpha * acc_ref[...] + jnp.dot(
            p.astype(v.dtype), v, preferred_element_type=jnp.float32)
        m_ref[...] = m_new

    @pl.when(ki < qi)            # strictly below the diagonal: no mask needed
    def _():
        process(apply_mask=False)

    @pl.when(ki == qi)           # diagonal block: mask, then finalize (it is
    def _():                     # always the last KV block for this qi)
        process(apply_mask=True)
        o_ref[0] = (acc_ref[...] *
                    pl.reciprocal(l_ref[...], approx=True)).astype(o_ref.dtype)


def flash_causal_attention(qkv, n_head, *, tile=256, scale=None):
    """qkv: (B, T, 3C) -> attention output in (B, T, C) layout (heads merged)."""
    B, T, threeC = qkv.shape
    C = threeC // 3
    hs = C // n_head
    nh = n_head
    tq = tk = min(tile, T)
    assert tq == tk, "mask/skip logic assumes equal query/key tiles"
    assert T % tq == 0, "sequence length must be divisible by the tile size"
    # NOTE: hs should be a multiple of 128 so q/k/v/o blocks stay lane-dense.
    nq = T // tq
    if scale is None:
        scale = 1.0 / math.sqrt(hs)

    # Lower-triangular block schedule: only the nq*(nq+1)/2 live (qi, ki)
    # pairs are visited; upper-triangle blocks cost zero grid steps.
    qi_idx, ki_idx = [], []
    for q_blk in range(nq):
        for k_blk in range(q_blk + 1):
            qi_idx.append(q_blk)
            ki_idx.append(k_blk)
    qi_tbl = jnp.asarray(qi_idx, dtype=jnp.int32)
    ki_tbl = jnp.asarray(ki_idx, dtype=jnp.int32)
    n_blocks = len(qi_idx)

    # index_maps receive (grid indices..., *scalar-prefetch refs)
    def q_map(b, h, t, qi_t, ki_t):
        return (b, qi_t[t], h)

    def k_map(b, h, t, qi_t, ki_t):
        return (b, ki_t[t], nh + h)

    def v_map(b, h, t, qi_t, ki_t):
        return (b, ki_t[t], 2 * nh + h)

    def o_map(b, h, t, qi_t, ki_t):
        return (b, qi_t[t], h)

    kern = functools.partial(_flash_causal_kernel, scale=scale)
    return pl.pallas_call(
        kern,
        out_shape=jax.ShapeDtypeStruct((B, T, C), qkv.dtype),
        grid_spec=pltpu.PrefetchScalarGridSpec(
            num_scalar_prefetch=2,
            grid=(B, nh, n_blocks),
            in_specs=[
                pl.BlockSpec((1, tq, hs), q_map),
                pl.BlockSpec((1, tk, hs), k_map),
                pl.BlockSpec((1, tk, hs), v_map),
            ],
            out_specs=pl.BlockSpec((1, tq, hs), o_map),
            scratch_shapes=[
                pltpu.VMEM((tq, 1), jnp.float32),    # running max m
                pltpu.VMEM((tq, 1), jnp.float32),    # running denom l
                pltpu.VMEM((tq, hs), jnp.float32),   # output accumulator
            ],
        ),
        compiler_params=pltpu.CompilerParams(
            # B * nh shards across the two v7x TensorCores (keep it even/large)
            dimension_semantics=("parallel", "parallel", "arbitrary"),
            vmem_limit_bytes=32 * 1024 * 1024,
        ),
    )(qi_tbl, ki_tbl, qkv, qkv, qkv)


# ----------------------------------------------------------------------------
# Full module forward: CausalSelfAttention(x)
# ----------------------------------------------------------------------------
def causal_self_attention(x, params, n_head):
    B, T, C = x.shape
    hs = C // n_head
    scale = 1.0 / math.sqrt(hs)
    # Fold the softmax 1/sqrt(hs) scale into the Q projection (free: weight-side
    # scale instead of a per-(tq,tk)-tile multiply inside the flash kernel).
    w_attn = params["w_attn"].at[:, :C].multiply(scale)
    b_attn = params["b_attn"].at[:C].multiply(scale)
    # fused qkv projection (tiled Pallas matmul)
    qkv = linear(x.reshape(B * T, C), w_attn, b_attn)
    qkv = qkv.reshape(B, T, 3 * C)                       # free reshape, no copy
    # flash causal attention; scale already folded -> pass 1.0
    out = flash_causal_attention(qkv, n_head, scale=1.0)  # (B, T, C)
    # output projection (tiled Pallas matmul)
    y = linear(out.reshape(B * T, C), params["w_proj"], params["b_proj"])
    return y.reshape(B, T, C)


# Pure-JAX reference for a sanity check.
def _reference(x, params, n_head):
    B, T, C = x.shape
    hs = C // n_head
    qkv = x @ params["w_attn"] + params["b_attn"]
    q, k, v = jnp.split(qkv, 3, axis=2)
    q = q.reshape(B, T, n_head, hs).transpose(0, 2, 1, 3)
    k = k.reshape(B, T, n_head, hs).transpose(0, 2, 1, 3)
    v = v.reshape(B, T, n_head, hs).transpose(0, 2, 1, 3)
    s = (q @ jnp.swapaxes(k, -1, -2)) / math.sqrt(hs)
    mask = jnp.tril(jnp.ones((T, T), bool))
    s = jnp.where(mask[None, None], s, -jnp.inf)
    att = jax.nn.softmax(s, axis=-1)
    out = (att @ v).transpose(0, 2, 1, 3).reshape(B, T, C)
    return out @ params["w_proj"] + params["b_proj"]


if __name__ == "__main__":
    # TPU-friendly small config: n_embd=256, n_head=2 -> head_size=128
    # (lane-dense blocks), seq=512 with 256-wide attention tiles so nq=2 and
    # the triangular schedule / online-softmax recombination are exercised.
    B, T, C, n_head = 2, 512, 256, 2

    key = jax.random.PRNGKey(0)
    k_x, k_wa, k_ba, k_wp, k_bp = jax.random.split(key, 5)

    x = jax.random.normal(k_x, (B, T, C), dtype=jnp.float32)
    params = {
        "w_attn": jax.random.normal(k_wa, (C, 3 * C), jnp.float32) * 0.02,
        "b_attn": jax.random.normal(k_ba, (3 * C,), jnp.float32) * 0.02,
        "w_proj": jax.random.normal(k_wp, (C, C), jnp.float32) * 0.02,
        "b_proj": jax.random.normal(k_bp, (C,), jnp.float32) * 0.02,
    }

    y_ref = _reference(x, params, n_head)

    # f32 run: tight check against the pure-JAX reference.
    y = jax.block_until_ready(causal_self_attention(x, params, n_head))
    assert jnp.allclose(y, y_ref, atol=1e-3, rtol=1e-3), "f32 mismatch vs ref"

    # bf16 run (recommended production dtype: full-rate MXU on v6e/v7x and
    # half the HBM/VMEM bytes everywhere); accumulation stays f32 in-kernel.
    x_bf = x.astype(jnp.bfloat16)
    params_bf = {k: v.astype(jnp.bfloat16) for k, v in params.items()}
    y_bf = jax.block_until_ready(causal_self_attention(x_bf, params_bf, n_head))
    assert jnp.allclose(y_bf.astype(jnp.float32), y_ref, atol=5e-2, rtol=5e-2), \
        "bf16 mismatch vs reference"

    print("KERNEL_OK")
</pallas_src>

<mosaic_0001>
module attributes {stable_mosaic.version = 11 : i64} {
  func.func @_linear_kernel(%arg0: i32, %arg1: i32, %arg2: i32, %arg3: memref<512x256xf32, #tpu.memory_space<vmem>>, %arg4: memref<256x384xf32, #tpu.memory_space<vmem>>, %arg5: memref<1x384xf32, #tpu.memory_space<vmem>>, %arg6: memref<512x384xf32, #tpu.memory_space<vmem>>, %arg7: memref<512x384xf32, #tpu.memory_space<vmem>>) attributes {dimension_semantics = [#tpu.dimension_semantics<parallel>, #tpu.dimension_semantics<parallel>, #tpu.dimension_semantics<arbitrary>], iteration_bounds = array<i64: 2, 2, 1>, scalar_prefetch = 0 : i64, scratch_operands = 1 : i64, tpu.core_type = #tpu.core_type<tc>, window_params = [{transform_indices = @transform_0, window_bounds = array<i64: 512, 256>}, {transform_indices = @transform_1, window_bounds = array<i64: 256, 384>}, {transform_indices = @transform_2, window_bounds = array<i64: 1, 384>}, {transform_indices = @transform_3, window_bounds = array<i64: 512, 384>}]} {
    %c0_i32 = arith.constant 0 : i32
    %0 = arith.cmpi eq, %arg2, %c0_i32 : i32
    %1 = arith.extui %0 : i1 to i32
    %c0_i32_0 = arith.constant 0 : i32
    %2 = arith.cmpi ne, %1, %c0_i32_0 : i32
    scf.if %2 {
      %cst_10 = arith.constant 0.000000e+00 : f32
      %12 = vector.broadcast %cst_10 : f32 to vector<512x384xf32>
      %c0_11 = arith.constant 0 : index
      %c0_12 = arith.constant 0 : index
      %13 = vector.load %arg7[%c0_11, %c0_12] : memref<512x384xf32, #tpu.memory_space<vmem>>, vector<512x384xf32>
      tpu.vector_store %arg7[%c0_11, %c0_12], %12 {strides = array<i32>} : memref<512x384xf32, #tpu.memory_space<vmem>>, vector<512x384xf32>,
    } else {
    }
    %c0 = arith.constant 0 : index
    %c0_1 = arith.constant 0 : index
    %3 = vector.load %arg7[%c0, %c0_1] : memref<512x384xf32, #tpu.memory_space<vmem>>, vector<512x384xf32>
    %c0_2 = arith.constant 0 : index
    %c0_3 = arith.constant 0 : index
    %4 = vector.load %arg3[%c0_2, %c0_3] : memref<512x256xf32, #tpu.memory_space<vmem>>, vector<512x256xf32>
    %c0_4 = arith.constant 0 : index
    %c0_5 = arith.constant 0 : index
    %5 = vector.load %arg4[%c0_4, %c0_5] : memref<256x384xf32, #tpu.memory_space<vmem>>, vector<256x384xf32>
    %cst = arith.constant dense<0.000000e+00> : vector<512x384xf32>
    %6 = tpu.matmul %4, %5, %cst {dimension_numbers = #tpu.dot_dimension_numbers<[1], [0], [0], [1], [0, 0, 1, 1], [], []>} : vector<512x256xf32>, vector<256x384xf32>, vector<512x384xf32> -> vector<512x384xf32>
    %7 = arith.addf %3, %6 : vector<512x384xf32>
    %c0_6 = arith.constant 0 : index
    %c0_7 = arith.constant 0 : index
    %8 = vector.load %arg7[%c0_6, %c0_7] : memref<512x384xf32, #tpu.memory_space<vmem>>, vector<512x384xf32>
    tpu.vector_store %arg7[%c0_6, %c0_7], %7 {strides = array<i32>} : memref<512x384xf32, #tpu.memory_space<vmem>>, vector<512x384xf32>,
    %c0_i32_8 = arith.constant 0 : i32
    %9 = arith.cmpi eq, %arg2, %c0_i32_8 : i32
    %10 = arith.extui %9 : i1 to i32
    %c0_i32_9 = arith.constant 0 : i32
    %11 = arith.cmpi ne, %10, %c0_i32_9 : i32
    scf.if %11 {
      %c0_10 = arith.constant 0 : index
      %c0_11 = arith.constant 0 : index
      %12 = vector.load %arg7[%c0_10, %c0_11] : memref<512x384xf32, #tpu.memory_space<vmem>>, vector<512x384xf32>
      %c0_12 = arith.constant 0 : index
      %c0_13 = arith.constant 0 : index
      %13 = vector.load %arg5[%c0_12, %c0_13] : memref<1x384xf32, #tpu.memory_space<vmem>>, vector<1x384xf32>
      %14 = vector.broadcast %13 : vector<1x384xf32> to vector<512x384xf32>
      %15 = arith.addf %12, %14 : vector<512x384xf32>
      %c0_14 = arith.constant 0 : index
      %c0_15 = arith.constant 0 : index
      %16 = vector.load %arg6[%c0_14, %c0_15] : memref<512x384xf32, #tpu.memory_space<vmem>>, vector<512x384xf32>
      tpu.vector_store %arg6[%c0_14, %c0_15], %15 {strides = array<i32>} : memref<512x384xf32, #tpu.memory_space<vmem>>, vector<512x384xf32>,
    } else {
    }
    return
  }
  func.func @transform_0(%arg0: i32, %arg1: i32, %arg2: i32) -> (i32, i32) {
    %c0_i32 = arith.constant 0 : i32
    return %arg0, %arg2 : i32, i32
  }
  func.func @transform_1(%arg0: i32, %arg1: i32, %arg2: i32) -> (i32, i32) {
    %c0_i32 = arith.constant 0 : i32
    return %arg2, %arg1 : i32, i32
  }
  func.func @transform_2(%arg0: i32, %arg1: i32, %arg2: i32) -> (i32, i32) {
    %c0_i32 = arith.constant 0 : i32
    %c0_i32_0 = arith.constant 0 : i32
    return %c0_i32, %arg1 : i32, i32
  }
  func.func @transform_3(%arg0: i32, %arg1: i32, %arg2: i32) -> (i32, i32) {
    %c0_i32 = arith.constant 0 : i32
    return %arg0, %arg1 : i32, i32
  }
}

</mosaic_0001>

<llo_original>
// kernel: tpu_custom_call.1
$region0: #{tpu_custom_call.1}
  #allocation0 [shape = 'u32[]', space=smem, size = 0x4, offset = 0x4, fixed_abs, tag = 'smem constant byte address 0x4 - core index']
  #allocation1 [shape = 'u32[144,128]{1,0:T(1,128)}', space=vmem, size = 0x12000, scoped, tag = 'internal scratch']
  #allocation2 [shape = 'f32[512,384]{1,0:T(8,128)}', space=vmem, size = 0xc0000, scoped, tag = 'scratch operand']
  %s0 = inlined_call_operand.hbm [shape: f32[1024,256], index: 0, kind: input, shape index: {}]
  %s1 = inlined_call_operand.hbm [shape: f32[256,768], index: 1, kind: input, shape index: {}]
  %s2 = inlined_call_operand.hbm [shape: f32[1,768], index: 2, kind: input, shape index: {}]
  %s3 = inlined_call_operand.hbm [shape: f32[1024,768], index: 3, kind: output, shape index: {}]
  %s4 = sld [smem:[#allocation0]]
  $region65: #{tpu_custom_call.1} parent=0
    _
  %s6 = ssub.s32 1, %s4
  %s7 = scalar_select 0, %s6, %s4
  $region1: #{tpu_custom_call.1} parent=0
    #allocation3 [shape = 'u8[1048576]{0}', space=vmem, size = 0x100000, scoped, tag = 'input window, operand 0']
    #allocation4 [shape = 's32[2]{0}', space=sflag, size = 0x8, scoped, tag = 'scoped memory for tpu_custom_call.1']
    #allocation5 [shape = 's32[2]{0}', space=sflag, size = 0x8, scoped, tag = 'scoped memory for tpu_custom_call.1']
    #allocation6 [shape = 'u8[786432]{0}', space=vmem, size = 0xc0000, scoped, tag = 'input window, operand 1']
    #allocation7 [shape = 's32[2]{0}', space=sflag, size = 0x8, scoped, tag = 'scoped memory for tpu_custom_call.1']
    #allocation8 [shape = 'u8[3072]{0}', space=vmem, size = 0xc00, scoped, tag = 'input window, operand 2']
    #allocation9 [shape = 'u8[1572864]{0}', space=vmem, size = 0x180000, scoped, tag = 'output window, operand 0']
    %8 = vsyncpa [#allocation4], 0
    %s9 = scalar_lea.sflag [#allocation4], 1
    %10 = vsyncpa %s9, 0
    %11 = vsyncpa [#allocation7], 0
    %s12 = scalar_lea.sflag [#allocation7], 1
    %13 = vsyncpa %s12, 0
    %14 = vsyncpa [#allocation5], 0
    %s15 = scalar_lea.sflag [#allocation5], 1
    %16 = vsyncpa %s15, 0
    loop: start=0, step=1, limit=6
    $region2: #{tpu_custom_call.1} parent=1 // loop_pre_header
      _
    $region3: #{tpu_custom_call.1} parent=1 // loop_header
      %s18 = sphi 0, %s22
      %p19 = scmp.ge.s32.totalorder %s18, 6
      %s25 = sphi 0, %s44
      %s26 = sphi 0, %s40
      %s27 = sphi 0, %s36
      %s28 = sphi 0, %s25
      %s29 = sphi 0, %s26
      %s30 = sphi 0, %s27
      %s31 = sphi 0, %s28
      %s32 = sphi 0, %s29
      %s33 = sphi 0, %s30
      %s49 = sphi 0, %s51
      %s52 = sphi 0, %s49
      %s53 = sphi 0, %s52
      %s69 = sphi 0, %s53
      %s77 = sphi 0, %s79
      %s80 = sphi 0, %s77
      %s81 = sphi 0, %s80
      %s97 = sphi 0, %s81
      %s103 = sphi 0, %s105
      %s106 = sphi 0, %s103
      %s107 = sphi 0, %s106
      %s123 = sphi 0, %s107
      %s131 = sphi 0, %s133
      %s134 = sphi 0, %s131
      %s135 = sphi 0, %s134
      %s151 = sphi 0, %s135
    $region4: #{tpu_custom_call.1} parent=1 // loop_header_branch
      %21 = sbr.rel (%p19) target = $region8
    $region5: #{tpu_custom_call.1} parent=1 // loop_body
      %s23 = ssub.s32 %s18, 1
      %s24 = ssub.s32 %s18, 2
      %s34 = sadd.s32 1, %s27
      %p35 = scmp.ge.s32.totalorder %s34, 1
      %s36 = scalar_select %p35, 0, %s34
      %s37 = sadd.s32 1, %s26
      %s38 = scalar_select %p35, %s37, %s26
      %p39 = scmp.ge.s32.totalorder %s38, 2
      %s40 = scalar_select %p39, 0, %s38
      %s41 = sadd.s32 1, %s25
      %s42 = scalar_select %p39, %s41, %s25
      %p43 = scmp.ge.s32.totalorder %s42, 2
      %s44 = scalar_select %p43, 0, %s42
      %s45 = ssub.s32 %s25, %s44
      %s46 = ssub.s32 %s27, %s36
      %s47 = sor.u32 %s45, %s46
      %p48 = scmp.eq.s32.totalorder %s47, 0
      %s50 = sadd.s32 %s49, 1
      %s51 = scalar_select %p48, %s49, %s50
      %p54 = pneg %p48
      %p55 = scmp.eq.s32.totalorder %s18, 3
      %p56 = por %p54, %p55
      %p57 = scmp.ne.s32.totalorder %s49, %s52
      %p58 = scmp.eq.s32.totalorder %s18, 0
      %p59 = por %p57, %p58
      %p60 = scmp.ne.s32.totalorder %s49, %s52
      %p61 = scmp.eq.s32.totalorder %s23, 3
      %p62 = por %p60, %p61
      %p63 = scmp.ne.s32.totalorder %s52, %s53
      %p64 = scmp.eq.s32.totalorder %s23, 0
      %p65 = por %p63, %p64
      %p66 = scmp.ne.s32.totalorder %s52, %s53
      %p67 = scmp.eq.s32.totalorder %s24, 3
      %p68 = por %p66, %p67
      %p70 = scmp.ne.s32.totalorder %s53, %s69
      %p71 = scmp.eq.s32.totalorder %s24, 0
      %p72 = por %p70, %p71
      %s73 = ssub.s32 %s27, %s36
      %s74 = ssub.s32 %s26, %s40
      %s75 = sor.u32 %s73, %s74
      %p76 = scmp.eq.s32.totalorder %s75, 0
      %s78 = sadd.s32 %s77, 1
      %s79 = scalar_select %p76, %s77, %s78
      %p82 = pneg %p76
      %p83 = scmp.eq.s32.totalorder %s18, 3
      %p84 = por %p82, %p83
      %p85 = scmp.ne.s32.totalorder %s77, %s80
      %p86 = scmp.eq.s32.totalorder %s18, 0
      %p87 = por %p85, %p86
      %p88 = scmp.ne.s32.totalorder %s77, %s80
      %p89 = scmp.eq.s32.totalorder %s23, 3
      %p90 = por %p88, %p89
      %p91 = scmp.ne.s32.totalorder %s80, %s81
      %p92 = scmp.eq.s32.totalorder %s23, 0
      %p93 = por %p91, %p92
      %p94 = scmp.ne.s32.totalorder %s80, %s81
      %p95 = scmp.eq.s32.totalorder %s24, 3
      %p96 = por %p94, %p95
      %p98 = scmp.ne.s32.totalorder %s81, %s97
      %p99 = scmp.eq.s32.totalorder %s24, 0
      %p100 = por %p98, %p99
      %s101 = ssub.s32 %s26, %s40
      %p102 = scmp.eq.s32.totalorder %s101, 0
      %s104 = sadd.s32 %s103, 1
      %s105 = scalar_select %p102, %s103, %s104
      %p108 = pneg %p102
      %p109 = scmp.eq.s32.totalorder %s18, 3
      %p110 = por %p108, %p109
      %p111 = scmp.ne.s32.totalorder %s103, %s106
      %p112 = scmp.eq.s32.totalorder %s18, 0
      %p113 = por %p111, %p112
      %p114 = scmp.ne.s32.totalorder %s103, %s106
      %p115 = scmp.eq.s32.totalorder %s23, 3
      %p116 = por %p114, %p115
      %p117 = scmp.ne.s32.totalorder %s106, %s107
      %p118 = scmp.eq.s32.totalorder %s23, 0
      %p119 = por %p117, %p118
      %p120 = scmp.ne.s32.totalorder %s106, %s107
      %p121 = scmp.eq.s32.totalorder %s24, 3
      %p122 = por %p120, %p121
      %p124 = scmp.ne.s32.totalorder %s107, %s123
      %p125 = scmp.eq.s32.totalorder %s24, 0
      %p126 = por %p124, %p125
      %s127 = ssub.s32 %s25, %s44
      %s128 = ssub.s32 %s26, %s40
      %s129 = sor.u32 %s127, %s128
      %p130 = scmp.eq.s32.totalorder %s129, 0
      %s132 = sadd.s32 %s131, 1
      %s133 = scalar_select %p130, %s131, %s132
      %p136 = pneg %p130
      %p137 = scmp.eq.s32.totalorder %s18, 3
      %p138 = por %p136, %p137
      %p139 = scmp.ne.s32.totalorder %s131, %s134
      %p140 = scmp.eq.s32.totalorder %s18, 0
      %p141 = por %p139, %p140
      %p142 = scmp.ne.s32.totalorder %s131, %s134
      %p143 = scmp.eq.s32.totalorder %s23, 3
      %p144 = por %p142, %p143
      %p145 = scmp.ne.s32.totalorder %s134, %s135
      %p146 = scmp.eq.s32.totalorder %s23, 0
      %p147 = por %p145, %p146
      %p148 = scmp.ne.s32.totalorder %s134, %s135
      %p149 = scmp.eq.s32.totalorder %s24, 3
      %p150 = por %p148, %p149
      %p152 = scmp.ne.s32.totalorder %s135, %s151
      %p153 = scmp.eq.s32.totalorder %s24, 0
      %p154 = por %p152, %p153
      %p155 = scmp.le.s32.totalorder 1, %s18
      %p156 = scmp.lt.s32.totalorder %s18, 5
      %p157 = pnand %p155, %p156
      %p158 = pneg %p157
      // Predicated region
      $region9: #{tpu_custom_call.1} parent=5 // pred_check
        _
      $region10: #{tpu_custom_call.1} parent=5 // pred_check_branch
        %160 = sbr.rel (%p157) target = $region12
      $region11: #{tpu_custom_call.1} parent=5 // pred_region
        %s161 = ssub.s32 %s18, 1
      $region12: #{tpu_custom_call.1} parent=5 // pred_fallthru
        _
      %p162 = scmp.lt.s32.totalorder %s18, 4
      // Predicated region
      $region13: #{tpu_custom_call.1} parent=5 // pred_check
        %p163 = pneg %p162
      $region14: #{tpu_custom_call.1} parent=5 // pred_check_branch
        %165 = sbr.rel (%p163) target = $region16
      $region15: #{tpu_custom_call.1} parent=5 // pred_region
        // Predicated region
        $region17: #{tpu_custom_call.1} parent=15 // pred_check
          %p166 = pneg %p59
        $region18: #{tpu_custom_call.1} parent=15 // pred_check_branch
          %168 = sbr.rel (%p166) target = $region20
        $region19: #{tpu_custom_call.1} parent=15 // pred_region
          %s169 = sand.u32 %s49, 1
          %s170 = scalar_lea.sflag [#allocation4], %s169
          %s171 = sand.u32 %s49, 1
          %s172 = smul.addr %s171, 1024
          %s173 = scalar_lea.vmem [#allocation3], %s172
          %s174 = smul.u32 64, %s25
          %s175 = smul.u32 2, %s27
          %s177 = ssub.s32 16384, 16384
          %178 = vsyncadd %s170, %s177
          %s179 = smul.addr %s174, 2
          %s180 = sadd.s32 %s175, %s179
          %s181 = smul.addr %s180, 128
          %s182 = scalar_lea.hbm %s0, %s181
          %s183 = sshll.u32 %s173, 4
          %s184 = int_to_ptr.vmem [resolvable:$true] %s183
          %189 = dma.hbm_to_vmem [thread:$0]  %s182, 16384, %s184, %s170, 256, 256, 16
        $region20: #{tpu_custom_call.1} parent=15 // pred_fallthru
          _
        // Predicated region
        $region21: #{tpu_custom_call.1} parent=15 // pred_check
          %p190 = pneg %p87
        $region22: #{tpu_custom_call.1} parent=15 // pred_check_branch
          %192 = sbr.rel (%p190) target = $region24
        $region23: #{tpu_custom_call.1} parent=15 // pred_region
          %s193 = sand.u32 %s18, 1
          %s194 = scalar_lea.sflag [#allocation7], %s193
          %s195 = sand.u32 %s77, 1
          %s196 = smul.addr %s195, 768
          %s197 = scalar_lea.vmem [#allocation6], %s196
          %s198 = smul.u32 32, %s27
          %s199 = smul.u32 3, %s26
          %s201 = ssub.s32 12288, 12288
          %202 = vsyncadd %s194, %s201
          %s203 = smul.addr %s198, 6
          %s204 = sadd.s32 %s199, %s203
          %s205 = smul.addr %s204, 128
          %s206 = scalar_lea.hbm %s1, %s205
          %s207 = sshll.u32 %s197, 4
          %s208 = int_to_ptr.vmem [resolvable:$true] %s207
          %213 = dma.hbm_to_vmem [thread:$0]  %s206, 12288, %s208, %s194, 768, 384, 24
        $region24: #{tpu_custom_call.1} parent=15 // pred_fallthru
          _
        // Predicated region
        $region25: #{tpu_custom_call.1} parent=15 // pred_check
          %p214 = pneg %p113
        $region26: #{tpu_custom_call.1} parent=15 // pred_check_branch
          %216 = sbr.rel (%p214) target = $region28
        $region27: #{tpu_custom_call.1} parent=15 // pred_region
          %s217 = sand.u32 %s18, 1
          %s218 = scalar_lea.sflag [#allocation7], %s217
          %s219 = sand.u32 %s103, 1
          %s220 = smul.addr %s219, 3
          %s221 = scalar_lea.vmem [#allocation8], %s220
          %s222 = smul.u32 3, %s26
          %s224 = ssub.s32 48, 48
          %225 = vsyncadd %s218, %s224
          %s226 = smul.addr %s222, 16
          %s227 = scalar_lea.hbm %s2, %s226
          %s229 = sshll.u32 %s221, 4
          %s230 = int_to_ptr.vmem [resolvable:$true] %s229
          %232 = dma.hbm_to_vmem [thread:$0]  %s227, 48, %s230, %s218
        $region28: #{tpu_custom_call.1} parent=15 // pred_fallthru
          _
      $region16: #{tpu_custom_call.1} parent=5 // pred_fallthru
        _
      %p233 = scmp.le.s32.totalorder 1, %s18
      %p234 = scmp.lt.s32.totalorder %s18, 5
      %p235 = pnand %p233, %p234
      %p236 = pneg %p235
      // Predicated region
      $region29: #{tpu_custom_call.1} parent=5 // pred_check
        _
      $region30: #{tpu_custom_call.1} parent=5 // pred_check_branch
        %238 = sbr.rel (%p235) target = $region32
      $region31: #{tpu_custom_call.1} parent=5 // pred_region
        %s239 = ssub.s32 %s18, 1
        %s240 = sand.u32 %s52, 1
        %s241 = scalar_lea.sflag [#allocation4], %s240
        %s242 = sand.u32 %s52, 1
        %s243 = smul.addr %s242, 1024
        %s244 = scalar_lea.vmem [#allocation3], %s243
        // Predicated region
        $region33: #{tpu_custom_call.1} parent=31 // pred_check
          %p245 = pneg %p65
        $region34: #{tpu_custom_call.1} parent=31 // pred_check_branch
          %247 = sbr.rel (%p245) target = $region36
        $region35: #{tpu_custom_call.1} parent=31 // pred_region
          %248 = dma.done %s241, 16384
        $region36: #{tpu_custom_call.1} parent=31 // pred_fallthru
          _
        %s249 = sand.u32 %s23, 1
        %s250 = scalar_lea.sflag [#allocation7], %s249
        %s251 = sand.u32 %s80, 1
        %s252 = smul.addr %s251, 768
        %s253 = scalar_lea.vmem [#allocation6], %s252
        // Predicated region
        $region37: #{tpu_custom_call.1} parent=31 // pred_check
          %p254 = pneg %p93
        $region38: #{tpu_custom_call.1} parent=31 // pred_check_branch
          %256 = sbr.rel (%p254) target = $region40
        $region39: #{tpu_custom_call.1} parent=31 // pred_region
          %257 = dma.done %s250, 12288
        $region40: #{tpu_custom_call.1} parent=31 // pred_fallthru
          _
        %s258 = sand.u32 %s23, 1
        %s259 = scalar_lea.sflag [#allocation7], %s258
        %s260 = sand.u32 %s106, 1
        %s261 = smul.addr %s260, 3
        %s262 = scalar_lea.vmem [#allocation8], %s261
        // Predicated region
        $region41: #{tpu_custom_call.1} parent=31 // pred_check
          %p263 = pneg %p119
        $region42: #{tpu_custom_call.1} parent=31 // pred_check_branch
          %265 = sbr.rel (%p263) target = $region44
        $region43: #{tpu_custom_call.1} parent=31 // pred_region
          %266 = dma.done %s259, 48
        $region44: #{tpu_custom_call.1} parent=31 // pred_fallthru
          _
        %s267 = sand.u32 %s52, 1
        %s268 = scalar_lea.sflag [#allocation4], %s267
        %s269 = sand.u32 %s52, 1
        %s270 = smul.addr %s269, 1024
        %s271 = scalar_lea.vmem [#allocation3], %s270
        %p272 = pneg %p65
        %p273 = pneg %p62
        %s274 = sand.u32 %s23, 1
        %s275 = scalar_lea.sflag [#allocation7], %s274
        %s276 = sand.u32 %s80, 1
        %s277 = smul.addr %s276, 768
        %s278 = scalar_lea.vmem [#allocation6], %s277
        %p279 = pneg %p93
        %p280 = pneg %p90
        %s281 = sand.u32 %s23, 1
        %s282 = scalar_lea.sflag [#allocation7], %s281
        %s283 = sand.u32 %s106, 1
        %s284 = smul.addr %s283, 3
        %s285 = scalar_lea.vmem [#allocation8], %s284
        %p286 = pneg %p119
        %p287 = pneg %p116
        %p288 = pneg %p147
        %p289 = pneg %p144
        %s290 = sand.u32 %s134, 1
        %s291 = scalar_lea.sflag [#allocation5], %s290
        %s292 = sand.u32 %s134, 1
        %s293 = smul.addr %s292, 1536
        %s294 = scalar_lea.vmem [#allocation9], %s293
        %s295 = smul.u32 64, %s28
        %s296 = smul.u32 2, %s30
        %s297 = smul.u32 32, %s30
        %s298 = smul.u32 3, %s29
        %s299 = smul.u32 3, %s29
        %s300 = smul.u32 64, %s28
        %s301 = smul.u32 3, %s29
        %p302 = scmp.eq.s32.totalorder %s30, 0
        // Predicated region
        $region45: #{tpu_custom_call.1} parent=31 // pred_check
          %p303 = pneg %p302
        $region46: #{tpu_custom_call.1} parent=31 // pred_check_branch
          %305 = sbr.rel (%p303) target = $region48
        $region47: #{tpu_custom_call.1} parent=31 // pred_region
          %306 = vst [vmem:[#allocation2] sm:$0xff] 0.0
          %307 = vst [vmem:[#allocation2 + $0x8] sm:$0xff] 0.0
          %308 = vst [vmem:[#allocation2 + $0x10] sm:$0xff] 0.0
          %309 = vst [vmem:[#allocation2 + $0x18] sm:$0xff] 0.0
          %310 = vst [vmem:[#allocation2 + $0x20] sm:$0xff] 0.0
          %311 = vst [vmem:[#allocation2 + $0x28] sm:$0xff] 0.0
          %312 = vst [vmem:[#allocation2 + $0x30] sm:$0xff] 0.0
          %313 = vst [vmem:[#allocation2 + $0x38] sm:$0xff] 0.0
          %314 = vst [vmem:[#allocation2 + $0x40] sm:$0xff] 0.0
          %315 = vst [vmem:[#allocation2 + $0x48] sm:$0xff] 0.0
          %316 = vst [vmem:[#allocation2 + $0x50] sm:$0xff] 0.0
          %317 = vst [vmem:[#allocation2 + $0x58] sm:$0xff] 0.0
          %318 = vst [vmem:[#allocation2 + $0x60] sm:$0xff] 0.0
          %319 = vst [vmem:[#allocation2 + $0x68] sm:$0xff] 0.0
          %320 = vst [vmem:[#allocation2 + $0x70] sm:$0xff] 0.0
          %321 = vst [vmem:[#allocation2 + $0x78] sm:$0xff] 0.0
          %322 = vst [vmem:[#allocation2 + $0x80] sm:$0xff] 0.0
          %323 = vst [vmem:[#allocation2 + $0x88] sm:$0xff] 0.0
          %324 = vst [vmem:[#allocation2 + $0x90] sm:$0xff] 0.0
          %325 = vst [vmem:[#allocation2 + $0x98] sm:$0xff] 0.0
          %326 = vst [vmem:[#allocation2 + $0xa0] sm:$0xff] 0.0
          %327 = vst [vmem:[#allocation2 + $0xa8] sm:$0xff] 0.0
          %328 = vst [vmem:[#allocation2 + $0xb0] sm:$0xff] 0.0
          %329 = vst [vmem:[#allocation2 + $0xb8] sm:$0xff] 0.0
          %330 = vst [vmem:[#allocation2 + $0xc0] sm:$0xff] 0.0
          %331 = vst [vmem:[#allocation2 + $0xc8] sm:$0xff] 0.0
          %332 = vst [vmem:[#allocation2 + $0xd0] sm:$0xff] 0.0
          %333 = vst [vmem:[#allocation2 + $0xd8] sm:$0xff] 0.0
          %334 = vst [vmem:[#allocation2 + $0xe0] sm:$0xff] 0.0
          %335 = vst [vmem:[#allocation2 + $0xe8] sm:$0xff] 0.0
          %336 = vst [vmem:[#allocation2 + $0xf0] sm:$0xff] 0.0
          %337 = vst [vmem:[#allocation2 + $0xf8] sm:$0xff] 0.0
          %338 = vst [vmem:[#allocation2 + $0x100] sm:$0xff] 0.0
          %339 = vst [vmem:[#allocation2 + $0x108] sm:$0xff] 0.0
          %340 = vst [vmem:[#allocation2 + $0x110] sm:$0xff] 0.0
          %341 = vst [vmem:[#allocation2 + $0x118] sm:$0xff] 0.0
          %342 = vst [vmem:[#allocation2 + $0x120] sm:$0xff] 0.0
          %343 = vst [vmem:[#allocation2 + $0x128] sm:$0xff] 0.0
          %344 = vst [vmem:[#allocation2 + $0x130] sm:$0xff] 0.0
          %345 = vst [vmem:[#allocation2 + $0x138] sm:$0xff] 0.0
          %346 = vst [vmem:[#allocation2 + $0x140] sm:$0xff] 0.0
          %347 = vst [vmem:[#allocation2 + $0x148] sm:$0xff] 0.0
          %348 = vst [vmem:[#allocation2 + $0x150] sm:$0xff] 0.0
          %349 = vst [vmem:[#allocation2 + $0x158] sm:$0xff] 0.0
          %350 = vst [vmem:[#allocation2 + $0x160] sm:$0xff] 0.0
          %351 = vst [vmem:[#allocation2 + $0x168] sm:$0xff] 0.0
          %352 = vst [vmem:[#allocation2 + $0x170] sm:$0xff] 0.0
          %353 = vst [vmem:[#allocation2 + $0x178] sm:$0xff] 0.0
          %354 = vst [vmem:[#allocation2 + $0x180] sm:$0xff] 0.0
          %355 = vst [vmem:[#allocation2 + $0x188] sm:$0xff] 0.0
          %356 = vst [vmem:[#allocation2 + $0x190] sm:$0xff] 0.0
          %357 = vst [vmem:[#allocation2 + $0x198] sm:$0xff] 0.0
          %358 = vst [vmem:[#allocation2 + $0x1a0] sm:$0xff] 0.0
          %359 = vst [vmem:[#allocation2 + $0x1a8] sm:$0xff] 0.0
          %360 = vst [vmem:[#allocation2 + $0x1b0] sm:$0xff] 0.0
          %361 = vst [vmem:[#allocation2 + $0x1b8] sm:$0xff] 0.0
          %362 = vst [vmem:[#allocation2 + $0x1c0] sm:$0xff] 0.0
          %363 = vst [vmem:[#allocation2 + $0x1c8] sm:$0xff] 0.0
          %364 = vst [vmem:[#allocation2 + $0x1d0] sm:$0xff] 0.0
          %365 = vst [vmem:[#allocation2 + $0x1d8] sm:$0xff] 0.0
          %366 = vst [vmem:[#allocation2 + $0x1e0] sm:$0xff] 0.0
          %367 = vst [vmem:[#allocation2 + $0x1e8] sm:$0xff] 0.0
          %368 = vst [vmem:[#allocation2 + $0x1f0] sm:$0xff] 0.0
          %369 = vst [vmem:[#allocation2 + $0x1f8] sm:$0xff] 0.0
          %370 = vst [vmem:[#allocation2 + $0x200] sm:$0xff] 0.0
          %371 = vst [vmem:[#allocation2 + $0x208] sm:$0xff] 0.0
          %372 = vst [vmem:[#allocation2 + $0x210] sm:$0xff] 0.0
          %373 = vst [vmem:[#allocation2 + $0x218] sm:$0xff] 0.0
          %374 = vst [vmem:[#allocation2 + $0x220] sm:$0xff] 0.0
          %375 = vst [vmem:[#allocation2 + $0x228] sm:$0xff] 0.0
          %376 = vst [vmem:[#allocation2 + $0x230] sm:$0xff] 0.0
          %377 = vst [vmem:[#allocation2 + $0x238] sm:$0xff] 0.0
          %378 = vst [vmem:[#allocation2 + $0x240] sm:$0xff] 0.0
          %379 = vst [vmem:[#allocation2 + $0x248] sm:$0xff] 0.0
          %380 = vst [vmem:[#allocation2 + $0x250] sm:$0xff] 0.0
          %381 = vst [vmem:[#allocation2 + $0x258] sm:$0xff] 0.0
          %382 = vst [vmem:[#allocation2 + $0x260] sm:$0xff] 0.0
          %383 = vst [vmem:[#allocation2 + $0x268] sm:$0xff] 0.0
          %384 = vst [vmem:[#allocation2 + $0x270] sm:$0xff] 0.0
          %385 = vst [vmem:[#allocation2 + $0x278] sm:$0xff] 0.0
          %386 = vst [vmem:[#allocation2 + $0x280] sm:$0xff] 0.0
          %387 = vst [vmem:[#allocation2 + $0x288] sm:$0xff] 0.0
          %388 = vst [vmem:[#allocation2 + $0x290] sm:$0xff] 0.0
          %389 = vst [vmem:[#allocation2 + $0x298] sm:$0xff] 0.0
          %390 = vst [vmem:[#allocation2 + $0x2a0] sm:$0xff] 0.0
          %391 = vst [vmem:[#allocation2 + $0x2a8] sm:$0xff] 0.0
          %392 = vst [vmem:[#allocation2 + $0x2b0] sm:$0xff] 0.0
          %393 = vst [vmem:[#allocation2 + $0x2b8] sm:$0xff] 0.0
          %394 = vst [vmem:[#allocation2 + $0x2c0] sm:$0xff] 0.0
          %395 = vst [vmem:[#allocation2 + $0x2c8] sm:$0xff] 0.0
          %396 = vst [vmem:[#allocation2 + $0x2d0] sm:$0xff] 0.0
          %397 = vst [vmem:[#allocation2 + $0x2d8] sm:$0xff] 0.0
          %398 = vst [vmem:[#allocation2 + $0x2e0] sm:$0xff] 0.0
          %399 = vst [vmem:[#allocation2 + $0x2e8] sm:$0xff] 0.0
          %400 = vst [vmem:[#allocation2 + $0x2f0] sm:$0xff] 0.0
          %401 = vst [vmem:[#allocation2 + $0x2f8] sm:$0xff] 0.0
          %402 = vst [vmem:[#allocation2 + $0x300] sm:$0xff] 0.0
          %403 = vst [vmem:[#allocation2 + $0x308] sm:$0xff] 0.0
          %404 = vst [vmem:[#allocation2 + $0x310] sm:$0xff] 0.0
          %405 = vst [vmem:[#allocation2 + $0x318] sm:$0xff] 0.0
          %406 = vst [vmem:[#allocation2 + $0x320] sm:$0xff] 0.0
          %407 = vst [vmem:[#allocation2 + $0x328] sm:$0xff] 0.0
          %408 = vst [vmem:[#allocation2 + $0x330] sm:$0xff] 0.0
          %409 = vst [vmem:[#allocation2 + $0x338] sm:$0xff] 0.0
          %410 = vst [vmem:[#allocation2 + $0x340] sm:$0xff] 0.0
          %411 = vst [vmem:[#allocation2 + $0x348] sm:$0xff] 0.0
          %412 = vst [vmem:[#allocation2 + $0x350] sm:$0xff] 0.0
          %413 = vst [vmem:[#allocation2 + $0x358] sm:$0xff] 0.0
          %414 = vst [vmem:[#allocation2 + $0x360] sm:$0xff] 0.0
          %415 = vst [vmem:[#allocation2 + $0x368] sm:$0xff] 0.0
          %416 = vst [vmem:[#allocation2 + $0x370] sm:$0xff] 0.0
          %417 = vst [vmem:[#allocation2 + $0x378] sm:$0xff] 0.0
          %418 = vst [vmem:[#allocation2 + $0x380] sm:$0xff] 0.0
          %419 = vst [vmem:[#allocation2 + $0x388] sm:$0xff] 0.0
          %420 = vst [vmem:[#allocation2 + $0x390] sm:$0xff] 0.0
          %421 = vst [vmem:[#allocation2 + $0x398] sm:$0xff] 0.0
          %422 = vst [vmem:[#allocation2 + $0x3a0] sm:$0xff] 0.0
          %423 = vst [vmem:[#allocation2 + $0x3a8] sm:$0xff] 0.0
          %424 = vst [vmem:[#allocation2 + $0x3b0] sm:$0xff] 0.0
          %425 = vst [vmem:[#allocation2 + $0x3b8] sm:$0xff] 0.0
          %426 = vst [vmem:[#allocation2 + $0x3c0] sm:$0xff] 0.0
          %427 = vst [vmem:[#allocation2 + $0x3c8] sm:$0xff] 0.0
          %428 = vst [vmem:[#allocation2 + $0x3d0] sm:$0xff] 0.0
          %429 = vst [vmem:[#allocation2 + $0x3d8] sm:$0xff] 0.0
          %430 = vst [vmem:[#allocation2 + $0x3e0] sm:$0xff] 0.0
          %431 = vst [vmem:[#allocation2 + $0x3e8] sm:$0xff] 0.0
          %432 = vst [vmem:[#allocation2 + $0x3f0] sm:$0xff] 0.0
          %433 = vst [vmem:[#allocation2 + $0x3f8] sm:$0xff] 0.0
          %434 = vst [vmem:[#allocation2 + $0x400] sm:$0xff] 0.0
          %435 = vst [vmem:[#allocation2 + $0x408] sm:$0xff] 0.0
          %436 = vst [vmem:[#allocation2 + $0x410] sm:$0xff] 0.0
          %437 = vst [vmem:[#allocation2 + $0x418] sm:$0xff] 0.0
          %438 = vst [vmem:[#allocation2 + $0x420] sm:$0xff] 0.0
          %439 = vst [vmem:[#allocation2 + $0x428] sm:$0xff] 0.0
          %440 = vst [vmem:[#allocation2 + $0x430] sm:$0xff] 0.0
          %441 = vst [vmem:[#allocation2 + $0x438] sm:$0xff] 0.0
          %442 = vst [vmem:[#allocation2 + $0x440] sm:$0xff] 0.0
          %443 = vst [vmem:[#allocation2 + $0x448] sm:$0xff] 0.0
          %444 = vst [vmem:[#allocation2 + $0x450] sm:$0xff] 0.0
          %445 = vst [vmem:[#allocation2 + $0x458] sm:$0xff] 0.0
          %446 = vst [vmem:[#allocation2 + $0x460] sm:$0xff] 0.0
          %447 = vst [vmem:[#allocation2 + $0x468] sm:$0xff] 0.0
          %448 = vst [vmem:[#allocation2 + $0x470] sm:$0xff] 0.0
          %449 = vst [vmem:[#allocation2 + $0x478] sm:$0xff] 0.0
          %450 = vst [vmem:[#allocation2 + $0x480] sm:$0xff] 0.0
          %451 = vst [vmem:[#allocation2 + $0x488] sm:$0xff] 0.0
          %452 = vst [vmem:[#allocation2 + $0x490] sm:$0xff] 0.0
          %453 = vst [vmem:[#allocation2 + $0x498] sm:$0xff] 0.0
          %454 = vst [vmem:[#allocation2 + $0x4a0] sm:$0xff] 0.0
          %455 = vst [vmem:[#allocation2 + $0x4a8] sm:$0xff] 0.0
          %456 = vst [vmem:[#allocation2 + $0x4b0] sm:$0xff] 0.0
          %457 = vst [vmem:[#allocation2 + $0x4b8] sm:$0xff] 0.0
          %458 = vst [vmem:[#allocation2 + $0x4c0] sm:$0xff] 0.0
          %459 = vst [vmem:[#allocation2 + $0x4c8] sm:$0xff] 0.0
          %460 = vst [vmem:[#allocation2 + $0x4d0] sm:$0xff] 0.0
          %461 = vst [vmem:[#allocation2 + $0x4d8] sm:$0xff] 0.0
          %462 = vst [vmem:[#allocation2 + $0x4e0] sm:$0xff] 0.0
          %463 = vst [vmem:[#allocation2 + $0x4e8] sm:$0xff] 0.0
          %464 = vst [vmem:[#allocation2 + $0x4f0] sm:$0xff] 0.0
          %465 = vst [vmem:[#allocation2 + $0x4f8] sm:$0xff] 0.0
          %466 = vst [vmem:[#allocation2 + $0x500] sm:$0xff] 0.0
          %467 = vst [vmem:[#allocation2 + $0x508] sm:$0xff] 0.0
          %468 = vst [vmem:[#allocation2 + $0x510] sm:$0xff] 0.0
          %469 = vst [vmem:[#allocation2 + $0x518] sm:$0xff] 0.0
          %470 = vst [vmem:[#allocation2 + $0x520] sm:$0xff] 0.0
          %471 = vst [vmem:[#allocation2 + $0x528] sm:$0xff] 0.0
          %472 = vst [vmem:[#allocation2 + $0x530] sm:$0xff] 0.0
          %473 = vst [vmem:[#allocation2 + $0x538] sm:$0xff] 0.0
          %474 = vst [vmem:[#allocation2 + $0x540] sm:$0xff] 0.0
          %475 = vst [vmem:[#allocation2 + $0x548] sm:$0xff] 0.0
          %476 = vst [vmem:[#allocation2 + $0x550] sm:$0xff] 0.0
          %477 = vst [vmem:[#allocation2 + $0x558] sm:$0xff] 0.0
          %478 = vst [vmem:[#allocation2 + $0x560] sm:$0xff] 0.0
          %479 = vst [vmem:[#allocation2 + $0x568] sm:$0xff] 0.0
          %480 = vst [vmem:[#allocation2 + $0x570] sm:$0xff] 0.0
          %481 = vst [vmem:[#allocation2 + $0x578] sm:$0xff] 0.0
          %482 = vst [vmem:[#allocation2 + $0x580] sm:$0xff] 0.0
          %483 = vst [vmem:[#allocation2 + $0x588] sm:$0xff] 0.0
          %484 = vst [vmem:[#allocation2 + $0x590] sm:$0xff] 0.0
          %485 = vst [vmem:[#allocation2 + $0x598] sm:$0xff] 0.0
          %486 = vst [vmem:[#allocation2 + $0x5a0] sm:$0xff] 0.0
          %487 = vst [vmem:[#allocation2 + $0x5a8] sm:$0xff] 0.0
          %488 = vst [vmem:[#allocation2 + $0x5b0] sm:$0xff] 0.0
          %489 = vst [vmem:[#allocation2 + $0x5b8] sm:$0xff] 0.0
          %490 = vst [vmem:[#allocation2 + $0x5c0] sm:$0xff] 0.0
          %491 = vst [vmem:[#allocation2 + $0x5c8] sm:$0xff] 0.0
          %492 = vst [vmem:[#allocation2 + $0x5d0] sm:$0xff] 0.0
          %493 = vst [vmem:[#allocation2 + $0x5d8] sm:$0xff] 0.0
          %494 = vst [vmem:[#allocation2 + $0x5e0] sm:$0xff] 0.0
          %495 = vst [vmem:[#allocation2 + $0x5e8] sm:$0xff] 0.0
          %496 = vst [vmem:[#allocation2 + $0x5f0] sm:$0xff] 0.0
          %497 = vst [vmem:[#allocation2 + $0x5f8] sm:$0xff] 0.0
        $region48: #{tpu_custom_call.1} parent=31 // pred_fallthru
          _
        %v498 = vld [vmem:[#allocation2] sm:$0xff]
        %v499 = vld [vmem:[#allocation2 + $0x8] sm:$0xff]
        %v500 = vld [vmem:[#allocation2 + $0x10] sm:$0xff]
        %v501 = vld [vmem:[#allocation2 + $0x18] sm:$0xff]
        %v502 = vld [vmem:[#allocation2 + $0x20] sm:$0xff]
        %v503 = vld [vmem:[#allocation2 + $0x28] sm:$0xff]
        %v504 = vld [vmem:[#allocation2 + $0x30] sm:$0xff]
        %v505 = vld [vmem:[#allocation2 + $0x38] sm:$0xff]
        %v506 = vld [vmem:[#allocation2 + $0x40] sm:$0xff]
        %v507 = vld [vmem:[#allocation2 + $0x48] sm:$0xff]
        %v508 = vld [vmem:[#allocation2 + $0x50] sm:$0xff]
        %v509 = vld [vmem:[#allocation2 + $0x58] sm:$0xff]
        %v510 = vld [vmem:[#allocation2 + $0x60] sm:$0xff]
        %v511 = vld [vmem:[#allocation2 + $0x68] sm:$0xff]
        %v512 = vld [vmem:[#allocation2 + $0x70] sm:$0xff]
        %v513 = vld [vmem:[#allocation2 + $0x78] sm:$0xff]
        %v514 = vld [vmem:[#allocation2 + $0x80] sm:$0xff]
        %v515 = vld [vmem:[#allocation2 + $0x88] sm:$0xff]
        %v516 = vld [vmem:[#allocation2 + $0x90] sm:$0xff]
        %v517 = vld [vmem:[#allocation2 + $0x98] sm:$0xff]
        %v518 = vld [vmem:[#allocation2 + $0xa0] sm:$0xff]
        %v519 = vld [vmem:[#allocation2 + $0xa8] sm:$0xff]
        %v520 = vld [vmem:[#allocation2 + $0xb0] sm:$0xff]
        %v521 = vld [vmem:[#allocation2 + $0xb8] sm:$0xff]
        %v522 = vld [vmem:[#allocation2 + $0xc0] sm:$0xff]
        %v523 = vld [vmem:[#allocation2 + $0xc8] sm:$0xff]
        %v524 = vld [vmem:[#allocation2 + $0xd0] sm:$0xff]
        %v525 = vld [vmem:[#allocation2 + $0xd8] sm:$0xff]
        %v526 = vld [vmem:[#allocation2 + $0xe0] sm:$0xff]
        %v527 = vld [vmem:[#allocation2 + $0xe8] sm:$0xff]
        %v528 = vld [vmem:[#allocation2 + $0xf0] sm:$0xff]
        %v529 = vld [vmem:[#allocation2 + $0xf8] sm:$0xff]
        %v530 = vld [vmem:[#allocation2 + $0x100] sm:$0xff]
        %v531 = vld [vmem:[#allocation2 + $0x108] sm:$0xff]
        %v532 = vld [vmem:[#allocation2 + $0x110] sm:$0xff]
        %v533 = vld [vmem:[#allocation2 + $0x118] sm:$0xff]
        %v534 = vld [vmem:[#allocation2 + $0x120] sm:$0xff]
        %v535 = vld [vmem:[#allocation2 + $0x128] sm:$0xff]
        %v536 = vld [vmem:[#allocation2 + $0x130] sm:$0xff]
        %v537 = vld [vmem:[#allocation2 + $0x138] sm:$0xff]
        %v538 = vld [vmem:[#allocation2 + $0x140] sm:$0xff]
        %v539 = vld [vmem:[#allocation2 + $0x148] sm:$0xff]
        %v540 = vld [vmem:[#allocation2 + $0x150] sm:$0xff]
        %v541 = vld [vmem:[#allocation2 + $0x158] sm:$0xff]
        %v542 = vld [vmem:[#allocation2 + $0x160] sm:$0xff]
        %v543 = vld [vmem:[#allocation2 + $0x168] sm:$0xff]
        %v544 = vld [vmem:[#allocation2 + $0x170] sm:$0xff]
        %v545 = vld [vmem:[#allocation2 + $0x178] sm:$0xff]
        %v546 = vld [vmem:[#allocation2 + $0x180] sm:$0xff]
        %v547 = vld [vmem:[#allocation2 + $0x188] sm:$0xff]
        %v548 = vld [vmem:[#allocation2 + $0x190] sm:$0xff]
        %v549 = vld [vmem:[#allocation2 + $0x198] sm:$0xff]
        %v550 = vld [vmem:[#allocation2 + $0x1a0] sm:$0xff]
        %v551 = vld [vmem:[#allocation2 + $0x1a8] sm:$0xff]
        %v552 = vld [vmem:[#allocation2 + $0x1b0] sm:$0xff]
        %v553 = vld [vmem:[#allocation2 + $0x1b8] sm:$0xff]
        %v554 = vld [vmem:[#allocation2 + $0x1c0] sm:$0xff]
        %v555 = vld [vmem:[#allocation2 + $0x1c8] sm:$0xff]
        %v556 = vld [vmem:[#allocation2 + $0x1d0] sm:$0xff]
        %v557 = vld [vmem:[#allocation2 + $0x1d8] sm:$0xff]
        %v558 = vld [vmem:[#allocation2 + $0x1e0] sm:$0xff]
        %v559 = vld [vmem:[#allocation2 + $0x1e8] sm:$0xff]
        %v560 = vld [vmem:[#allocation2 + $0x1f0] sm:$0xff]
        %v561 = vld [vmem:[#allocation2 + $0x1f8] sm:$0xff]
        %v562 = vld [vmem:[#allocation2 + $0x200] sm:$0xff]
        %v563 = vld [vmem:[#allocation2 + $0x208] sm:$0xff]
        %v564 = vld [vmem:[#allocation2 + $0x210] sm:$0xff]
        %v565 = vld [vmem:[#allocation2 + $0x218] sm:$0xff]
        %v566 = vld [vmem:[#allocation2 + $0x220] sm:$0xff]
        %v567 = vld [vmem:[#allocation2 + $0x228] sm:$0xff]
        %v568 = vld [vmem:[#allocation2 + $0x230] sm:$0xff]
        %v569 = vld [vmem:[#allocation2 + $0x238] sm:$0xff]
        %v570 = vld [vmem:[#allocation2 + $0x240] sm:$0xff]
        %v571 = vld [vmem:[#allocation2 + $0x248] sm:$0xff]
        %v572 = vld [vmem:[#allocation2 + $0x250] sm:$0xff]
        %v573 = vld [vmem:[#allocation2 + $0x258] sm:$0xff]
        %v574 = vld [vmem:[#allocation2 + $0x260] sm:$0xff]
        %v575 = vld [vmem:[#allocation2 + $0x268] sm:$0xff]
        %v576 = vld [vmem:[#allocation2 + $0x270] sm:$0xff]
        %v577 = vld [vmem:[#allocation2 + $0x278] sm:$0xff]
        %v578 = vld [vmem:[#allocation2 + $0x280] sm:$0xff]
        %v579 = vld [vmem:[#allocation2 + $0x288] sm:$0xff]
        %v580 = vld [vmem:[#allocation2 + $0x290] sm:$0xff]
        %v581 = vld [vmem:[#allocation2 + $0x298] sm:$0xff]
        %v582 = vld [vmem:[#allocation2 + $0x2a0] sm:$0xff]
        %v583 = vld [vmem:[#allocation2 + $0x2a8] sm:$0xff]
        %v584 = vld [vmem:[#allocation2 + $0x2b0] sm:$0xff]
        %v585 = vld [vmem:[#allocation2 + $0x2b8] sm:$0xff]
        %v586 = vld [vmem:[#allocation2 + $0x2c0] sm:$0xff]
        %v587 = vld [vmem:[#allocation2 + $0x2c8] sm:$0xff]
        %v588 = vld [vmem:[#allocation2 + $0x2d0] sm:$0xff]
        %v589 = vld [vmem:[#allocation2 + $0x2d8] sm:$0xff]
        %v590 = vld [vmem:[#allocation2 + $0x2e0] sm:$0xff]
        %v591 = vld [vmem:[#allocation2 + $0x2e8] sm:$0xff]
        %v592 = vld [vmem:[#allocation2 + $0x2f0] sm:$0xff]
        %v593 = vld [vmem:[#allocation2 + $0x2f8] sm:$0xff]
        %v594 = vld [vmem:[#allocation2 + $0x300] sm:$0xff]
        %v595 = vld [vmem:[#allocation2 + $0x308] sm:$0xff]
        %v596 = vld [vmem:[#allocation2 + $0x310] sm:$0xff]
        %v597 = vld [vmem:[#allocation2 + $0x318] sm:$0xff]
        %v598 = vld [vmem:[#allocation2 + $0x320] sm:$0xff]
        %v599 = vld [vmem:[#allocation2 + $0x328] sm:$0xff]
        %v600 = vld [vmem:[#allocation2 + $0x330] sm:$0xff]
        %v601 = vld [vmem:[#allocation2 + $0x338] sm:$0xff]
        %v602 = vld [vmem:[#allocation2 + $0x340] sm:$0xff]
        %v603 = vld [vmem:[#allocation2 + $0x348] sm:$0xff]
        %v604 = vld [vmem:[#allocation2 + $0x350] sm:$0xff]
        %v605 = vld [vmem:[#allocation2 + $0x358] sm:$0xff]
        %v606 = vld [vmem:[#allocation2 + $0x360] sm:$0xff]
        %v607 = vld [vmem:[#allocation2 + $0x368] sm:$0xff]
        %v608 = vld [vmem:[#allocation2 + $0x370] sm:$0xff]
        %v609 = vld [vmem:[#allocation2 + $0x378] sm:$0xff]
        %v610 = vld [vmem:[#allocation2 + $0x380] sm:$0xff]
        %v611 = vld [vmem:[#allocation2 + $0x388] sm:$0xff]
        %v612 = vld [vmem:[#allocation2 + $0x390] sm:$0xff]
        %v613 = vld [vmem:[#allocation2 + $0x398] sm:$0xff]
        %v614 = vld [vmem:[#allocation2 + $0x3a0] sm:$0xff]
        %v615 = vld [vmem:[#allocation2 + $0x3a8] sm:$0xff]
        %v616 = vld [vmem:[#allocation2 + $0x3b0] sm:$0xff]
        %v617 = vld [vmem:[#allocation2 + $0x3b8] sm:$0xff]
        %v618 = vld [vmem:[#allocation2 + $0x3c0] sm:$0xff]
        %v619 = vld [vmem:[#allocation2 + $0x3c8] sm:$0xff]
        %v620 = vld [vmem:[#allocation2 + $0x3d0] sm:$0xff]
        %v621 = vld [vmem:[#allocation2 + $0x3d8] sm:$0xff]
        %v622 = vld [vmem:[#allocation2 + $0x3e0] sm:$0xff]
        %v623 = vld [vmem:[#allocation2 + $0x3e8] sm:$0xff]
        %v624 = vld [vmem:[#allocation2 + $0x3f0] sm:$0xff]
        %v625 = vld [vmem:[#allocation2 + $0x3f8] sm:$0xff]
        %v626 = vld [vmem:[#allocation2 + $0x400] sm:$0xff]
        %v627 = vld [vmem:[#allocation2 + $0x408] sm:$0xff]
        %v628 = vld [vmem:[#allocation2 + $0x410] sm:$0xff]
        %v629 = vld [vmem:[#allocation2 + $0x418] sm:$0xff]
        %v630 = vld [vmem:[#allocation2 + $0x420] sm:$0xff]
        %v631 = vld [vmem:[#allocation2 + $0x428] sm:$0xff]
        %v632 = vld [vmem:[#allocation2 + $0x430] sm:$0xff]
        %v633 = vld [vmem:[#allocation2 + $0x438] sm:$0xff]
        %v634 = vld [vmem:[#allocation2 + $0x440] sm:$0xff]
        %v635 = vld [vmem:[#allocation2 + $0x448] sm:$0xff]
        %v636 = vld [vmem:[#allocation2 + $0x450] sm:$0xff]
        %v637 = vld [vmem:[#allocation2 + $0x458] sm:$0xff]
        %v638 = vld [vmem:[#allocation2 + $0x460] sm:$0xff]
        %v639 = vld [vmem:[#allocation2 + $0x468] sm:$0xff]
        %v640 = vld [vmem:[#allocation2 + $0x470] sm:$0xff]
        %v641 = vld [vmem:[#allocation2 + $0x478] sm:$0xff]
        %v642 = vld [vmem:[#allocation2 + $0x480] sm:$0xff]
        %v643 = vld [vmem:[#allocation2 + $0x488] sm:$0xff]
        %v644 = vld [vmem:[#allocation2 + $0x490] sm:$0xff]
        %v645 = vld [vmem:[#allocation2 + $0x498] sm:$0xff]
        %v646 = vld [vmem:[#allocation2 + $0x4a0] sm:$0xff]
        %v647 = vld [vmem:[#allocation2 + $0x4a8] sm:$0xff]
        %v648 = vld [vmem:[#allocation2 + $0x4b0] sm:$0xff]
        %v649 = vld [vmem:[#allocation2 + $0x4b8] sm:$0xff]
        %v650 = vld [vmem:[#allocation2 + $0x4c0] sm:$0xff]
        %v651 = vld [vmem:[#allocation2 + $0x4c8] sm:$0xff]
        %v652 = vld [vmem:[#allocation2 + $0x4d0] sm:$0xff]
        %v653 = vld [vmem:[#allocation2 + $0x4d8] sm:$0xff]
        %v654 = vld [vmem:[#allocation2 + $0x4e0] sm:$0xff]
        %v655 = vld [vmem:[#allocation2 + $0x4e8] sm:$0xff]
        %v656 = vld [vmem:[#allocation2 + $0x4f0] sm:$0xff]
        %v657 = vld [vmem:[#allocation2 + $0x4f8] sm:$0xff]
        %v658 = vld [vmem:[#allocation2 + $0x500] sm:$0xff]
        %v659 = vld [vmem:[#allocation2 + $0x508] sm:$0xff]
        %v660 = vld [vmem:[#allocation2 + $0x510] sm:$0xff]
        %v661 = vld [vmem:[#allocation2 + $0x518] sm:$0xff]
        %v662 = vld [vmem:[#allocation2 + $0x520] sm:$0xff]
        %v663 = vld [vmem:[#allocation2 + $0x528] sm:$0xff]
        %v664 = vld [vmem:[#allocation2 + $0x530] sm:$0xff]
        %v665 = vld [vmem:[#allocation2 + $0x538] sm:$0xff]
        %v666 = vld [vmem:[#allocation2 + $0x540] sm:$0xff]
        %v667 = vld [vmem:[#allocation2 + $0x548] sm:$0xff]
        %v668 = vld [vmem:[#allocation2 + $0x550] sm:$0xff]
        %v669 = vld [vmem:[#allocation2 + $0x558] sm:$0xff]
        %v670 = vld [vmem:[#allocation2 + $0x560] sm:$0xff]
        %v671 = vld [vmem:[#allocation2 + $0x568] sm:$0xff]
        %v672 = vld [vmem:[#allocation2 + $0x570] sm:$0xff]
        %v673 = vld [vmem:[#allocation2 + $0x578] sm:$0xff]
        %v674 = vld [vmem:[#allocation2 + $0x580] sm:$0xff]
        %v675 = vld [vmem:[#allocation2 + $0x588] sm:$0xff]
        %v676 = vld [vmem:[#allocation2 + $0x590] sm:$0xff]
        %v677 = vld [vmem:[#allocation2 + $0x598] sm:$0xff]
        %v678 = vld [vmem:[#allocation2 + $0x5a0] sm:$0xff]
        %v679 = vld [vmem:[#allocation2 + $0x5a8] sm:$0xff]
        %v680 = vld [vmem:[#allocation2 + $0x5b0] sm:$0xff]
        %v681 = vld [vmem:[#allocation2 + $0x5b8] sm:$0xff]
        %v682 = vld [vmem:[#allocation2 + $0x5c0] sm:$0xff]
        %v683 = vld [vmem:[#allocation2 + $0x5c8] sm:$0xff]
        %v684 = vld [vmem:[#allocation2 + $0x5d0] sm:$0xff]
        %v685 = vld [vmem:[#allocation2 + $0x5d8] sm:$0xff]
        %v686 = vld [vmem:[#allocation2 + $0x5e0] sm:$0xff]
        %v687 = vld [vmem:[#allocation2 + $0x5e8] sm:$0xff]
        %v688 = vld [vmem:[#allocation2 + $0x5f0] sm:$0xff]
        %v689 = vld [vmem:[#allocation2 + $0x5f8] sm:$0xff]
        %v690 = vld [vmem:[%s244] sm:$0xff]
        %v691 = vld [vmem:[%s244 + $0x8] sm:$0xff]
        %v692 = vld [vmem:[%s244 + $0x10] sm:$0xff]
        %v693 = vld [vmem:[%s244 + $0x18] sm:$0xff]
        %v694 = vld [vmem:[%s244 + $0x20] sm:$0xff]
        %v695 = vld [vmem:[%s244 + $0x28] sm:$0xff]
        %v696 = vld [vmem:[%s244 + $0x30] sm:$0xff]
        %v697 = vld [vmem:[%s244 + $0x38] sm:$0xff]
        %v698 = vld [vmem:[%s244 + $0x40] sm:$0xff]
        %v699 = vld [vmem:[%s244 + $0x48] sm:$0xff]
        %v700 = vld [vmem:[%s244 + $0x50] sm:$0xff]
        %v701 = vld [vmem:[%s244 + $0x58] sm:$0xff]
        %v702 = vld [vmem:[%s244 + $0x60] sm:$0xff]
        %v703 = vld [vmem:[%s244 + $0x68] sm:$0xff]
        %v704 = vld [vmem:[%s244 + $0x70] sm:$0xff]
        %v705 = vld [vmem:[%s244 + $0x78] sm:$0xff]
        %v706 = vld [vmem:[%s244 + $0x80] sm:$0xff]
        %v707 = vld [vmem:[%s244 + $0x88] sm:$0xff]
        %v708 = vld [vmem:[%s244 + $0x90] sm:$0xff]
        %v709 = vld [vmem:[%s244 + $0x98] sm:$0xff]
        %v710 = vld [vmem:[%s244 + $0xa0] sm:$0xff]
        %v711 = vld [vmem:[%s244 + $0xa8] sm:$0xff]
        %v712 = vld [vmem:[%s244 + $0xb0] sm:$0xff]
        %v713 = vld [vmem:[%s244 + $0xb8] sm:$0xff]
        %v714 = vld [vmem:[%s244 + $0xc0] sm:$0xff]
        %v715 = vld [vmem:[%s244 + $0xc8] sm:$0xff]
        %v716 = vld [vmem:[%s244 + $0xd0] sm:$0xff]
        %v717 = vld [vmem:[%s244 + $0xd8] sm:$0xff]
        %v718 = vld [vmem:[%s244 + $0xe0] sm:$0xff]
        %v719 = vld [vmem:[%s244 + $0xe8] sm:$0xff]
        %v720 = vld [vmem:[%s244 + $0xf0] sm:$0xff]
        %v721 = vld [vmem:[%s244 + $0xf8] sm:$0xff]
        %v722 = vld [vmem:[%s244 + $0x100] sm:$0xff]
        %v723 = vld [vmem:[%s244 + $0x108] sm:$0xff]
        %v724 = vld [vmem:[%s244 + $0x110] sm:$0xff]
        %v725 = vld [vmem:[%s244 + $0x118] sm:$0xff]
        %v726 = vld [vmem:[%s244 + $0x120] sm:$0xff]
        %v727 = vld [vmem:[%s244 + $0x128] sm:$0xff]
        %v728 = vld [vmem:[%s244 + $0x130] sm:$0xff]
        %v729 = vld [vmem:[%s244 + $0x138] sm:$0xff]
        %v730 = vld [vmem:[%s244 + $0x140] sm:$0xff]
        %v731 = vld [vmem:[%s244 + $0x148] sm:$0xff]
        %v732 = vld [vmem:[%s244 + $0x150] sm:$0xff]
        %v733 = vld [vmem:[%s244 + $0x158] sm:$0xff]
        %v734 = vld [vmem:[%s244 + $0x160] sm:$0xff]
        %v735 = vld [vmem:[%s244 + $0x168] sm:$0xff]
        %v736 = vld [vmem:[%s244 + $0x170] sm:$0xff]
        %v737 = vld [vmem:[%s244 + $0x178] sm:$0xff]
        %v738 = vld [vmem:[%s244 + $0x180] sm:$0xff]
        %v739 = vld [vmem:[%s244 + $0x188] sm:$0xff]
        %v740 = vld [vmem:[%s244 + $0x190] sm:$0xff]
        %v741 = vld [vmem:[%s244 + $0x198] sm:$0xff]
        %v742 = vld [vmem:[%s244 + $0x1a0] sm:$0xff]
        %v743 = vld [vmem:[%s244 + $0x1a8] sm:$0xff]
        %v744 = vld [vmem:[%s244 + $0x1b0] sm:$0xff]
        %v745 = vld [vmem:[%s244 + $0x1b8] sm:$0xff]
        %v746 = vld [vmem:[%s244 + $0x1c0] sm:$0xff]
        %v747 = vld [vmem:[%s244 + $0x1c8] sm:$0xff]
        %v748 = vld [vmem:[%s244 + $0x1d0] sm:$0xff]
        %v749 = vld [vmem:[%s244 + $0x1d8] sm:$0xff]
        %v750 = vld [vmem:[%s244 + $0x1e0] sm:$0xff]
        %v751 = vld [vmem:[%s244 + $0x1e8] sm:$0xff]
        %v752 = vld [vmem:[%s244 + $0x1f0] sm:$0xff]
        %v753 = vld [vmem:[%s244 + $0x1f8] sm:$0xff]
        %v754 = vld [vmem:[%s244 + $0x200] sm:$0xff]
        %v755 = vld [vmem:[%s244 + $0x208] sm:$0xff]
        %v756 = vld [vmem:[%s244 + $0x210] sm:$0xff]
        %v757 = vld [vmem:[%s244 + $0x218] sm:$0xff]
        %v758 = vld [vmem:[%s244 + $0x220] sm:$0xff]
        %v759 = vld [vmem:[%s244 + $0x228] sm:$0xff]
        %v760 = vld [vmem:[%s244 + $0x230] sm:$0xff]
        %v761 = vld [vmem:[%s244 + $0x238] sm:$0xff]
        %v762 = vld [vmem:[%s244 + $0x240] sm:$0xff]
        %v763 = vld [vmem:[%s244 + $0x248] sm:$0xff]
        %v764 = vld [vmem:[%s244 + $0x250] sm:$0xff]
        %v765 = vld [vmem:[%s244 + $0x258] sm:$0xff]
        %v766 = vld [vmem:[%s244 + $0x260] sm:$0xff]
        %v767 = vld [vmem:[%s244 + $0x268] sm:$0xff]
        %v768 = vld [vmem:[%s244 + $0x270] sm:$0xff]
        %v769 = vld [vmem:[%s244 + $0x278] sm:$0xff]
        %v770 = vld [vmem:[%s244 + $0x280] sm:$0xff]
        %v771 = vld [vmem:[%s244 + $0x288] sm:$0xff]
        %v772 = vld [vmem:[%s244 + $0x290] sm:$0xff]
        %v773 = vld [vmem:[%s244 + $0x298] sm:$0xff]
        %v774 = vld [vmem:[%s244 + $0x2a0] sm:$0xff]
        %v775 = vld [vmem:[%s244 + $0x2a8] sm:$0xff]
        %v776 = vld [vmem:[%s244 + $0x2b0] sm:$0xff]
        %v777 = vld [vmem:[%s244 + $0x2b8] sm:$0xff]
        %v778 = vld [vmem:[%s244 + $0x2c0] sm:$0xff]
        %v779 = vld [vmem:[%s244 + $0x2c8] sm:$0xff]
        %v780 = vld [vmem:[%s244 + $0x2d0] sm:$0xff]
        %v781 = vld [vmem:[%s244 + $0x2d8] sm:$0xff]
        %v782 = vld [vmem:[%s244 + $0x2e0] sm:$0xff]
        %v783 = vld [vmem:[%s244 + $0x2e8] sm:$0xff]
        %v784 = vld [vmem:[%s244 + $0x2f0] sm:$0xff]
        %v785 = vld [vmem:[%s244 + $0x2f8] sm:$0xff]
        %v786 = vld [vmem:[%s244 + $0x300] sm:$0xff]
        %v787 = vld [vmem:[%s244 + $0x308] sm:$0xff]
        %v788 = vld [vmem:[%s244 + $0x310] sm:$0xff]
        %v789 = vld [vmem:[%s244 + $0x318] sm:$0xff]
        %v790 = vld [vmem:[%s244 + $0x320] sm:$0xff]
        %v791 = vld [vmem:[%s244 + $0x328] sm:$0xff]
        %v792 = vld [vmem:[%s244 + $0x330] sm:$0xff]
        %v793 = vld [vmem:[%s244 + $0x338] sm:$0xff]
        %v794 = vld [vmem:[%s244 + $0x340] sm:$0xff]
        %v795 = vld [vmem:[%s244 + $0x348] sm:$0xff]
        %v796 = vld [vmem:[%s244 + $0x350] sm:$0xff]
        %v797 = vld [vmem:[%s244 + $0x358] sm:$0xff]
        %v798 = vld [vmem:[%s244 + $0x360] sm:$0xff]
        %v799 = vld [vmem:[%s244 + $0x368] sm:$0xff]
        %v800 = vld [vmem:[%s244 + $0x370] sm:$0xff]
        %v801 = vld [vmem:[%s244 + $0x378] sm:$0xff]
        %v802 = vld [vmem:[%s244 + $0x380] sm:$0xff]
        %v803 = vld [vmem:[%s244 + $0x388] sm:$0xff]
        %v804 = vld [vmem:[%s244 + $0x390] sm:$0xff]
        %v805 = vld [vmem:[%s244 + $0x398] sm:$0xff]
        %v806 = vld [vmem:[%s244 + $0x3a0] sm:$0xff]
        %v807 = vld [vmem:[%s244 + $0x3a8] sm:$0xff]
        %v808 = vld [vmem:[%s244 + $0x3b0] sm:$0xff]
        %v809 = vld [vmem:[%s244 + $0x3b8] sm:$0xff]
        %v810 = vld [vmem:[%s244 + $0x3c0] sm:$0xff]
        %v811 = vld [vmem:[%s244 + $0x3c8] sm:$0xff]
        %v812 = vld [vmem:[%s244 + $0x3d0] sm:$0xff]
        %v813 = vld [vmem:[%s244 + $0x3d8] sm:$0xff]
        %v814 = vld [vmem:[%s244 + $0x3e0] sm:$0xff]
        %v815 = vld [vmem:[%s244 + $0x3e8] sm:$0xff]
        %v816 = vld [vmem:[%s244 + $0x3f0] sm:$0xff]
        %v817 = vld [vmem:[%s244 + $0x3f8] sm:$0xff]
        %v818 = vld [vmem:[%s253] sm:$0xff]
        %v819 = vld [vmem:[%s253 + $0x8] sm:$0xff]
        %v820 = vld [vmem:[%s253 + $0x10] sm:$0xff]
        %v821 = vld [vmem:[%s253 + $0x18] sm:$0xff]
        %v822 = vld [vmem:[%s253 + $0x20] sm:$0xff]
        %v823 = vld [vmem:[%s253 + $0x28] sm:$0xff]
        %v824 = vld [vmem:[%s253 + $0x30] sm:$0xff]
        %v825 = vld [vmem:[%s253 + $0x38] sm:$0xff]
        %v826 = vld [vmem:[%s253 + $0x40] sm:$0xff]
        %v827 = vld [vmem:[%s253 + $0x48] sm:$0xff]
        %v828 = vld [vmem:[%s253 + $0x50] sm:$0xff]
        %v829 = vld [vmem:[%s253 + $0x58] sm:$0xff]
        %v830 = vld [vmem:[%s253 + $0x60] sm:$0xff]
        %v831 = vld [vmem:[%s253 + $0x68] sm:$0xff]
        %v832 = vld [vmem:[%s253 + $0x70] sm:$0xff]
        %v833 = vld [vmem:[%s253 + $0x78] sm:$0xff]
        %v834 = vld [vmem:[%s253 + $0x80] sm:$0xff]
        %v835 = vld [vmem:[%s253 + $0x88] sm:$0xff]
        %v836 = vld [vmem:[%s253 + $0x90] sm:$0xff]
        %v837 = vld [vmem:[%s253 + $0x98] sm:$0xff]
        %v838 = vld [vmem:[%s253 + $0xa0] sm:$0xff]
        %v839 = vld [vmem:[%s253 + $0xa8] sm:$0xff]
        %v840 = vld [vmem:[%s253 + $0xb0] sm:$0xff]
        %v841 = vld [vmem:[%s253 + $0xb8] sm:$0xff]
        %v842 = vld [vmem:[%s253 + $0xc0] sm:$0xff]
        %v843 = vld [vmem:[%s253 + $0xc8] sm:$0xff]
        %v844 = vld [vmem:[%s253 + $0xd0] sm:$0xff]
        %v845 = vld [vmem:[%s253 + $0xd8] sm:$0xff]
        %v846 = vld [vmem:[%s253 + $0xe0] sm:$0xff]
        %v847 = vld [vmem:[%s253 + $0xe8] sm:$0xff]
        %v848 = vld [vmem:[%s253 + $0xf0] sm:$0xff]
        %v849 = vld [vmem:[%s253 + $0xf8] sm:$0xff]
        %v850 = vld [vmem:[%s253 + $0x100] sm:$0xff]
        %v851 = vld [vmem:[%s253 + $0x108] sm:$0xff]
        %v852 = vld [vmem:[%s253 + $0x110] sm:$0xff]
        %v853 = vld [vmem:[%s253 + $0x118] sm:$0xff]
        %v854 = vld [vmem:[%s253 + $0x120] sm:$0xff]
        %v855 = vld [vmem:[%s253 + $0x128] sm:$0xff]
        %v856 = vld [vmem:[%s253 + $0x130] sm:$0xff]
        %v857 = vld [vmem:[%s253 + $0x138] sm:$0xff]
        %v858 = vld [vmem:[%s253 + $0x140] sm:$0xff]
        %v859 = vld [vmem:[%s253 + $0x148] sm:$0xff]
        %v860 = vld [vmem:[%s253 + $0x150] sm:$0xff]
        %v861 = vld [vmem:[%s253 + $0x158] sm:$0xff]
        %v862 = vld [vmem:[%s253 + $0x160] sm:$0xff]
        %v863 = vld [vmem:[%s253 + $0x168] sm:$0xff]
        %v864 = vld [vmem:[%s253 + $0x170] sm:$0xff]
        %v865 = vld [vmem:[%s253 + $0x178] sm:$0xff]
        %v866 = vld [vmem:[%s253 + $0x180] sm:$0xff]
        %v867 = vld [vmem:[%s253 + $0x188] sm:$0xff]
        %v868 = vld [vmem:[%s253 + $0x190] sm:$0xff]
        %v869 = vld [vmem:[%s253 + $0x198] sm:$0xff]
        %v870 = vld [vmem:[%s253 + $0x1a0] sm:$0xff]
        %v871 = vld [vmem:[%s253 + $0x1a8] sm:$0xff]
        %v872 = vld [vmem:[%s253 + $0x1b0] sm:$0xff]
        %v873 = vld [vmem:[%s253 + $0x1b8] sm:$0xff]
        %v874 = vld [vmem:[%s253 + $0x1c0] sm:$0xff]
        %v875 = vld [vmem:[%s253 + $0x1c8] sm:$0xff]
        %v876 = vld [vmem:[%s253 + $0x1d0] sm:$0xff]
        %v877 = vld [vmem:[%s253 + $0x1d8] sm:$0xff]
        %v878 = vld [vmem:[%s253 + $0x1e0] sm:$0xff]
        %v879 = vld [vmem:[%s253 + $0x1e8] sm:$0xff]
        %v880 = vld [vmem:[%s253 + $0x1f0] sm:$0xff]
        %v881 = vld [vmem:[%s253 + $0x1f8] sm:$0xff]
        %v882 = vld [vmem:[%s253 + $0x200] sm:$0xff]
        %v883 = vld [vmem:[%s253 + $0x208] sm:$0xff]
        %v884 = vld [vmem:[%s253 + $0x210] sm:$0xff]
        %v885 = vld [vmem:[%s253 + $0x218] sm:$0xff]
        %v886 = vld [vmem:[%s253 + $0x220] sm:$0xff]
        %v887 = vld [vmem:[%s253 + $0x228] sm:$0xff]
        %v888 = vld [vmem:[%s253 + $0x230] sm:$0xff]
        %v889 = vld [vmem:[%s253 + $0x238] sm:$0xff]
        %v890 = vld [vmem:[%s253 + $0x240] sm:$0xff]
        %v891 = vld [vmem:[%s253 + $0x248] sm:$0xff]
        %v892 = vld [vmem:[%s253 + $0x250] sm:$0xff]
        %v893 = vld [vmem:[%s253 + $0x258] sm:$0xff]
        %v894 = vld [vmem:[%s253 + $0x260] sm:$0xff]
        %v895 = vld [vmem:[%s253 + $0x268] sm:$0xff]
        %v896 = vld [vmem:[%s253 + $0x270] sm:$0xff]
        %v897 = vld [vmem:[%s253 + $0x278] sm:$0xff]
        %v898 = vld [vmem:[%s253 + $0x280] sm:$0xff]
        %v899 = vld [vmem:[%s253 + $0x288] sm:$0xff]
        %v900 = vld [vmem:[%s253 + $0x290] sm:$0xff]
        %v901 = vld [vmem:[%s253 + $0x298] sm:$0xff]
        %v902 = vld [vmem:[%s253 + $0x2a0] sm:$0xff]
        %v903 = vld [vmem:[%s253 + $0x2a8] sm:$0xff]
        %v904 = vld [vmem:[%s253 + $0x2b0] sm:$0xff]
        %v905 = vld [vmem:[%s253 + $0x2b8] sm:$0xff]
        %v906 = vld [vmem:[%s253 + $0x2c0] sm:$0xff]
        %v907 = vld [vmem:[%s253 + $0x2c8] sm:$0xff]
        %v908 = vld [vmem:[%s253 + $0x2d0] sm:$0xff]
        %v909 = vld [vmem:[%s253 + $0x2d8] sm:$0xff]
        %v910 = vld [vmem:[%s253 + $0x2e0] sm:$0xff]
        %v911 = vld [vmem:[%s253 + $0x2e8] sm:$0xff]
        %v912 = vld [vmem:[%s253 + $0x2f0] sm:$0xff]
        %v913 = vld [vmem:[%s253 + $0x2f8] sm:$0xff]
        %914 = vmatprep.subr.mxu0 %v864
        %915 = vmatpush1.msra.mxu0 %v863
        %916 = vmatprep.subr.mxu0 %v861
        %917 = vmatpush1.msra.mxu0 %v860
        %918 = vmatprep.subr.mxu0 %v858
        %919 = vmatpush1.msra.mxu0 %v857
        %920 = vmatprep.subr.mxu0 %v855
        %921 = vmatpush1.msra.mxu0 %v854
        %922 = vmatprep.subr.mxu0 %v852
        %923 = vmatpush1.msra.mxu0 %v851
        %924 = vmatprep.subr.mxu0 %v849
        %925 = vmatpush1.msra.mxu0 %v848
        %926 = vmatprep.subr.mxu0 %v846
        %927 = vmatpush1.msra.mxu0 %v845
        %928 = vmatprep.subr.mxu0 %v843
        %929 = vmatpush1.msra.mxu0 %v842
        %930 = vmatprep.subr.mxu0 %v840
        %931 = vmatpush1.msra.mxu0 %v839
        %932 = vmatprep.subr.mxu0 %v837
        %933 = vmatpush1.msra.mxu0 %v836
        %934 = vmatprep.subr.mxu0 %v834
        %935 = vmatpush1.msra.mxu0 %v833
        %936 = vmatprep.subr.mxu0 %v831
        %937 = vmatpush1.msra.mxu0 %v830
        %938 = vmatprep.subr.mxu0 %v828
        %939 = vmatpush1.msra.mxu0 %v827
        %940 = vmatprep.subr.mxu0 %v825
        %941 = vmatpush1.msra.mxu0 %v824
        %942 = vmatprep.subr.mxu0 %v822
        %943 = vmatpush1.msra.mxu0 %v821
        %944 = vmatprep.subr.mxu0 %v819
        %945 = vmatpush1.msra.mxu0 %v818
        %946 = vmatprep.subr.mxu0 %v912
        %947 = vmatpush2.msra.mxu0 %v911
        %948 = vmatprep.subr.mxu0 %v909
        %949 = vmatpush2.msra.mxu0 %v908
        %950 = vmatprep.subr.mxu0 %v906
        %951 = vmatpush2.msra.mxu0 %v905
        %952 = vmatprep.subr.mxu0 %v903
        %953 = vmatpush2.msra.mxu0 %v902
        %954 = vmatprep.subr.mxu0 %v900
        %955 = vmatpush2.msra.mxu0 %v899
        %956 = vmatprep.subr.mxu0 %v897
        %957 = vmatpush2.msra.mxu0 %v896
        %958 = vmatprep.subr.mxu0 %v894
        %959 = vmatpush2.msra.mxu0 %v893
        %960 = vmatprep.subr.mxu0 %v891
        %961 = vmatpush2.msra.mxu0 %v890
        %962 = vmatprep.subr.mxu0 %v888
        %963 = vmatpush2.msra.mxu0 %v887
        %964 = vmatprep.subr.mxu0 %v885
        %965 = vmatpush2.msra.mxu0 %v884
        %966 = vmatprep.subr.mxu0 %v882
        %967 = vmatpush2.msra.mxu0 %v881
        %968 = vmatprep.subr.mxu0 %v879
        %969 = vmatpush2.msra.mxu0 %v878
        %970 = vmatprep.subr.mxu0 %v876
        %971 = vmatpush2.msra.mxu0 %v875
        %972 = vmatprep.subr.mxu0 %v873
        %973 = vmatpush2.msra.mxu0 %v872
        %974 = vmatprep.subr.mxu0 %v870
        %975 = vmatpush2.msra.mxu0 %v869
        %976 = vmatprep.subr.mxu0 %v867
        %977 = vmatpush2.msra.mxu0 %v866
        %978 = vmatprep.mubr.f32.mxu0 %v691
        %979 = vmatmul.mubr.f32.gmra.mxu0 %v690
        %v980 = vpop.f32.mrf.mxu0
        %v981 = vadd.f32 0.0, %v980
        %v982 = vpop.f32.mrf.mxu0
        %v983 = vadd.f32 0.0, %v982
        %984 = vmatprep.mubr.f32.mxu0 %v693
        %985 = vmatmul.mubr.f32.gmra.mxu0 %v692
        %v986 = vpop.f32.mrf.mxu0
        %v987 = vadd.f32 0.0, %v986
        %v988 = vpop.f32.mrf.mxu0
        %v989 = vadd.f32 0.0, %v988
        %990 = vmatprep.mubr.f32.mxu0 %v695
        %991 = vmatmul.mubr.f32.gmra.mxu0 %v694
        %v992 = vpop.f32.mrf.mxu0
        %v993 = vadd.f32 0.0, %v992
        %v994 = vpop.f32.mrf.mxu0
        %v995 = vadd.f32 0.0, %v994
        %996 = vmatprep.mubr.f32.mxu0 %v697
        %997 = vmatmul.mubr.f32.gmra.mxu0 %v696
        %v998 = vpop.f32.mrf.mxu0
        %v999 = vadd.f32 0.0, %v998
        %v1000 = vpop.f32.mrf.mxu0
        %v1001 = vadd.f32 0.0, %v1000
        %1002 = vmatprep.mubr.f32.mxu0 %v699
        %1003 = vmatmul.mubr.f32.gmra.mxu0 %v698
        %v1004 = vpop.f32.mrf.mxu0
        %v1005 = vadd.f32 0.0, %v1004
        %v1006 = vpop.f32.mrf.mxu0
        %v1007 = vadd.f32 0.0, %v1006
        %1008 = vmatprep.mubr.f32.mxu0 %v701
        %1009 = vmatmul.mubr.f32.gmra.mxu0 %v700
        %v1010 = vpop.f32.mrf.mxu0
        %v1011 = vadd.f32 0.0, %v1010
        %v1012 = vpop.f32.mrf.mxu0
        %v1013 = vadd.f32 0.0, %v1012
        %1014 = vmatprep.mubr.f32.mxu0 %v703
        %1015 = vmatmul.mubr.f32.gmra.mxu0 %v702
        %v1016 = vpop.f32.mrf.mxu0
        %v1017 = vadd.f32 0.0, %v1016
        %v1018 = vpop.f32.mrf.mxu0
        %v1019 = vadd.f32 0.0, %v1018
        %1020 = vmatprep.mubr.f32.mxu0 %v705
        %1021 = vmatmul.mubr.f32.gmra.mxu0 %v704
        %v1022 = vpop.f32.mrf.mxu0
        %v1023 = vadd.f32 0.0, %v1022
        %v1024 = vpop.f32.mrf.mxu0
        %v1025 = vadd.f32 0.0, %v1024
        %1026 = vmatprep.mubr.f32.mxu0 %v707
        %1027 = vmatmul.mubr.f32.gmra.mxu0 %v706
        %v1028 = vpop.f32.mrf.mxu0
        %v1029 = vadd.f32 0.0, %v1028
        %v1030 = vpop.f32.mrf.mxu0
        %v1031 = vadd.f32 0.0, %v1030
        %1032 = vmatprep.mubr.f32.mxu0 %v709
        %1033 = vmatmul.mubr.f32.gmra.mxu0 %v708
        %v1034 = vpop.f32.mrf.mxu0
        %v1035 = vadd.f32 0.0, %v1034
        %v1036 = vpop.f32.mrf.mxu0
        %v1037 = vadd.f32 0.0, %v1036
        %1038 = vmatprep.mubr.f32.mxu0 %v711
        %1039 = vmatmul.mubr.f32.gmra.mxu0 %v710
        %v1040 = vpop.f32.mrf.mxu0
        %v1041 = vadd.f32 0.0, %v1040
        %v1042 = vpop.f32.mrf.mxu0
        %v1043 = vadd.f32 0.0, %v1042
        %1044 = vmatprep.mubr.f32.mxu0 %v713
        %1045 = vmatmul.mubr.f32.gmra.mxu0 %v712
        %v1046 = vpop.f32.mrf.mxu0
        %v1047 = vadd.f32 0.0, %v1046
        %v1048 = vpop.f32.mrf.mxu0
        %v1049 = vadd.f32 0.0, %v1048
        %1050 = vmatprep.mubr.f32.mxu0 %v715
        %1051 = vmatmul.mubr.f32.gmra.mxu0 %v714
        %v1052 = vpop.f32.mrf.mxu0
        %v1053 = vadd.f32 0.0, %v1052
        %v1054 = vpop.f32.mrf.mxu0
        %v1055 = vadd.f32 0.0, %v1054
        %1056 = vmatprep.mubr.f32.mxu0 %v717
        %1057 = vmatmul.mubr.f32.gmra.mxu0 %v716
        %v1058 = vpop.f32.mrf.mxu0
        %v1059 = vadd.f32 0.0, %v1058
        %v1060 = vpop.f32.mrf.mxu0
        %v1061 = vadd.f32 0.0, %v1060
        %1062 = vmatprep.mubr.f32.mxu0 %v719
        %1063 = vmatmul.mubr.f32.gmra.mxu0 %v718
        %v1064 = vpop.f32.mrf.mxu0
        %v1065 = vadd.f32 0.0, %v1064
        %v1066 = vpop.f32.mrf.mxu0
        %v1067 = vadd.f32 0.0, %v1066
        %1068 = vmatprep.mubr.f32.mxu0 %v721
        %1069 = vmatmul.mubr.f32.gmra.mxu0 %v720
        %v1070 = vpop.f32.mrf.mxu0
        %v1071 = vadd.f32 0.0, %v1070
        %v1072 = vpop.f32.mrf.mxu0
        %v1073 = vadd.f32 0.0, %v1072
        %1074 = vmatprep.mubr.f32.mxu0 %v723
        %1075 = vmatmul.mubr.f32.gmra.mxu0 %v722
        %v1076 = vpop.f32.mrf.mxu0
        %v1077 = vadd.f32 0.0, %v1076
        %v1078 = vpop.f32.mrf.mxu0
        %v1079 = vadd.f32 0.0, %v1078
        %1080 = vmatprep.mubr.f32.mxu0 %v725
        %1081 = vmatmul.mubr.f32.gmra.mxu0 %v724
        %v1082 = vpop.f32.mrf.mxu0
        %v1083 = vadd.f32 0.0, %v1082
        %v1084 = vpop.f32.mrf.mxu0
        %v1085 = vadd.f32 0.0, %v1084
        %1086 = vmatprep.mubr.f32.mxu0 %v727
        %1087 = vmatmul.mubr.f32.gmra.mxu0 %v726
        %v1088 = vpop.f32.mrf.mxu0
        %v1089 = vadd.f32 0.0, %v1088
        %v1090 = vpop.f32.mrf.mxu0
        %v1091 = vadd.f32 0.0, %v1090
        %1092 = vmatprep.mubr.f32.mxu0 %v729
        %1093 = vmatmul.mubr.f32.gmra.mxu0 %v728
        %v1094 = vpop.f32.mrf.mxu0
        %v1095 = vadd.f32 0.0, %v1094
        %v1096 = vpop.f32.mrf.mxu0
        %v1097 = vadd.f32 0.0, %v1096
        %1098 = vmatprep.mubr.f32.mxu0 %v731
        %1099 = vmatmul.mubr.f32.gmra.mxu0 %v730
        %v1100 = vpop.f32.mrf.mxu0
        %v1101 = vadd.f32 0.0, %v1100
        %v1102 = vpop.f32.mrf.mxu0
        %v1103 = vadd.f32 0.0, %v1102
        %1104 = vmatprep.mubr.f32.mxu0 %v733
        %1105 = vmatmul.mubr.f32.gmra.mxu0 %v732
        %v1106 = vpop.f32.mrf.mxu0
        %v1107 = vadd.f32 0.0, %v1106
        %v1108 = vpop.f32.mrf.mxu0
        %v1109 = vadd.f32 0.0, %v1108
        %1110 = vmatprep.mubr.f32.mxu0 %v735
        %1111 = vmatmul.mubr.f32.gmra.mxu0 %v734
        %v1112 = vpop.f32.mrf.mxu0
        %v1113 = vadd.f32 0.0, %v1112
        %v1114 = vpop.f32.mrf.mxu0
        %v1115 = vadd.f32 0.0, %v1114
        %1116 = vmatprep.mubr.f32.mxu0 %v737
        %1117 = vmatmul.mubr.f32.gmra.mxu0 %v736
        %v1118 = vpop.f32.mrf.mxu0
        %v1119 = vadd.f32 0.0, %v1118
        %v1120 = vpop.f32.mrf.mxu0
        %v1121 = vadd.f32 0.0, %v1120
        %1122 = vmatprep.mubr.f32.mxu0 %v739
        %1123 = vmatmul.mubr.f32.gmra.mxu0 %v738
        %v1124 = vpop.f32.mrf.mxu0
        %v1125 = vadd.f32 0.0, %v1124
        %v1126 = vpop.f32.mrf.mxu0
        %v1127 = vadd.f32 0.0, %v1126
        %1128 = vmatprep.mubr.f32.mxu0 %v741
        %1129 = vmatmul.mubr.f32.gmra.mxu0 %v740
        %v1130 = vpop.f32.mrf.mxu0
        %v1131 = vadd.f32 0.0, %v1130
        %v1132 = vpop.f32.mrf.mxu0
        %v1133 = vadd.f32 0.0, %v1132
        %1134 = vmatprep.mubr.f32.mxu0 %v743
        %1135 = vmatmul.mubr.f32.gmra.mxu0 %v742
        %v1136 = vpop.f32.mrf.mxu0
        %v1137 = vadd.f32 0.0, %v1136
        %v1138 = vpop.f32.mrf.mxu0
        %v1139 = vadd.f32 0.0, %v1138
        %1140 = vmatprep.mubr.f32.mxu0 %v745
        %1141 = vmatmul.mubr.f32.gmra.mxu0 %v744
        %v1142 = vpop.f32.mrf.mxu0
        %v1143 = vadd.f32 0.0, %v1142
        %v1144 = vpop.f32.mrf.mxu0
        %v1145 = vadd.f32 0.0, %v1144
        %1146 = vmatprep.mubr.f32.mxu0 %v747
        %1147 = vmatmul.mubr.f32.gmra.mxu0 %v746
        %v1148 = vpop.f32.mrf.mxu0
        %v1149 = vadd.f32 0.0, %v1148
        %v1150 = vpop.f32.mrf.mxu0
        %v1151 = vadd.f32 0.0, %v1150
        %1152 = vmatprep.mubr.f32.mxu0 %v749
        %1153 = vmatmul.mubr.f32.gmra.mxu0 %v748
        %v1154 = vpop.f32.mrf.mxu0
        %v1155 = vadd.f32 0.0, %v1154
        %v1156 = vpop.f32.mrf.mxu0
        %v1157 = vadd.f32 0.0, %v1156
        %1158 = vmatprep.mubr.f32.mxu0 %v751
        %1159 = vmatmul.mubr.f32.gmra.mxu0 %v750
        %v1160 = vpop.f32.mrf.mxu0
        %v1161 = vadd.f32 0.0, %v1160
        %v1162 = vpop.f32.mrf.mxu0
        %v1163 = vadd.f32 0.0, %v1162
        %1164 = vmatprep.mubr.f32.mxu0 %v753
        %1165 = vmatmul.mubr.f32.gmra.mxu0 %v752
        %v1166 = vpop.f32.mrf.mxu0
        %v1167 = vadd.f32 0.0, %v1166
        %v1168 = vpop.f32.mrf.mxu0
        %v1169 = vadd.f32 0.0, %v1168
        %1170 = vmatprep.mubr.f32.mxu0 %v755
        %1171 = vmatmul.mubr.f32.gmra.mxu0 %v754
        %v1172 = vpop.f32.mrf.mxu0
        %v1173 = vadd.f32 0.0, %v1172
        %v1174 = vpop.f32.mrf.mxu0
        %v1175 = vadd.f32 0.0, %v1174
        %1176 = vmatprep.mubr.f32.mxu0 %v757
        %1177 = vmatmul.mubr.f32.gmra.mxu0 %v756
        %v1178 = vpop.f32.mrf.mxu0
        %v1179 = vadd.f32 0.0, %v1178
        %v1180 = vpop.f32.mrf.mxu0
        %v1181 = vadd.f32 0.0, %v1180
        %1182 = vmatprep.mubr.f32.mxu0 %v759
        %1183 = vmatmul.mubr.f32.gmra.mxu0 %v758
        %v1184 = vpop.f32.mrf.mxu0
        %v1185 = vadd.f32 0.0, %v1184
        %v1186 = vpop.f32.mrf.mxu0
        %v1187 = vadd.f32 0.0, %v1186
        %1188 = vmatprep.mubr.f32.mxu0 %v761
        %1189 = vmatmul.mubr.f32.gmra.mxu0 %v760
        %v1190 = vpop.f32.mrf.mxu0
        %v1191 = vadd.f32 0.0, %v1190
        %v1192 = vpop.f32.mrf.mxu0
        %v1193 = vadd.f32 0.0, %v1192
        %1194 = vmatprep.mubr.f32.mxu0 %v763
        %1195 = vmatmul.mubr.f32.gmra.mxu0 %v762
        %v1196 = vpop.f32.mrf.mxu0
        %v1197 = vadd.f32 0.0, %v1196
        %v1198 = vpop.f32.mrf.mxu0
        %v1199 = vadd.f32 0.0, %v1198
        %1200 = vmatprep.mubr.f32.mxu0 %v765
        %1201 = vmatmul.mubr.f32.gmra.mxu0 %v764
        %v1202 = vpop.f32.mrf.mxu0
        %v1203 = vadd.f32 0.0, %v1202
        %v1204 = vpop.f32.mrf.mxu0
        %v1205 = vadd.f32 0.0, %v1204
        %1206 = vmatprep.mubr.f32.mxu0 %v767
        %1207 = vmatmul.mubr.f32.gmra.mxu0 %v766
        %v1208 = vpop.f32.mrf.mxu0
        %v1209 = vadd.f32 0.0, %v1208
        %v1210 = vpop.f32.mrf.mxu0
        %v1211 = vadd.f32 0.0, %v1210
        %1212 = vmatprep.mubr.f32.mxu0 %v769
        %1213 = vmatmul.mubr.f32.gmra.mxu0 %v768
        %v1214 = vpop.f32.mrf.mxu0
        %v1215 = vadd.f32 0.0, %v1214
        %v1216 = vpop.f32.mrf.mxu0
        %v1217 = vadd.f32 0.0, %v1216
        %1218 = vmatprep.mubr.f32.mxu0 %v771
        %1219 = vmatmul.mubr.f32.gmra.mxu0 %v770
        %v1220 = vpop.f32.mrf.mxu0
        %v1221 = vadd.f32 0.0, %v1220
        %v1222 = vpop.f32.mrf.mxu0
        %v1223 = vadd.f32 0.0, %v1222
        %1224 = vmatprep.mubr.f32.mxu0 %v773
        %1225 = vmatmul.mubr.f32.gmra.mxu0 %v772
        %v1226 = vpop.f32.mrf.mxu0
        %v1227 = vadd.f32 0.0, %v1226
        %v1228 = vpop.f32.mrf.mxu0
        %v1229 = vadd.f32 0.0, %v1228
        %1230 = vmatprep.mubr.f32.mxu0 %v775
        %1231 = vmatmul.mubr.f32.gmra.mxu0 %v774
        %v1232 = vpop.f32.mrf.mxu0
        %v1233 = vadd.f32 0.0, %v1232
        %v1234 = vpop.f32.mrf.mxu0
        %v1235 = vadd.f32 0.0, %v1234
        %1236 = vmatprep.mubr.f32.mxu0 %v777
        %1237 = vmatmul.mubr.f32.gmra.mxu0 %v776
        %v1238 = vpop.f32.mrf.mxu0
        %v1239 = vadd.f32 0.0, %v1238
        %v1240 = vpop.f32.mrf.mxu0
        %v1241 = vadd.f32 0.0, %v1240
        %1242 = vmatprep.mubr.f32.mxu0 %v779
        %1243 = vmatmul.mubr.f32.gmra.mxu0 %v778
        %v1244 = vpop.f32.mrf.mxu0
        %v1245 = vadd.f32 0.0, %v1244
        %v1246 = vpop.f32.mrf.mxu0
        %v1247 = vadd.f32 0.0, %v1246
        %1248 = vmatprep.mubr.f32.mxu0 %v781
        %1249 = vmatmul.mubr.f32.gmra.mxu0 %v780
        %v1250 = vpop.f32.mrf.mxu0
        %v1251 = vadd.f32 0.0, %v1250
        %v1252 = vpop.f32.mrf.mxu0
        %v1253 = vadd.f32 0.0, %v1252
        %1254 = vmatprep.mubr.f32.mxu0 %v783
        %1255 = vmatmul.mubr.f32.gmra.mxu0 %v782
        %v1256 = vpop.f32.mrf.mxu0
        %v1257 = vadd.f32 0.0, %v1256
        %v1258 = vpop.f32.mrf.mxu0
        %v1259 = vadd.f32 0.0, %v1258
        %1260 = vmatprep.mubr.f32.mxu0 %v785
        %1261 = vmatmul.mubr.f32.gmra.mxu0 %v784
        %v1262 = vpop.f32.mrf.mxu0
        %v1263 = vadd.f32 0.0, %v1262
        %v1264 = vpop.f32.mrf.mxu0
        %v1265 = vadd.f32 0.0, %v1264
        %1266 = vmatprep.mubr.f32.mxu0 %v787
        %1267 = vmatmul.mubr.f32.gmra.mxu0 %v786
        %v1268 = vpop.f32.mrf.mxu0
        %v1269 = vadd.f32 0.0, %v1268
        %v1270 = vpop.f32.mrf.mxu0
        %v1271 = vadd.f32 0.0, %v1270
        %1272 = vmatprep.mubr.f32.mxu0 %v789
        %1273 = vmatmul.mubr.f32.gmra.mxu0 %v788
        %v1274 = vpop.f32.mrf.mxu0
        %v1275 = vadd.f32 0.0, %v1274
        %v1276 = vpop.f32.mrf.mxu0
        %v1277 = vadd.f32 0.0, %v1276
        %1278 = vmatprep.mubr.f32.mxu0 %v791
        %1279 = vmatmul.mubr.f32.gmra.mxu0 %v790
        %v1280 = vpop.f32.mrf.mxu0
        %v1281 = vadd.f32 0.0, %v1280
        %v1282 = vpop.f32.mrf.mxu0
        %v1283 = vadd.f32 0.0, %v1282
        %1284 = vmatprep.mubr.f32.mxu0 %v793
        %1285 = vmatmul.mubr.f32.gmra.mxu0 %v792
        %v1286 = vpop.f32.mrf.mxu0
        %v1287 = vadd.f32 0.0, %v1286
        %v1288 = vpop.f32.mrf.mxu0
        %v1289 = vadd.f32 0.0, %v1288
        %1290 = vmatprep.mubr.f32.mxu0 %v795
        %1291 = vmatmul.mubr.f32.gmra.mxu0 %v794
        %v1292 = vpop.f32.mrf.mxu0
        %v1293 = vadd.f32 0.0, %v1292
        %v1294 = vpop.f32.mrf.mxu0
        %v1295 = vadd.f32 0.0, %v1294
        %1296 = vmatprep.mubr.f32.mxu0 %v797
        %1297 = vmatmul.mubr.f32.gmra.mxu0 %v796
        %v1298 = vpop.f32.mrf.mxu0
        %v1299 = vadd.f32 0.0, %v1298
        %v1300 = vpop.f32.mrf.mxu0
        %v1301 = vadd.f32 0.0, %v1300
        %1302 = vmatprep.mubr.f32.mxu0 %v799
        %1303 = vmatmul.mubr.f32.gmra.mxu0 %v798
        %v1304 = vpop.f32.mrf.mxu0
        %v1305 = vadd.f32 0.0, %v1304
        %v1306 = vpop.f32.mrf.mxu0
        %v1307 = vadd.f32 0.0, %v1306
        %1308 = vmatprep.mubr.f32.mxu0 %v801
        %1309 = vmatmul.mubr.f32.gmra.mxu0 %v800
        %v1310 = vpop.f32.mrf.mxu0
        %v1311 = vadd.f32 0.0, %v1310
        %v1312 = vpop.f32.mrf.mxu0
        %v1313 = vadd.f32 0.0, %v1312
        %1314 = vmatprep.mubr.f32.mxu0 %v803
        %1315 = vmatmul.mubr.f32.gmra.mxu0 %v802
        %v1316 = vpop.f32.mrf.mxu0
        %v1317 = vadd.f32 0.0, %v1316
        %v1318 = vpop.f32.mrf.mxu0
        %v1319 = vadd.f32 0.0, %v1318
        %1320 = vmatprep.mubr.f32.mxu0 %v805
        %1321 = vmatmul.mubr.f32.gmra.mxu0 %v804
        %v1322 = vpop.f32.mrf.mxu0
        %v1323 = vadd.f32 0.0, %v1322
        %v1324 = vpop.f32.mrf.mxu0
        %v1325 = vadd.f32 0.0, %v1324
        %1326 = vmatprep.mubr.f32.mxu0 %v807
        %1327 = vmatmul.mubr.f32.gmra.mxu0 %v806
        %v1328 = vpop.f32.mrf.mxu0
        %v1329 = vadd.f32 0.0, %v1328
        %v1330 = vpop.f32.mrf.mxu0
        %v1331 = vadd.f32 0.0, %v1330
        %1332 = vmatprep.mubr.f32.mxu0 %v809
        %1333 = vmatmul.mubr.f32.gmra.mxu0 %v808
        %v1334 = vpop.f32.mrf.mxu0
        %v1335 = vadd.f32 0.0, %v1334
        %v1336 = vpop.f32.mrf.mxu0
        %v1337 = vadd.f32 0.0, %v1336
        %1338 = vmatprep.mubr.f32.mxu0 %v811
        %1339 = vmatmul.mubr.f32.gmra.mxu0 %v810
        %v1340 = vpop.f32.mrf.mxu0
        %v1341 = vadd.f32 0.0, %v1340
        %v1342 = vpop.f32.mrf.mxu0
        %v1343 = vadd.f32 0.0, %v1342
        %1344 = vmatprep.mubr.f32.mxu0 %v813
        %1345 = vmatmul.mubr.f32.gmra.mxu0 %v812
        %v1346 = vpop.f32.mrf.mxu0
        %v1347 = vadd.f32 0.0, %v1346
        %v1348 = vpop.f32.mrf.mxu0
        %v1349 = vadd.f32 0.0, %v1348
        %1350 = vmatprep.mubr.f32.mxu0 %v815
        %1351 = vmatmul.mubr.f32.gmra.mxu0 %v814
        %v1352 = vpop.f32.mrf.mxu0
        %v1353 = vadd.f32 0.0, %v1352
        %v1354 = vpop.f32.mrf.mxu0
        %v1355 = vadd.f32 0.0, %v1354
        %1356 = vmatprep.mubr.f32.mxu0 %v817
        %1357 = vmatmul.mubr.f32.gmra.mxu0 %v816
        %v1358 = vpop.f32.mrf.mxu0
        %v1359 = vadd.f32 0.0, %v1358
        %v1360 = vpop.f32.mrf.mxu0
        %v1361 = vadd.f32 0.0, %v1360
        %1362 = vdwg.mxu0
        %1363 = vmatprep.subr.mxu0 0.0
        %1364 = vmatpush1.msra.mxu0 %v865
        %1365 = vmatprep.subr.mxu0 0.0
        %1366 = vmatpush1.msra.mxu0 %v862
        %1367 = vmatprep.subr.mxu0 0.0
        %1368 = vmatpush1.msra.mxu0 %v859
        %1369 = vmatprep.subr.mxu0 0.0
        %1370 = vmatpush1.msra.mxu0 %v856
        %1371 = vmatprep.subr.mxu0 0.0
        %1372 = vmatpush1.msra.mxu0 %v853
        %1373 = vmatprep.subr.mxu0 0.0
        %1374 = vmatpush1.msra.mxu0 %v850
        %1375 = vmatprep.subr.mxu0 0.0
        %1376 = vmatpush1.msra.mxu0 %v847
        %1377 = vmatprep.subr.mxu0 0.0
        %1378 = vmatpush1.msra.mxu0 %v844
        %1379 = vmatprep.subr.mxu0 0.0
        %1380 = vmatpush1.msra.mxu0 %v841
        %1381 = vmatprep.subr.mxu0 0.0
        %1382 = vmatpush1.msra.mxu0 %v838
        %1383 = vmatprep.subr.mxu0 0.0
        %1384 = vmatpush1.msra.mxu0 %v835
        %1385 = vmatprep.subr.mxu0 0.0
        %1386 = vmatpush1.msra.mxu0 %v832
        %1387 = vmatprep.subr.mxu0 0.0
        %1388 = vmatpush1.msra.mxu0 %v829
        %1389 = vmatprep.subr.mxu0 0.0
        %1390 = vmatpush1.msra.mxu0 %v826
        %1391 = vmatprep.subr.mxu0 0.0
        %1392 = vmatpush1.msra.mxu0 %v823
        %1393 = vmatprep.subr.mxu0 0.0
        %1394 = vmatpush1.msra.mxu0 %v820
        %1395 = vmatprep.subr.mxu0 0.0
        %1396 = vmatpush2.msra.mxu0 %v913
        %1397 = vmatprep.subr.mxu0 0.0
        %1398 = vmatpush2.msra.mxu0 %v910
        %1399 = vmatprep.subr.mxu0 0.0
        %1400 = vmatpush2.msra.mxu0 %v907
        %1401 = vmatprep.subr.mxu0 0.0
        %1402 = vmatpush2.msra.mxu0 %v904
        %1403 = vmatprep.subr.mxu0 0.0
        %1404 = vmatpush2.msra.mxu0 %v901
        %1405 = vmatprep.subr.mxu0 0.0
        %1406 = vmatpush2.msra.mxu0 %v898
        %1407 = vmatprep.subr.mxu0 0.0
        %1408 = vmatpush2.msra.mxu0 %v895
        %1409 = vmatprep.subr.mxu0 0.0
        %1410 = vmatpush2.msra.mxu0 %v892
        %1411 = vmatprep.subr.mxu0 0.0
        %1412 = vmatpush2.msra.mxu0 %v889
        %1413 = vmatprep.subr.mxu0 0.0
        %1414 = vmatpush2.msra.mxu0 %v886
        %1415 = vmatprep.subr.mxu0 0.0
        %1416 = vmatpush2.msra.mxu0 %v883
        %1417 = vmatprep.subr.mxu0 0.0
        %1418 = vmatpush2.msra.mxu0 %v880
        %1419 = vmatprep.subr.mxu0 0.0
        %1420 = vmatpush2.msra.mxu0 %v877
        %1421 = vmatprep.subr.mxu0 0.0
        %1422 = vmatpush2.msra.mxu0 %v874
        %1423 = vmatprep.subr.mxu0 0.0
        %1424 = vmatpush2.msra.mxu0 %v871
        %1425 = vmatprep.subr.mxu0 0.0
        %1426 = vmatpush2.msra.mxu0 %v868
        %1427 = vmatprep.mubr.f32.mxu0 %v691
        %1428 = vmatmul.mubr.f32.gmra.mxu0 %v690
        %v1429 = vpop.f32.mrf.mxu0
        %v1430 = vadd.f32 0.0, %v1429
        %v1431 = vpop.f32.mrf.mxu0
        %1432 = vmatprep.mubr.f32.mxu0 %v693
        %1433 = vmatmul.mubr.f32.gmra.mxu0 %v692
        %v1434 = vpop.f32.mrf.mxu0
        %v1435 = vadd.f32 0.0, %v1434
        %v1436 = vpop.f32.mrf.mxu0
        %1437 = vmatprep.mubr.f32.mxu0 %v695
        %1438 = vmatmul.mubr.f32.gmra.mxu0 %v694
        %v1439 = vpop.f32.mrf.mxu0
        %v1440 = vadd.f32 0.0, %v1439
        %v1441 = vpop.f32.mrf.mxu0
        %1442 = vmatprep.mubr.f32.mxu0 %v697
        %1443 = vmatmul.mubr.f32.gmra.mxu0 %v696
        %v1444 = vpop.f32.mrf.mxu0
        %v1445 = vadd.f32 0.0, %v1444
        %v1446 = vpop.f32.mrf.mxu0
        %1447 = vmatprep.mubr.f32.mxu0 %v699
        %1448 = vmatmul.mubr.f32.gmra.mxu0 %v698
        %v1449 = vpop.f32.mrf.mxu0
        %v1450 = vadd.f32 0.0, %v1449
        %v1451 = vpop.f32.mrf.mxu0
        %1452 = vmatprep.mubr.f32.mxu0 %v701
        %1453 = vmatmul.mubr.f32.gmra.mxu0 %v700
        %v1454 = vpop.f32.mrf.mxu0
        %v1455 = vadd.f32 0.0, %v1454
        %v1456 = vpop.f32.mrf.mxu0
        %1457 = vmatprep.mubr.f32.mxu0 %v703
        %1458 = vmatmul.mubr.f32.gmra.mxu0 %v702
        %v1459 = vpop.f32.mrf.mxu0
        %v1460 = vadd.f32 0.0, %v1459
        %v1461 = vpop.f32.mrf.mxu0
        %1462 = vmatprep.mubr.f32.mxu0 %v705
        %1463 = vmatmul.mubr.f32.gmra.mxu0 %v704
        %v1464 = vpop.f32.mrf.mxu0
        %v1465 = vadd.f32 0.0, %v1464
        %v1466 = vpop.f32.mrf.mxu0
        %1467 = vmatprep.mubr.f32.mxu0 %v707
        %1468 = vmatmul.mubr.f32.gmra.mxu0 %v706
        %v1469 = vpop.f32.mrf.mxu0
        %v1470 = vadd.f32 0.0, %v1469
        %v1471 = vpop.f32.mrf.mxu0
        %1472 = vmatprep.mubr.f32.mxu0 %v709
        %1473 = vmatmul.mubr.f32.gmra.mxu0 %v708
        %v1474 = vpop.f32.mrf.mxu0
        %v1475 = vadd.f32 0.0, %v1474
        %v1476 = vpop.f32.mrf.mxu0
        %1477 = vmatprep.mubr.f32.mxu0 %v711
        %1478 = vmatmul.mubr.f32.gmra.mxu0 %v710
        %v1479 = vpop.f32.mrf.mxu0
        %v1480 = vadd.f32 0.0, %v1479
        %v1481 = vpop.f32.mrf.mxu0
        %1482 = vmatprep.mubr.f32.mxu0 %v713
        %1483 = vmatmul.mubr.f32.gmra.mxu0 %v712
        %v1484 = vpop.f32.mrf.mxu0
        %v1485 = vadd.f32 0.0, %v1484
        %v1486 = vpop.f32.mrf.mxu0
        %1487 = vmatprep.mubr.f32.mxu0 %v715
        %1488 = vmatmul.mubr.f32.gmra.mxu0 %v714
        %v1489 = vpop.f32.mrf.mxu0
        %v1490 = vadd.f32 0.0, %v1489
        %v1491 = vpop.f32.mrf.mxu0
        %1492 = vmatprep.mubr.f32.mxu0 %v717
        %1493 = vmatmul.mubr.f32.gmra.mxu0 %v716
        %v1494 = vpop.f32.mrf.mxu0
        %v1495 = vadd.f32 0.0, %v1494
        %v1496 = vpop.f32.mrf.mxu0
        %1497 = vmatprep.mubr.f32.mxu0 %v719
        %1498 = vmatmul.mubr.f32.gmra.mxu0 %v718
        %v1499 = vpop.f32.mrf.mxu0
        %v1500 = vadd.f32 0.0, %v1499
        %v1501 = vpop.f32.mrf.mxu0
        %1502 = vmatprep.mubr.f32.mxu0 %v721
        %1503 = vmatmul.mubr.f32.gmra.mxu0 %v720
        %v1504 = vpop.f32.mrf.mxu0
        %v1505 = vadd.f32 0.0, %v1504
        %v1506 = vpop.f32.mrf.mxu0
        %1507 = vmatprep.mubr.f32.mxu0 %v723
        %1508 = vmatmul.mubr.f32.gmra.mxu0 %v722
        %v1509 = vpop.f32.mrf.mxu0
        %v1510 = vadd.f32 0.0, %v1509
        %v1511 = vpop.f32.mrf.mxu0
        %1512 = vmatprep.mubr.f32.mxu0 %v725
        %1513 = vmatmul.mubr.f32.gmra.mxu0 %v724
        %v1514 = vpop.f32.mrf.mxu0
        %v1515 = vadd.f32 0.0, %v1514
        %v1516 = vpop.f32.mrf.mxu0
        %1517 = vmatprep.mubr.f32.mxu0 %v727
        %1518 = vmatmul.mubr.f32.gmra.mxu0 %v726
        %v1519 = vpop.f32.mrf.mxu0
        %v1520 = vadd.f32 0.0, %v1519
        %v1521 = vpop.f32.mrf.mxu0
        %1522 = vmatprep.mubr.f32.mxu0 %v729
        %1523 = vmatmul.mubr.f32.gmra.mxu0 %v728
        %v1524 = vpop.f32.mrf.mxu0
        %v1525 = vadd.f32 0.0, %v1524
        %v1526 = vpop.f32.mrf.mxu0
        %1527 = vmatprep.mubr.f32.mxu0 %v731
        %1528 = vmatmul.mubr.f32.gmra.mxu0 %v730
        %v1529 = vpop.f32.mrf.mxu0
        %v1530 = vadd.f32 0.0, %v1529
        %v1531 = vpop.f32.mrf.mxu0
        %1532 = vmatprep.mubr.f32.mxu0 %v733
        %1533 = vmatmul.mubr.f32.gmra.mxu0 %v732
        %v1534 = vpop.f32.mrf.mxu0
        %v1535 = vadd.f32 0.0, %v1534
        %v1536 = vpop.f32.mrf.mxu0
        %1537 = vmatprep.mubr.f32.mxu0 %v735
        %1538 = vmatmul.mubr.f32.gmra.mxu0 %v734
        %v1539 = vpop.f32.mrf.mxu0
        %v1540 = vadd.f32 0.0, %v1539
        %v1541 = vpop.f32.mrf.mxu0
        %1542 = vmatprep.mubr.f32.mxu0 %v737
        %1543 = vmatmul.mubr.f32.gmra.mxu0 %v736
        %v1544 = vpop.f32.mrf.mxu0
        %v1545 = vadd.f32 0.0, %v1544
        %v1546 = vpop.f32.mrf.mxu0
        %1547 = vmatprep.mubr.f32.mxu0 %v739
        %1548 = vmatmul.mubr.f32.gmra.mxu0 %v738
        %v1549 = vpop.f32.mrf.mxu0
        %v1550 = vadd.f32 0.0, %v1549
        %v1551 = vpop.f32.mrf.mxu0
        %1552 = vmatprep.mubr.f32.mxu0 %v741
        %1553 = vmatmul.mubr.f32.gmra.mxu0 %v740
        %v1554 = vpop.f32.mrf.mxu0
        %v1555 = vadd.f32 0.0, %v1554
        %v1556 = vpop.f32.mrf.mxu0
        %1557 = vmatprep.mubr.f32.mxu0 %v743
        %1558 = vmatmul.mubr.f32.gmra.mxu0 %v742
        %v1559 = vpop.f32.mrf.mxu0
        %v1560 = vadd.f32 0.0, %v1559
        %v1561 = vpop.f32.mrf.mxu0
        %1562 = vmatprep.mubr.f32.mxu0 %v745
        %1563 = vmatmul.mubr.f32.gmra.mxu0 %v744
        %v1564 = vpop.f32.mrf.mxu0
        %v1565 = vadd.f32 0.0, %v1564
        %v1566 = vpop.f32.mrf.mxu0
        %1567 = vmatprep.mubr.f32.mxu0 %v747
        %1568 = vmatmul.mubr.f32.gmra.mxu0 %v746
        %v1569 = vpop.f32.mrf.mxu0
        %v1570 = vadd.f32 0.0, %v1569
        %v1571 = vpop.f32.mrf.mxu0
        %1572 = vmatprep.mubr.f32.mxu0 %v749
        %1573 = vmatmul.mubr.f32.gmra.mxu0 %v748
        %v1574 = vpop.f32.mrf.mxu0
        %v1575 = vadd.f32 0.0, %v1574
        %v1576 = vpop.f32.mrf.mxu0
        %1577 = vmatprep.mubr.f32.mxu0 %v751
        %1578 = vmatmul.mubr.f32.gmra.mxu0 %v750
        %v1579 = vpop.f32.mrf.mxu0
        %v1580 = vadd.f32 0.0, %v1579
        %v1581 = vpop.f32.mrf.mxu0
        %1582 = vmatprep.mubr.f32.mxu0 %v753
        %1583 = vmatmul.mubr.f32.gmra.mxu0 %v752
        %v1584 = vpop.f32.mrf.mxu0
        %v1585 = vadd.f32 0.0, %v1584
        %v1586 = vpop.f32.mrf.mxu0
        %1587 = vmatprep.mubr.f32.mxu0 %v755
        %1588 = vmatmul.mubr.f32.gmra.mxu0 %v754
        %v1589 = vpop.f32.mrf.mxu0
        %v1590 = vadd.f32 0.0, %v1589
        %v1591 = vpop.f32.mrf.mxu0
        %1592 = vmatprep.mubr.f32.mxu0 %v757
        %1593 = vmatmul.mubr.f32.gmra.mxu0 %v756
        %v1594 = vpop.f32.mrf.mxu0
        %v1595 = vadd.f32 0.0, %v1594
        %v1596 = vpop.f32.mrf.mxu0
        %1597 = vmatprep.mubr.f32.mxu0 %v759
        %1598 = vmatmul.mubr.f32.gmra.mxu0 %v758
        %v1599 = vpop.f32.mrf.mxu0
        %v1600 = vadd.f32 0.0, %v1599
        %v1601 = vpop.f32.mrf.mxu0
        %1602 = vmatprep.mubr.f32.mxu0 %v761
        %1603 = vmatmul.mubr.f32.gmra.mxu0 %v760
        %v1604 = vpop.f32.mrf.mxu0
        %v1605 = vadd.f32 0.0, %v1604
        %v1606 = vpop.f32.mrf.mxu0
        %1607 = vmatprep.mubr.f32.mxu0 %v763
        %1608 = vmatmul.mubr.f32.gmra.mxu0 %v762
        %v1609 = vpop.f32.mrf.mxu0
        %v1610 = vadd.f32 0.0, %v1609
        %v1611 = vpop.f32.mrf.mxu0
        %1612 = vmatprep.mubr.f32.mxu0 %v765
        %1613 = vmatmul.mubr.f32.gmra.mxu0 %v764
        %v1614 = vpop.f32.mrf.mxu0
        %v1615 = vadd.f32 0.0, %v1614
        %v1616 = vpop.f32.mrf.mxu0
        %1617 = vmatprep.mubr.f32.mxu0 %v767
        %1618 = vmatmul.mubr.f32.gmra.mxu0 %v766
        %v1619 = vpop.f32.mrf.mxu0
        %v1620 = vadd.f32 0.0, %v1619
        %v1621 = vpop.f32.mrf.mxu0
        %1622 = vmatprep.mubr.f32.mxu0 %v769
        %1623 = vmatmul.mubr.f32.gmra.mxu0 %v768
        %v1624 = vpop.f32.mrf.mxu0
        %v1625 = vadd.f32 0.0, %v1624
        %v1626 = vpop.f32.mrf.mxu0
        %1627 = vmatprep.mubr.f32.mxu0 %v771
        %1628 = vmatmul.mubr.f32.gmra.mxu0 %v770
        %v1629 = vpop.f32.mrf.mxu0
        %v1630 = vadd.f32 0.0, %v1629
        %v1631 = vpop.f32.mrf.mxu0
        %1632 = vmatprep.mubr.f32.mxu0 %v773
        %1633 = vmatmul.mubr.f32.gmra.mxu0 %v772
        %v1634 = vpop.f32.mrf.mxu0
        %v1635 = vadd.f32 0.0, %v1634
        %v1636 = vpop.f32.mrf.mxu0
        %1637 = vmatprep.mubr.f32.mxu0 %v775
        %1638 = vmatmul.mubr.f32.gmra.mxu0 %v774
        %v1639 = vpop.f32.mrf.mxu0
        %v1640 = vadd.f32 0.0, %v1639
        %v1641 = vpop.f32.mrf.mxu0
        %1642 = vmatprep.mubr.f32.mxu0 %v777
        %1643 = vmatmul.mubr.f32.gmra.mxu0 %v776
        %v1644 = vpop.f32.mrf.mxu0
        %v1645 = vadd.f32 0.0, %v1644
        %v1646 = vpop.f32.mrf.mxu0
        %1647 = vmatprep.mubr.f32.mxu0 %v779
        %1648 = vmatmul.mubr.f32.gmra.mxu0 %v778
        %v1649 = vpop.f32.mrf.mxu0
        %v1650 = vadd.f32 0.0, %v1649
        %v1651 = vpop.f32.mrf.mxu0
        %1652 = vmatprep.mubr.f32.mxu0 %v781
        %1653 = vmatmul.mubr.f32.gmra.mxu0 %v780
        %v1654 = vpop.f32.mrf.mxu0
        %v1655 = vadd.f32 0.0, %v1654
        %v1656 = vpop.f32.mrf.mxu0
        %1657 = vmatprep.mubr.f32.mxu0 %v783
        %1658 = vmatmul.mubr.f32.gmra.mxu0 %v782
        %v1659 = vpop.f32.mrf.mxu0
        %v1660 = vadd.f32 0.0, %v1659
        %v1661 = vpop.f32.mrf.mxu0
        %1662 = vmatprep.mubr.f32.mxu0 %v785
        %1663 = vmatmul.mubr.f32.gmra.mxu0 %v784
        %v1664 = vpop.f32.mrf.mxu0
        %v1665 = vadd.f32 0.0, %v1664
        %v1666 = vpop.f32.mrf.mxu0
        %1667 = vmatprep.mubr.f32.mxu0 %v787
        %1668 = vmatmul.mubr.f32.gmra.mxu0 %v786
        %v1669 = vpop.f32.mrf.mxu0
        %v1670 = vadd.f32 0.0, %v1669
        %v1671 = vpop.f32.mrf.mxu0
        %1672 = vmatprep.mubr.f32.mxu0 %v789
        %1673 = vmatmul.mubr.f32.gmra.mxu0 %v788
        %v1674 = vpop.f32.mrf.mxu0
        %v1675 = vadd.f32 0.0, %v1674
        %v1676 = vpop.f32.mrf.mxu0
        %1677 = vmatprep.mubr.f32.mxu0 %v791
        %1678 = vmatmul.mubr.f32.gmra.mxu0 %v790
        %v1679 = vpop.f32.mrf.mxu0
        %v1680 = vadd.f32 0.0, %v1679
        %v1681 = vpop.f32.mrf.mxu0
        %1682 = vmatprep.mubr.f32.mxu0 %v793
        %1683 = vmatmul.mubr.f32.gmra.mxu0 %v792
        %v1684 = vpop.f32.mrf.mxu0
        %v1685 = vadd.f32 0.0, %v1684
        %v1686 = vpop.f32.mrf.mxu0
        %1687 = vmatprep.mubr.f32.mxu0 %v795
        %1688 = vmatmul.mubr.f32.gmra.mxu0 %v794
        %v1689 = vpop.f32.mrf.mxu0
        %v1690 = vadd.f32 0.0, %v1689
        %v1691 = vpop.f32.mrf.mxu0
        %1692 = vmatprep.mubr.f32.mxu0 %v797
        %1693 = vmatmul.mubr.f32.gmra.mxu0 %v796
        %v1694 = vpop.f32.mrf.mxu0
        %v1695 = vadd.f32 0.0, %v1694
        %v1696 = vpop.f32.mrf.mxu0
        %1697 = vmatprep.mubr.f32.mxu0 %v799
        %1698 = vmatmul.mubr.f32.gmra.mxu0 %v798
        %v1699 = vpop.f32.mrf.mxu0
        %v1700 = vadd.f32 0.0, %v1699
        %v1701 = vpop.f32.mrf.mxu0
        %1702 = vmatprep.mubr.f32.mxu0 %v801
        %1703 = vmatmul.mubr.f32.gmra.mxu0 %v800
        %v1704 = vpop.f32.mrf.mxu0
        %v1705 = vadd.f32 0.0, %v1704
        %v1706 = vpop.f32.mrf.mxu0
        %1707 = vmatprep.mubr.f32.mxu0 %v803
        %1708 = vmatmul.mubr.f32.gmra.mxu0 %v802
        %v1709 = vpop.f32.mrf.mxu0
        %v1710 = vadd.f32 0.0, %v1709
        %v1711 = vpop.f32.mrf.mxu0
        %1712 = vmatprep.mubr.f32.mxu0 %v805
        %1713 = vmatmul.mubr.f32.gmra.mxu0 %v804
        %v1714 = vpop.f32.mrf.mxu0
        %v1715 = vadd.f32 0.0, %v1714
        %v1716 = vpop.f32.mrf.mxu0
        %1717 = vmatprep.mubr.f32.mxu0 %v807
        %1718 = vmatmul.mubr.f32.gmra.mxu0 %v806
        %v1719 = vpop.f32.mrf.mxu0
        %v1720 = vadd.f32 0.0, %v1719
        %v1721 = vpop.f32.mrf.mxu0
        %1722 = vmatprep.mubr.f32.mxu0 %v809
        %1723 = vmatmul.mubr.f32.gmra.mxu0 %v808
        %v1724 = vpop.f32.mrf.mxu0
        %v1725 = vadd.f32 0.0, %v1724
        %v1726 = vpop.f32.mrf.mxu0
        %1727 = vmatprep.mubr.f32.mxu0 %v811
        %1728 = vmatmul.mubr.f32.gmra.mxu0 %v810
        %v1729 = vpop.f32.mrf.mxu0
        %v1730 = vadd.f32 0.0, %v1729
        %v1731 = vpop.f32.mrf.mxu0
        %1732 = vmatprep.mubr.f32.mxu0 %v813
        %1733 = vmatmul.mubr.f32.gmra.mxu0 %v812
        %v1734 = vpop.f32.mrf.mxu0
        %v1735 = vadd.f32 0.0, %v1734
        %v1736 = vpop.f32.mrf.mxu0
        %1737 = vmatprep.mubr.f32.mxu0 %v815
        %1738 = vmatmul.mubr.f32.gmra.mxu0 %v814
        %v1739 = vpop.f32.mrf.mxu0
        %v1740 = vadd.f32 0.0, %v1739
        %v1741 = vpop.f32.mrf.mxu0
        %1742 = vmatprep.mubr.f32.mxu0 %v817
        %1743 = vmatmul.mubr.f32.gmra.mxu0 %v816
        %v1744 = vpop.f32.mrf.mxu0
        %v1745 = vadd.f32 0.0, %v1744
        %v1746 = vpop.f32.mrf.mxu0
        %1747 = vdwg.mxu0
        %v1748 = vadd.f32 %v498, %v981
        %v1749 = vadd.f32 %v499, %v983
        %v1750 = vadd.f32 %v500, %v1430
        %v1751 = vadd.f32 %v501, %v987
        %v1752 = vadd.f32 %v502, %v989
        %v1753 = vadd.f32 %v503, %v1435
        %v1754 = vadd.f32 %v504, %v993
        %v1755 = vadd.f32 %v505, %v995
        %v1756 = vadd.f32 %v506, %v1440
        %v1757 = vadd.f32 %v507, %v999
        %v1758 = vadd.f32 %v508, %v1001
        %v1759 = vadd.f32 %v509, %v1445
        %v1760 = vadd.f32 %v510, %v1005
        %v1761 = vadd.f32 %v511, %v1007
        %v1762 = vadd.f32 %v512, %v1450
        %v1763 = vadd.f32 %v513, %v1011
        %v1764 = vadd.f32 %v514, %v1013
        %v1765 = vadd.f32 %v515, %v1455
        %v1766 = vadd.f32 %v516, %v1017
        %v1767 = vadd.f32 %v517, %v1019
        %v1768 = vadd.f32 %v518, %v1460
        %v1769 = vadd.f32 %v519, %v1023
        %v1770 = vadd.f32 %v520, %v1025
        %v1771 = vadd.f32 %v521, %v1465
        %v1772 = vadd.f32 %v522, %v1029
        %v1773 = vadd.f32 %v523, %v1031
        %v1774 = vadd.f32 %v524, %v1470
        %v1775 = vadd.f32 %v525, %v1035
        %v1776 = vadd.f32 %v526, %v1037
        %v1777 = vadd.f32 %v527, %v1475
        %v1778 = vadd.f32 %v528, %v1041
        %v1779 = vadd.f32 %v529, %v1043
        %v1780 = vadd.f32 %v530, %v1480
        %v1781 = vadd.f32 %v531, %v1047
        %v1782 = vadd.f32 %v532, %v1049
        %v1783 = vadd.f32 %v533, %v1485
        %v1784 = vadd.f32 %v534, %v1053
        %v1785 = vadd.f32 %v535, %v1055
        %v1786 = vadd.f32 %v536, %v1490
        %v1787 = vadd.f32 %v537, %v1059
        %v1788 = vadd.f32 %v538, %v1061
        %v1789 = vadd.f32 %v539, %v1495
        %v1790 = vadd.f32 %v540, %v1065
        %v1791 = vadd.f32 %v541, %v1067
        %v1792 = vadd.f32 %v542, %v1500
        %v1793 = vadd.f32 %v543, %v1071
        %v1794 = vadd.f32 %v544, %v1073
        %v1795 = vadd.f32 %v545, %v1505
        %v1796 = vadd.f32 %v546, %v1077
        %v1797 = vadd.f32 %v547, %v1079
        %v1798 = vadd.f32 %v548, %v1510
        %v1799 = vadd.f32 %v549, %v1083
        %v1800 = vadd.f32 %v550, %v1085
        %v1801 = vadd.f32 %v551, %v1515
        %v1802 = vadd.f32 %v552, %v1089
        %v1803 = vadd.f32 %v553, %v1091
        %v1804 = vadd.f32 %v554, %v1520
        %v1805 = vadd.f32 %v555, %v1095
        %v1806 = vadd.f32 %v556, %v1097
        %v1807 = vadd.f32 %v557, %v1525
        %v1808 = vadd.f32 %v558, %v1101
        %v1809 = vadd.f32 %v559, %v1103
        %v1810 = vadd.f32 %v560, %v1530
        %v1811 = vadd.f32 %v561, %v1107
        %v1812 = vadd.f32 %v562, %v1109
        %v1813 = vadd.f32 %v563, %v1535
        %v1814 = vadd.f32 %v564, %v1113
        %v1815 = vadd.f32 %v565, %v1115
        %v1816 = vadd.f32 %v566, %v1540
        %v1817 = vadd.f32 %v567, %v1119
        %v1818 = vadd.f32 %v568, %v1121
        %v1819 = vadd.f32 %v569, %v1545
        %v1820 = vadd.f32 %v570, %v1125
        %v1821 = vadd.f32 %v571, %v1127
        %v1822 = vadd.f32 %v572, %v1550
        %v1823 = vadd.f32 %v573, %v1131
        %v1824 = vadd.f32 %v574, %v1133
        %v1825 = vadd.f32 %v575, %v1555
        %v1826 = vadd.f32 %v576, %v1137
        %v1827 = vadd.f32 %v577, %v1139
        %v1828 = vadd.f32 %v578, %v1560
        %v1829 = vadd.f32 %v579, %v1143
        %v1830 = vadd.f32 %v580, %v1145
        %v1831 = vadd.f32 %v581, %v1565
        %v1832 = vadd.f32 %v582, %v1149
        %v1833 = vadd.f32 %v583, %v1151
        %v1834 = vadd.f32 %v584, %v1570
        %v1835 = vadd.f32 %v585, %v1155
        %v1836 = vadd.f32 %v586, %v1157
        %v1837 = vadd.f32 %v587, %v1575
        %v1838 = vadd.f32 %v588, %v1161
        %v1839 = vadd.f32 %v589, %v1163
        %v1840 = vadd.f32 %v590, %v1580
        %v1841 = vadd.f32 %v591, %v1167
        %v1842 = vadd.f32 %v592, %v1169
        %v1843 = vadd.f32 %v593, %v1585
        %v1844 = vadd.f32 %v594, %v1173
        %v1845 = vadd.f32 %v595, %v1175
        %v1846 = vadd.f32 %v596, %v1590
        %v1847 = vadd.f32 %v597, %v1179
        %v1848 = vadd.f32 %v598, %v1181
        %v1849 = vadd.f32 %v599, %v1595
        %v1850 = vadd.f32 %v600, %v1185
        %v1851 = vadd.f32 %v601, %v1187
        %v1852 = vadd.f32 %v602, %v1600
        %v1853 = vadd.f32 %v603, %v1191
        %v1854 = vadd.f32 %v604, %v1193
        %v1855 = vadd.f32 %v605, %v1605
        %v1856 = vadd.f32 %v606, %v1197
        %v1857 = vadd.f32 %v607, %v1199
        %v1858 = vadd.f32 %v608, %v1610
        %v1859 = vadd.f32 %v609, %v1203
        %v1860 = vadd.f32 %v610, %v1205
        %v1861 = vadd.f32 %v611, %v1615
        %v1862 = vadd.f32 %v612, %v1209
        %v1863 = vadd.f32 %v613, %v1211
        %v1864 = vadd.f32 %v614, %v1620
        %v1865 = vadd.f32 %v615, %v1215
        %v1866 = vadd.f32 %v616, %v1217
        %v1867 = vadd.f32 %v617, %v1625
        %v1868 = vadd.f32 %v618, %v1221
        %v1869 = vadd.f32 %v619, %v1223
        %v1870 = vadd.f32 %v620, %v1630
        %v1871 = vadd.f32 %v621, %v1227
        %v1872 = vadd.f32 %v622, %v1229
        %v1873 = vadd.f32 %v623, %v1635
        %v1874 = vadd.f32 %v624, %v1233
        %v1875 = vadd.f32 %v625, %v1235
        %v1876 = vadd.f32 %v626, %v1640
        %v1877 = vadd.f32 %v627, %v1239
        %v1878 = vadd.f32 %v628, %v1241
        %v1879 = vadd.f32 %v629, %v1645
        %v1880 = vadd.f32 %v630, %v1245
        %v1881 = vadd.f32 %v631, %v1247
        %v1882 = vadd.f32 %v632, %v1650
        %v1883 = vadd.f32 %v633, %v1251
        %v1884 = vadd.f32 %v634, %v1253
        %v1885 = vadd.f32 %v635, %v1655
        %v1886 = vadd.f32 %v636, %v1257
        %v1887 = vadd.f32 %v637, %v1259
        %v1888 = vadd.f32 %v638, %v1660
        %v1889 = vadd.f32 %v639, %v1263
        %v1890 = vadd.f32 %v640, %v1265
        %v1891 = vadd.f32 %v641, %v1665
        %v1892 = vadd.f32 %v642, %v1269
        %v1893 = vadd.f32 %v643, %v1271
        %v1894 = vadd.f32 %v644, %v1670
        %v1895 = vadd.f32 %v645, %v1275
        %v1896 = vadd.f32 %v646, %v1277
        %v1897 = vadd.f32 %v647, %v1675
        %v1898 = vadd.f32 %v648, %v1281
        %v1899 = vadd.f32 %v649, %v1283
        %v1900 = vadd.f32 %v650, %v1680
        %v1901 = vadd.f32 %v651, %v1287
        %v1902 = vadd.f32 %v652, %v1289
        %v1903 = vadd.f32 %v653, %v1685
        %v1904 = vadd.f32 %v654, %v1293
        %v1905 = vadd.f32 %v655, %v1295
        %v1906 = vadd.f32 %v656, %v1690
        %v1907 = vadd.f32 %v657, %v1299
        %v1908 = vadd.f32 %v658, %v1301
        %v1909 = vadd.f32 %v659, %v1695
        %v1910 = vadd.f32 %v660, %v1305
        %v1911 = vadd.f32 %v661, %v1307
        %v1912 = vadd.f32 %v662, %v1700
        %v1913 = vadd.f32 %v663, %v1311
        %v1914 = vadd.f32 %v664, %v1313
        %v1915 = vadd.f32 %v665, %v1705
        %v1916 = vadd.f32 %v666, %v1317
        %v1917 = vadd.f32 %v667, %v1319
        %v1918 = vadd.f32 %v668, %v1710
        %v1919 = vadd.f32 %v669, %v1323
        %v1920 = vadd.f32 %v670, %v1325
        %v1921 = vadd.f32 %v671, %v1715
        %v1922 = vadd.f32 %v672, %v1329
        %v1923 = vadd.f32 %v673, %v1331
        %v1924 = vadd.f32 %v674, %v1720
        %v1925 = vadd.f32 %v675, %v1335
        %v1926 = vadd.f32 %v676, %v1337
        %v1927 = vadd.f32 %v677, %v1725
        %v1928 = vadd.f32 %v678, %v1341
        %v1929 = vadd.f32 %v679, %v1343
        %v1930 = vadd.f32 %v680, %v1730
        %v1931 = vadd.f32 %v681, %v1347
        %v1932 = vadd.f32 %v682, %v1349
        %v1933 = vadd.f32 %v683, %v1735
        %v1934 = vadd.f32 %v684, %v1353
        %v1935 = vadd.f32 %v685, %v1355
        %v1936 = vadd.f32 %v686, %v1740
        %v1937 = vadd.f32 %v687, %v1359
        %v1938 = vadd.f32 %v688, %v1361
        %v1939 = vadd.f32 %v689, %v1745
        %1940 = vst [vmem:[#allocation2] sm:$0xff] %v1748
        %1941 = vst [vmem:[#allocation2 + $0x8] sm:$0xff] %v1749
        %1942 = vst [vmem:[#allocation2 + $0x10] sm:$0xff] %v1750
        %1943 = vst [vmem:[#allocation2 + $0x18] sm:$0xff] %v1751
        %1944 = vst [vmem:[#allocation2 + $0x20] sm:$0xff] %v1752
        %1945 = vst [vmem:[#allocation2 + $0x28] sm:$0xff] %v1753
        %1946 = vst [vmem:[#allocation2 + $0x30] sm:$0xff] %v1754
        %1947 = vst [vmem:[#allocation2 + $0x38] sm:$0xff] %v1755
        %1948 = vst [vmem:[#allocation2 + $0x40] sm:$0xff] %v1756
        %1949 = vst [vmem:[#allocation2 + $0x48] sm:$0xff] %v1757
        %1950 = vst [vmem:[#allocation2 + $0x50] sm:$0xff] %v1758
        %1951 = vst [vmem:[#allocation2 + $0x58] sm:$0xff] %v1759
        %1952 = vst [vmem:[#allocation2 + $0x60] sm:$0xff] %v1760
        %1953 = vst [vmem:[#allocation2 + $0x68] sm:$0xff] %v1761
        %1954 = vst [vmem:[#allocation2 + $0x70] sm:$0xff] %v1762
        %1955 = vst [vmem:[#allocation2 + $0x78] sm:$0xff] %v1763
        %1956 = vst [vmem:[#allocation2 + $0x80] sm:$0xff] %v1764
        %1957 = vst [vmem:[#allocation2 + $0x88] sm:$0xff] %v1765
        %1958 = vst [vmem:[#allocation2 + $0x90] sm:$0xff] %v1766
        %1959 = vst [vmem:[#allocation2 + $0x98] sm:$0xff] %v1767
        %1960 = vst [vmem:[#allocation2 + $0xa0] sm:$0xff] %v1768
        %1961 = vst [vmem:[#allocation2 + $0xa8] sm:$0xff] %v1769
        %1962 = vst [vmem:[#allocation2 + $0xb0] sm:$0xff] %v1770
        %1963 = vst [vmem:[#allocation2 + $0xb8] sm:$0xff] %v1771
        %1964 = vst [vmem:[#allocation2 + $0xc0] sm:$0xff] %v1772
        %1965 = vst [vmem:[#allocation2 + $0xc8] sm:$0xff] %v1773
        %1966 = vst [vmem:[#allocation2 + $0xd0] sm:$0xff] %v1774
        %1967 = vst [vmem:[#allocation2 + $0xd8] sm:$0xff] %v1775
        %1968 = vst [vmem:[#allocation2 + $0xe0] sm:$0xff] %v1776
        %1969 = vst [vmem:[#allocation2 + $0xe8] sm:$0xff] %v1777
        %1970 = vst [vmem:[#allocation2 + $0xf0] sm:$0xff] %v1778
        %1971 = vst [vmem:[#allocation2 + $0xf8] sm:$0xff] %v1779
        %1972 = vst [vmem:[#allocation2 + $0x100] sm:$0xff] %v1780
        %1973 = vst [vmem:[#allocation2 + $0x108] sm:$0xff] %v1781
        %1974 = vst [vmem:[#allocation2 + $0x110] sm:$0xff] %v1782
        %1975 = vst [vmem:[#allocation2 + $0x118] sm:$0xff] %v1783
        %1976 = vst [vmem:[#allocation2 + $0x120] sm:$0xff] %v1784
        %1977 = vst [vmem:[#allocation2 + $0x128] sm:$0xff] %v1785
        %1978 = vst [vmem:[#allocation2 + $0x130] sm:$0xff] %v1786
        %1979 = vst [vmem:[#allocation2 + $0x138] sm:$0xff] %v1787
        %1980 = vst [vmem:[#allocation2 + $0x140] sm:$0xff] %v1788
        %1981 = vst [vmem:[#allocation2 + $0x148] sm:$0xff] %v1789
        %1982 = vst [vmem:[#allocation2 + $0x150] sm:$0xff] %v1790
        %1983 = vst [vmem:[#allocation2 + $0x158] sm:$0xff] %v1791
        %1984 = vst [vmem:[#allocation2 + $0x160] sm:$0xff] %v1792
        %1985 = vst [vmem:[#allocation2 + $0x168] sm:$0xff] %v1793
        %1986 = vst [vmem:[#allocation2 + $0x170] sm:$0xff] %v1794
        %1987 = vst [vmem:[#allocation2 + $0x178] sm:$0xff] %v1795
        %1988 = vst [vmem:[#allocation2 + $0x180] sm:$0xff] %v1796
        %1989 = vst [vmem:[#allocation2 + $0x188] sm:$0xff] %v1797
        %1990 = vst [vmem:[#allocation2 + $0x190] sm:$0xff] %v1798
        %1991 = vst [vmem:[#allocation2 + $0x198] sm:$0xff] %v1799
        %1992 = vst [vmem:[#allocation2 + $0x1a0] sm:$0xff] %v1800
        %1993 = vst [vmem:[#allocation2 + $0x1a8] sm:$0xff] %v1801
        %1994 = vst [vmem:[#allocation2 + $0x1b0] sm:$0xff] %v1802
        %1995 = vst [vmem:[#allocation2 + $0x1b8] sm:$0xff] %v1803
        %1996 = vst [vmem:[#allocation2 + $0x1c0] sm:$0xff] %v1804
        %1997 = vst [vmem:[#allocation2 + $0x1c8] sm:$0xff] %v1805
        %1998 = vst [vmem:[#allocation2 + $0x1d0] sm:$0xff] %v1806
        %1999 = vst [vmem:[#allocation2 + $0x1d8] sm:$0xff] %v1807
        %2000 = vst [vmem:[#allocation2 + $0x1e0] sm:$0xff] %v1808
        %2001 = vst [vmem:[#allocation2 + $0x1e8] sm:$0xff] %v1809
        %2002 = vst [vmem:[#allocation2 + $0x1f0] sm:$0xff] %v1810
        %2003 = vst [vmem:[#allocation2 + $0x1f8] sm:$0xff] %v1811
        %2004 = vst [vmem:[#allocation2 + $0x200] sm:$0xff] %v1812
        %2005 = vst [vmem:[#allocation2 + $0x208] sm:$0xff] %v1813
        %2006 = vst [vmem:[#allocation2 + $0x210] sm:$0xff] %v1814
        %2007 = vst [vmem:[#allocation2 + $0x218] sm:$0xff] %v1815
        %2008 = vst [vmem:[#allocation2 + $0x220] sm:$0xff] %v1816
        %2009 = vst [vmem:[#allocation2 + $0x228] sm:$0xff] %v1817
        %2010 = vst [vmem:[#allocation2 + $0x230] sm:$0xff] %v1818
        %2011 = vst [vmem:[#allocation2 + $0x238] sm:$0xff] %v1819
        %2012 = vst [vmem:[#allocation2 + $0x240] sm:$0xff] %v1820
        %2013 = vst [vmem:[#allocation2 + $0x248] sm:$0xff] %v1821
        %2014 = vst [vmem:[#allocation2 + $0x250] sm:$0xff] %v1822
        %2015 = vst [vmem:[#allocation2 + $0x258] sm:$0xff] %v1823
        %2016 = vst [vmem:[#allocation2 + $0x260] sm:$0xff] %v1824
        %2017 = vst [vmem:[#allocation2 + $0x268] sm:$0xff] %v1825
        %2018 = vst [vmem:[#allocation2 + $0x270] sm:$0xff] %v1826
        %2019 = vst [vmem:[#allocation2 + $0x278] sm:$0xff] %v1827
        %2020 = vst [vmem:[#allocation2 + $0x280] sm:$0xff] %v1828
        %2021 = vst [vmem:[#allocation2 + $0x288] sm:$0xff] %v1829
        %2022 = vst [vmem:[#allocation2 + $0x290] sm:$0xff] %v1830
        %2023 = vst [vmem:[#allocation2 + $0x298] sm:$0xff] %v1831
        %2024 = vst [vmem:[#allocation2 + $0x2a0] sm:$0xff] %v1832
        %2025 = vst [vmem:[#allocation2 + $0x2a8] sm:$0xff] %v1833
        %2026 = vst [vmem:[#allocation2 + $0x2b0] sm:$0xff] %v1834
        %2027 = vst [vmem:[#allocation2 + $0x2b8] sm:$0xff] %v1835
        %2028 = vst [vmem:[#allocation2 + $0x2c0] sm:$0xff] %v1836
        %2029 = vst [vmem:[#allocation2 + $0x2c8] sm:$0xff] %v1837
        %2030 = vst [vmem:[#allocation2 + $0x2d0] sm:$0xff] %v1838
        %2031 = vst [vmem:[#allocation2 + $0x2d8] sm:$0xff] %v1839
        %2032 = vst [vmem:[#allocation2 + $0x2e0] sm:$0xff] %v1840
        %2033 = vst [vmem:[#allocation2 + $0x2e8] sm:$0xff] %v1841
        %2034 = vst [vmem:[#allocation2 + $0x2f0] sm:$0xff] %v1842
        %2035 = vst [vmem:[#allocation2 + $0x2f8] sm:$0xff] %v1843
        %2036 = vst [vmem:[#allocation2 + $0x300] sm:$0xff] %v1844
        %2037 = vst [vmem:[#allocation2 + $0x308] sm:$0xff] %v1845
        %2038 = vst [vmem:[#allocation2 + $0x310] sm:$0xff] %v1846
        %2039 = vst [vmem:[#allocation2 + $0x318] sm:$0xff] %v1847
        %2040 = vst [vmem:[#allocation2 + $0x320] sm:$0xff] %v1848
        %2041 = vst [vmem:[#allocation2 + $0x328] sm:$0xff] %v1849
        %2042 = vst [vmem:[#allocation2 + $0x330] sm:$0xff] %v1850
        %2043 = vst [vmem:[#allocation2 + $0x338] sm:$0xff] %v1851
        %2044 = vst [vmem:[#allocation2 + $0x340] sm:$0xff] %v1852
        %2045 = vst [vmem:[#allocation2 + $0x348] sm:$0xff] %v1853
        %2046 = vst [vmem:[#allocation2 + $0x350] sm:$0xff] %v1854
        %2047 = vst [vmem:[#allocation2 + $0x358] sm:$0xff] %v1855
        %2048 = vst [vmem:[#allocation2 + $0x360] sm:$0xff] %v1856
        %2049 = vst [vmem:[#allocation2 + $0x368] sm:$0xff] %v1857
        %2050 = vst [vmem:[#allocation2 + $0x370] sm:$0xff] %v1858
        %2051 = vst [vmem:[#allocation2 + $0x378] sm:$0xff] %v1859
        %2052 = vst [vmem:[#allocation2 + $0x380] sm:$0xff] %v1860
        %2053 = vst [vmem:[#allocation2 + $0x388] sm:$0xff] %v1861
        %2054 = vst [vmem:[#allocation2 + $0x390] sm:$0xff] %v1862
        %2055 = vst [vmem:[#allocation2 + $0x398] sm:$0xff] %v1863
        %2056 = vst [vmem:[#allocation2 + $0x3a0] sm:$0xff] %v1864
        %2057 = vst [vmem:[#allocation2 + $0x3a8] sm:$0xff] %v1865
        %2058 = vst [vmem:[#allocation2 + $0x3b0] sm:$0xff] %v1866
        %2059 = vst [vmem:[#allocation2 + $0x3b8] sm:$0xff] %v1867
        %2060 = vst [vmem:[#allocation2 + $0x3c0] sm:$0xff] %v1868
        %2061 = vst [vmem:[#allocation2 + $0x3c8] sm:$0xff] %v1869
        %2062 = vst [vmem:[#allocation2 + $0x3d0] sm:$0xff] %v1870
        %2063 = vst [vmem:[#allocation2 + $0x3d8] sm:$0xff] %v1871
        %2064 = vst [vmem:[#allocation2 + $0x3e0] sm:$0xff] %v1872
        %2065 = vst [vmem:[#allocation2 + $0x3e8] sm:$0xff] %v1873
        %2066 = vst [vmem:[#allocation2 + $0x3f0] sm:$0xff] %v1874
        %2067 = vst [vmem:[#allocation2 + $0x3f8] sm:$0xff] %v1875
        %2068 = vst [vmem:[#allocation2 + $0x400] sm:$0xff] %v1876
        %2069 = vst [vmem:[#allocation2 + $0x408] sm:$0xff] %v1877
        %2070 = vst [vmem:[#allocation2 + $0x410] sm:$0xff] %v1878
        %2071 = vst [vmem:[#allocation2 + $0x418] sm:$0xff] %v1879
        %2072 = vst [vmem:[#allocation2 + $0x420] sm:$0xff] %v1880
        %2073 = vst [vmem:[#allocation2 + $0x428] sm:$0xff] %v1881
        %2074 = vst [vmem:[#allocation2 + $0x430] sm:$0xff] %v1882
        %2075 = vst [vmem:[#allocation2 + $0x438] sm:$0xff] %v1883
        %2076 = vst [vmem:[#allocation2 + $0x440] sm:$0xff] %v1884
        %2077 = vst [vmem:[#allocation2 + $0x448] sm:$0xff] %v1885
        %2078 = vst [vmem:[#allocation2 + $0x450] sm:$0xff] %v1886
        %2079 = vst [vmem:[#allocation2 + $0x458] sm:$0xff] %v1887
        %2080 = vst [vmem:[#allocation2 + $0x460] sm:$0xff] %v1888
        %2081 = vst [vmem:[#allocation2 + $0x468] sm:$0xff] %v1889
        %2082 = vst [vmem:[#allocation2 + $0x470] sm:$0xff] %v1890
        %2083 = vst [vmem:[#allocation2 + $0x478] sm:$0xff] %v1891
        %2084 = vst [vmem:[#allocation2 + $0x480] sm:$0xff] %v1892
        %2085 = vst [vmem:[#allocation2 + $0x488] sm:$0xff] %v1893
        %2086 = vst [vmem:[#allocation2 + $0x490] sm:$0xff] %v1894
        %2087 = vst [vmem:[#allocation2 + $0x498] sm:$0xff] %v1895
        %2088 = vst [vmem:[#allocation2 + $0x4a0] sm:$0xff] %v1896
        %2089 = vst [vmem:[#allocation2 + $0x4a8] sm:$0xff] %v1897
        %2090 = vst [vmem:[#allocation2 + $0x4b0] sm:$0xff] %v1898
        %2091 = vst [vmem:[#allocation2 + $0x4b8] sm:$0xff] %v1899
        %2092 = vst [vmem:[#allocation2 + $0x4c0] sm:$0xff] %v1900
        %2093 = vst [vmem:[#allocation2 + $0x4c8] sm:$0xff] %v1901
        %2094 = vst [vmem:[#allocation2 + $0x4d0] sm:$0xff] %v1902
        %2095 = vst [vmem:[#allocation2 + $0x4d8] sm:$0xff] %v1903
        %2096 = vst [vmem:[#allocation2 + $0x4e0] sm:$0xff] %v1904
        %2097 = vst [vmem:[#allocation2 + $0x4e8] sm:$0xff] %v1905
        %2098 = vst [vmem:[#allocation2 + $0x4f0] sm:$0xff] %v1906
        %2099 = vst [vmem:[#allocation2 + $0x4f8] sm:$0xff] %v1907
        %2100 = vst [vmem:[#allocation2 + $0x500] sm:$0xff] %v1908
        %2101 = vst [vmem:[#allocation2 + $0x508] sm:$0xff] %v1909
        %2102 = vst [vmem:[#allocation2 + $0x510] sm:$0xff] %v1910
        %2103 = vst [vmem:[#allocation2 + $0x518] sm:$0xff] %v1911
        %2104 = vst [vmem:[#allocation2 + $0x520] sm:$0xff] %v1912
        %2105 = vst [vmem:[#allocation2 + $0x528] sm:$0xff] %v1913
        %2106 = vst [vmem:[#allocation2 + $0x530] sm:$0xff] %v1914
        %2107 = vst [vmem:[#allocation2 + $0x538] sm:$0xff] %v1915
        %2108 = vst [vmem:[#allocation2 + $0x540] sm:$0xff] %v1916
        %2109 = vst [vmem:[#allocation2 + $0x548] sm:$0xff] %v1917
        %2110 = vst [vmem:[#allocation2 + $0x550] sm:$0xff] %v1918
        %2111 = vst [vmem:[#allocation2 + $0x558] sm:$0xff] %v1919
        %2112 = vst [vmem:[#allocation2 + $0x560] sm:$0xff] %v1920
        %2113 = vst [vmem:[#allocation2 + $0x568] sm:$0xff] %v1921
        %2114 = vst [vmem:[#allocation2 + $0x570] sm:$0xff] %v1922
        %2115 = vst [vmem:[#allocation2 + $0x578] sm:$0xff] %v1923
        %2116 = vst [vmem:[#allocation2 + $0x580] sm:$0xff] %v1924
        %2117 = vst [vmem:[#allocation2 + $0x588] sm:$0xff] %v1925
        %2118 = vst [vmem:[#allocation2 + $0x590] sm:$0xff] %v1926
        %2119 = vst [vmem:[#allocation2 + $0x598] sm:$0xff] %v1927
        %2120 = vst [vmem:[#allocation2 + $0x5a0] sm:$0xff] %v1928
        %2121 = vst [vmem:[#allocation2 + $0x5a8] sm:$0xff] %v1929
        %2122 = vst [vmem:[#allocation2 + $0x5b0] sm:$0xff] %v1930
        %2123 = vst [vmem:[#allocation2 + $0x5b8] sm:$0xff] %v1931
        %2124 = vst [vmem:[#allocation2 + $0x5c0] sm:$0xff] %v1932
        %2125 = vst [vmem:[#allocation2 + $0x5c8] sm:$0xff] %v1933
        %2126 = vst [vmem:[#allocation2 + $0x5d0] sm:$0xff] %v1934
        %2127 = vst [vmem:[#allocation2 + $0x5d8] sm:$0xff] %v1935
        %2128 = vst [vmem:[#allocation2 + $0x5e0] sm:$0xff] %v1936
        %2129 = vst [vmem:[#allocation2 + $0x5e8] sm:$0xff] %v1937
        %2130 = vst [vmem:[#allocation2 + $0x5f0] sm:$0xff] %v1938
        %2131 = vst [vmem:[#allocation2 + $0x5f8] sm:$0xff] %v1939
        // Predicated region
        $region49: #{tpu_custom_call.1} parent=31 // pred_check
          %p2132 = pneg %p302
        $region50: #{tpu_custom_call.1} parent=31 // pred_check_branch
          %2134 = sbr.rel (%p2132) target = $region52
        $region51: #{tpu_custom_call.1} parent=31 // pred_region
          %v2135 = vld [vmem:[#allocation2] sm:$0xff]
          %v2136 = vld [vmem:[#allocation2 + $0x8] sm:$0xff]
          %v2137 = vld [vmem:[#allocation2 + $0x10] sm:$0xff]
          %v2138 = vld [vmem:[#allocation2 + $0x18] sm:$0xff]
          %v2139 = vld [vmem:[#allocation2 + $0x20] sm:$0xff]
          %v2140 = vld [vmem:[#allocation2 + $0x28] sm:$0xff]
          %v2141 = vld [vmem:[#allocation2 + $0x30] sm:$0xff]
          %v2142 = vld [vmem:[#allocation2 + $0x38] sm:$0xff]
          %v2143 = vld [vmem:[#allocation2 + $0x40] sm:$0xff]
          %v2144 = vld [vmem:[#allocation2 + $0x48] sm:$0xff]
          %v2145 = vld [vmem:[#allocation2 + $0x50] sm:$0xff]
          %v2146 = vld [vmem:[#allocation2 + $0x58] sm:$0xff]
          %v2147 = vld [vmem:[#allocation2 + $0x60] sm:$0xff]
          %v2148 = vld [vmem:[#allocation2 + $0x68] sm:$0xff]
          %v2149 = vld [vmem:[#allocation2 + $0x70] sm:$0xff]
          %v2150 = vld [vmem:[#allocation2 + $0x78] sm:$0xff]
          %v2151 = vld [vmem:[#allocation2 + $0x80] sm:$0xff]
          %v2152 = vld [vmem:[#allocation2 + $0x88] sm:$0xff]
          %v2153 = vld [vmem:[#allocation2 + $0x90] sm:$0xff]
          %v2154 = vld [vmem:[#allocation2 + $0x98] sm:$0xff]
          %v2155 = vld [vmem:[#allocation2 + $0xa0] sm:$0xff]
          %v2156 = vld [vmem:[#allocation2 + $0xa8] sm:$0xff]
          %v2157 = vld [vmem:[#allocation2 + $0xb0] sm:$0xff]
          %v2158 = vld [vmem:[#allocation2 + $0xb8] sm:$0xff]
          %v2159 = vld [vmem:[#allocation2 + $0xc0] sm:$0xff]
          %v2160 = vld [vmem:[#allocation2 + $0xc8] sm:$0xff]
          %v2161 = vld [vmem:[#allocation2 + $0xd0] sm:$0xff]
          %v2162 = vld [vmem:[#allocation2 + $0xd8] sm:$0xff]
          %v2163 = vld [vmem:[#allocation2 + $0xe0] sm:$0xff]
          %v2164 = vld [vmem:[#allocation2 + $0xe8] sm:$0xff]
          %v2165 = vld [vmem:[#allocation2 + $0xf0] sm:$0xff]
          %v2166 = vld [vmem:[#allocation2 + $0xf8] sm:$0xff]
          %v2167 = vld [vmem:[#allocation2 + $0x100] sm:$0xff]
          %v2168 = vld [vmem:[#allocation2 + $0x108] sm:$0xff]
          %v2169 = vld [vmem:[#allocation2 + $0x110] sm:$0xff]
          %v2170 = vld [vmem:[#allocation2 + $0x118] sm:$0xff]
          %v2171 = vld [vmem:[#allocation2 + $0x120] sm:$0xff]
          %v2172 = vld [vmem:[#allocation2 + $0x128] sm:$0xff]
          %v2173 = vld [vmem:[#allocation2 + $0x130] sm:$0xff]
          %v2174 = vld [vmem:[#allocation2 + $0x138] sm:$0xff]
          %v2175 = vld [vmem:[#allocation2 + $0x140] sm:$0xff]
          %v2176 = vld [vmem:[#allocation2 + $0x148] sm:$0xff]
          %v2177 = vld [vmem:[#allocation2 + $0x150] sm:$0xff]
          %v2178 = vld [vmem:[#allocation2 + $0x158] sm:$0xff]
          %v2179 = vld [vmem:[#allocation2 + $0x160] sm:$0xff]
          %v2180 = vld [vmem:[#allocation2 + $0x168] sm:$0xff]
          %v2181 = vld [vmem:[#allocation2 + $0x170] sm:$0xff]
          %v2182 = vld [vmem:[#allocation2 + $0x178] sm:$0xff]
          %v2183 = vld [vmem:[#allocation2 + $0x180] sm:$0xff]
          %v2184 = vld [vmem:[#allocation2 + $0x188] sm:$0xff]
          %v2185 = vld [vmem:[#allocation2 + $0x190] sm:$0xff]
          %v2186 = vld [vmem:[#allocation2 + $0x198] sm:$0xff]
          %v2187 = vld [vmem:[#allocation2 + $0x1a0] sm:$0xff]
          %v2188 = vld [vmem:[#allocation2 + $0x1a8] sm:$0xff]
          %v2189 = vld [vmem:[#allocation2 + $0x1b0] sm:$0xff]
          %v2190 = vld [vmem:[#allocation2 + $0x1b8] sm:$0xff]
          %v2191 = vld [vmem:[#allocation2 + $0x1c0] sm:$0xff]
          %v2192 = vld [vmem:[#allocation2 + $0x1c8] sm:$0xff]
          %v2193 = vld [vmem:[#allocation2 + $0x1d0] sm:$0xff]
          %v2194 = vld [vmem:[#allocation2 + $0x1d8] sm:$0xff]
          %v2195 = vld [vmem:[#allocation2 + $0x1e0] sm:$0xff]
          %v2196 = vld [vmem:[#allocation2 + $0x1e8] sm:$0xff]
          %v2197 = vld [vmem:[#allocation2 + $0x1f0] sm:$0xff]
          %v2198 = vld [vmem:[#allocation2 + $0x1f8] sm:$0xff]
          %v2199 = vld [vmem:[#allocation2 + $0x200] sm:$0xff]
          %v2200 = vld [vmem:[#allocation2 + $0x208] sm:$0xff]
          %v2201 = vld [vmem:[#allocation2 + $0x210] sm:$0xff]
          %v2202 = vld [vmem:[#allocation2 + $0x218] sm:$0xff]
          %v2203 = vld [vmem:[#allocation2 + $0x220] sm:$0xff]
          %v2204 = vld [vmem:[#allocation2 + $0x228] sm:$0xff]
          %v2205 = vld [vmem:[#allocation2 + $0x230] sm:$0xff]
          %v2206 = vld [vmem:[#allocation2 + $0x238] sm:$0xff]
          %v2207 = vld [vmem:[#allocation2 + $0x240] sm:$0xff]
          %v2208 = vld [vmem:[#allocation2 + $0x248] sm:$0xff]
          %v2209 = vld [vmem:[#allocation2 + $0x250] sm:$0xff]
          %v2210 = vld [vmem:[#allocation2 + $0x258] sm:$0xff]
          %v2211 = vld [vmem:[#allocation2 + $0x260] sm:$0xff]
          %v2212 = vld [vmem:[#allocation2 + $0x268] sm:$0xff]
          %v2213 = vld [vmem:[#allocation2 + $0x270] sm:$0xff]
          %v2214 = vld [vmem:[#allocation2 + $0x278] sm:$0xff]
          %v2215 = vld [vmem:[#allocation2 + $0x280] sm:$0xff]
          %v2216 = vld [vmem:[#allocation2 + $0x288] sm:$0xff]
          %v2217 = vld [vmem:[#allocation2 + $0x290] sm:$0xff]
          %v2218 = vld [vmem:[#allocation2 + $0x298] sm:$0xff]
          %v2219 = vld [vmem:[#allocation2 + $0x2a0] sm:$0xff]
          %v2220 = vld [vmem:[#allocation2 + $0x2a8] sm:$0xff]
          %v2221 = vld [vmem:[#allocation2 + $0x2b0] sm:$0xff]
          %v2222 = vld [vmem:[#allocation2 + $0x2b8] sm:$0xff]
          %v2223 = vld [vmem:[#allocation2 + $0x2c0] sm:$0xff]
          %v2224 = vld [vmem:[#allocation2 + $0x2c8] sm:$0xff]
          %v2225 = vld [vmem:[#allocation2 + $0x2d0] sm:$0xff]
          %v2226 = vld [vmem:[#allocation2 + $0x2d8] sm:$0xff]
          %v2227 = vld [vmem:[#allocation2 + $0x2e0] sm:$0xff]
          %v2228 = vld [vmem:[#allocation2 + $0x2e8] sm:$0xff]
          %v2229 = vld [vmem:[#allocation2 + $0x2f0] sm:$0xff]
          %v2230 = vld [vmem:[#allocation2 + $0x2f8] sm:$0xff]
          %v2231 = vld [vmem:[#allocation2 + $0x300] sm:$0xff]
          %v2232 = vld [vmem:[#allocation2 + $0x308] sm:$0xff]
          %v2233 = vld [vmem:[#allocation2 + $0x310] sm:$0xff]
          %v2234 = vld [vmem:[#allocation2 + $0x318] sm:$0xff]
          %v2235 = vld [vmem:[#allocation2 + $0x320] sm:$0xff]
          %v2236 = vld [vmem:[#allocation2 + $0x328] sm:$0xff]
          %v2237 = vld [vmem:[#allocation2 + $0x330] sm:$0xff]
          %v2238 = vld [vmem:[#allocation2 + $0x338] sm:$0xff]
          %v2239 = vld [vmem:[#allocation2 + $0x340] sm:$0xff]
          %v2240 = vld [vmem:[#allocation2 + $0x348] sm:$0xff]
          %v2241 = vld [vmem:[#allocation2 + $0x350] sm:$0xff]
          %v2242 = vld [vmem:[#allocation2 + $0x358] sm:$0xff]
          %v2243 = vld [vmem:[#allocation2 + $0x360] sm:$0xff]
          %v2244 = vld [vmem:[#allocation2 + $0x368] sm:$0xff]
          %v2245 = vld [vmem:[#allocation2 + $0x370] sm:$0xff]
          %v2246 = vld [vmem:[#allocation2 + $0x378] sm:$0xff]
          %v2247 = vld [vmem:[#allocation2 + $0x380] sm:$0xff]
          %v2248 = vld [vmem:[#allocation2 + $0x388] sm:$0xff]
          %v2249 = vld [vmem:[#allocation2 + $0x390] sm:$0xff]
          %v2250 = vld [vmem:[#allocation2 + $0x398] sm:$0xff]
          %v2251 = vld [vmem:[#allocation2 + $0x3a0] sm:$0xff]
          %v2252 = vld [vmem:[#allocation2 + $0x3a8] sm:$0xff]
          %v2253 = vld [vmem:[#allocation2 + $0x3b0] sm:$0xff]
          %v2254 = vld [vmem:[#allocation2 + $0x3b8] sm:$0xff]
          %v2255 = vld [vmem:[#allocation2 + $0x3c0] sm:$0xff]
          %v2256 = vld [vmem:[#allocation2 + $0x3c8] sm:$0xff]
          %v2257 = vld [vmem:[#allocation2 + $0x3d0] sm:$0xff]
          %v2258 = vld [vmem:[#allocation2 + $0x3d8] sm:$0xff]
          %v2259 = vld [vmem:[#allocation2 + $0x3e0] sm:$0xff]
          %v2260 = vld [vmem:[#allocation2 + $0x3e8] sm:$0xff]
          %v2261 = vld [vmem:[#allocation2 + $0x3f0] sm:$0xff]
          %v2262 = vld [vmem:[#allocation2 + $0x3f8] sm:$0xff]
          %v2263 = vld [vmem:[#allocation2 + $0x400] sm:$0xff]
          %v2264 = vld [vmem:[#allocation2 + $0x408] sm:$0xff]
          %v2265 = vld [vmem:[#allocation2 + $0x410] sm:$0xff]
          %v2266 = vld [vmem:[#allocation2 + $0x418] sm:$0xff]
          %v2267 = vld [vmem:[#allocation2 + $0x420] sm:$0xff]
          %v2268 = vld [vmem:[#allocation2 + $0x428] sm:$0xff]
          %v2269 = vld [vmem:[#allocation2 + $0x430] sm:$0xff]
          %v2270 = vld [vmem:[#allocation2 + $0x438] sm:$0xff]
          %v2271 = vld [vmem:[#allocation2 + $0x440] sm:$0xff]
          %v2272 = vld [vmem:[#allocation2 + $0x448] sm:$0xff]
          %v2273 = vld [vmem:[#allocation2 + $0x450] sm:$0xff]
          %v2274 = vld [vmem:[#allocation2 + $0x458] sm:$0xff]
          %v2275 = vld [vmem:[#allocation2 + $0x460] sm:$0xff]
          %v2276 = vld [vmem:[#allocation2 + $0x468] sm:$0xff]
          %v2277 = vld [vmem:[#allocation2 + $0x470] sm:$0xff]
          %v2278 = vld [vmem:[#allocation2 + $0x478] sm:$0xff]
          %v2279 = vld [vmem:[#allocation2 + $0x480] sm:$0xff]
          %v2280 = vld [vmem:[#allocation2 + $0x488] sm:$0xff]
          %v2281 = vld [vmem:[#allocation2 + $0x490] sm:$0xff]
          %v2282 = vld [vmem:[#allocation2 + $0x498] sm:$0xff]
          %v2283 = vld [vmem:[#allocation2 + $0x4a0] sm:$0xff]
          %v2284 = vld [vmem:[#allocation2 + $0x4a8] sm:$0xff]
          %v2285 = vld [vmem:[#allocation2 + $0x4b0] sm:$0xff]
          %v2286 = vld [vmem:[#allocation2 + $0x4b8] sm:$0xff]
          %v2287 = vld [vmem:[#allocation2 + $0x4c0] sm:$0xff]
          %v2288 = vld [vmem:[#allocation2 + $0x4c8] sm:$0xff]
          %v2289 = vld [vmem:[#allocation2 + $0x4d0] sm:$0xff]
          %v2290 = vld [vmem:[#allocation2 + $0x4d8] sm:$0xff]
          %v2291 = vld [vmem:[#allocation2 + $0x4e0] sm:$0xff]
          %v2292 = vld [vmem:[#allocation2 + $0x4e8] sm:$0xff]
          %v2293 = vld [vmem:[#allocation2 + $0x4f0] sm:$0xff]
          %v2294 = vld [vmem:[#allocation2 + $0x4f8] sm:$0xff]
          %v2295 = vld [vmem:[#allocation2 + $0x500] sm:$0xff]
          %v2296 = vld [vmem:[#allocation2 + $0x508] sm:$0xff]
          %v2297 = vld [vmem:[#allocation2 + $0x510] sm:$0xff]
          %v2298 = vld [vmem:[#allocation2 + $0x518] sm:$0xff]
          %v2299 = vld [vmem:[#allocation2 + $0x520] sm:$0xff]
          %v2300 = vld [vmem:[#allocation2 + $0x528] sm:$0xff]
          %v2301 = vld [vmem:[#allocation2 + $0x530] sm:$0xff]
          %v2302 = vld [vmem:[#allocation2 + $0x538] sm:$0xff]
          %v2303 = vld [vmem:[#allocation2 + $0x540] sm:$0xff]
          %v2304 = vld [vmem:[#allocation2 + $0x548] sm:$0xff]
          %v2305 = vld [vmem:[#allocation2 + $0x550] sm:$0xff]
          %v2306 = vld [vmem:[#allocation2 + $0x558] sm:$0xff]
          %v2307 = vld [vmem:[#allocation2 + $0x560] sm:$0xff]
          %v2308 = vld [vmem:[#allocation2 + $0x568] sm:$0xff]
          %v2309 = vld [vmem:[#allocation2 + $0x570] sm:$0xff]
          %v2310 = vld [vmem:[#allocation2 + $0x578] sm:$0xff]
          %v2311 = vld [vmem:[#allocation2 + $0x580] sm:$0xff]
          %v2312 = vld [vmem:[#allocation2 + $0x588] sm:$0xff]
          %v2313 = vld [vmem:[#allocation2 + $0x590] sm:$0xff]
          %v2314 = vld [vmem:[#allocation2 + $0x598] sm:$0xff]
          %v2315 = vld [vmem:[#allocation2 + $0x5a0] sm:$0xff]
          %v2316 = vld [vmem:[#allocation2 + $0x5a8] sm:$0xff]
          %v2317 = vld [vmem:[#allocation2 + $0x5b0] sm:$0xff]
          %v2318 = vld [vmem:[#allocation2 + $0x5b8] sm:$0xff]
          %v2319 = vld [vmem:[#allocation2 + $0x5c0] sm:$0xff]
          %v2320 = vld [vmem:[#allocation2 + $0x5c8] sm:$0xff]
          %v2321 = vld [vmem:[#allocation2 + $0x5d0] sm:$0xff]
          %v2322 = vld [vmem:[#allocation2 + $0x5d8] sm:$0xff]
          %v2323 = vld [vmem:[#allocation2 + $0x5e0] sm:$0xff]
          %v2324 = vld [vmem:[#allocation2 + $0x5e8] sm:$0xff]
          %v2325 = vld [vmem:[#allocation2 + $0x5f0] sm:$0xff]
          %v2326 = vld [vmem:[#allocation2 + $0x5f8] sm:$0xff]
          %v2327 = vld [vmem:[%s262] sm:$0x7]
          %v2329 = vlaneseq
          %v2330 = vshrl.u32 %v2329, 7
          %v2331 = vsub.s32 0, %v2330
          %v2332 = vrot.slane %v2327, %v2331
          %v2333 = vlaneseq
          %v2334 = vshrl.u32 %v2333, 7
          %v2335 = vsub.s32 1, %v2334
          %v2336 = vrot.slane %v2327, %v2335
          %v2337 = vlaneseq
          %v2338 = vshrl.u32 %v2337, 7
          %v2339 = vsub.s32 2, %v2338
          %v2340 = vrot.slane %v2327, %v2339
          %v2344 = vadd.f32 %v2135, %v2332
          %v2345 = vadd.f32 %v2136, %v2336
          %v2346 = vadd.f32 %v2137, %v2340
          %v2347 = vadd.f32 %v2138, %v2332
          %v2348 = vadd.f32 %v2139, %v2336
          %v2349 = vadd.f32 %v2140, %v2340
          %v2350 = vadd.f32 %v2141, %v2332
          %v2351 = vadd.f32 %v2142, %v2336
          %v2352 = vadd.f32 %v2143, %v2340
          %v2353 = vadd.f32 %v2144, %v2332
          %v2354 = vadd.f32 %v2145, %v2336
          %v2355 = vadd.f32 %v2146, %v2340
          %v2356 = vadd.f32 %v2147, %v2332
          %v2357 = vadd.f32 %v2148, %v2336
          %v2358 = vadd.f32 %v2149, %v2340
          %v2359 = vadd.f32 %v2150, %v2332
          %v2360 = vadd.f32 %v2151, %v2336
          %v2361 = vadd.f32 %v2152, %v2340
          %v2362 = vadd.f32 %v2153, %v2332
          %v2363 = vadd.f32 %v2154, %v2336
          %v2364 = vadd.f32 %v2155, %v2340
          %v2365 = vadd.f32 %v2156, %v2332
          %v2366 = vadd.f32 %v2157, %v2336
          %v2367 = vadd.f32 %v2158, %v2340
          %v2368 = vadd.f32 %v2159, %v2332
          %v2369 = vadd.f32 %v2160, %v2336
          %v2370 = vadd.f32 %v2161, %v2340
          %v2371 = vadd.f32 %v2162, %v2332
          %v2372 = vadd.f32 %v2163, %v2336
          %v2373 = vadd.f32 %v2164, %v2340
          %v2374 = vadd.f32 %v2165, %v2332
          %v2375 = vadd.f32 %v2166, %v2336
          %v2376 = vadd.f32 %v2167, %v2340
          %v2377 = vadd.f32 %v2168, %v2332
          %v2378 = vadd.f32 %v2169, %v2336
          %v2379 = vadd.f32 %v2170, %v2340
          %v2380 = vadd.f32 %v2171, %v2332
          %v2381 = vadd.f32 %v2172, %v2336
          %v2382 = vadd.f32 %v2173, %v2340
          %v2383 = vadd.f32 %v2174, %v2332
          %v2384 = vadd.f32 %v2175, %v2336
          %v2385 = vadd.f32 %v2176, %v2340
          %v2386 = vadd.f32 %v2177, %v2332
          %v2387 = vadd.f32 %v2178, %v2336
          %v2388 = vadd.f32 %v2179, %v2340
          %v2389 = vadd.f32 %v2180, %v2332
          %v2390 = vadd.f32 %v2181, %v2336
          %v2391 = vadd.f32 %v2182, %v2340
          %v2392 = vadd.f32 %v2183, %v2332
          %v2393 = vadd.f32 %v2184, %v2336
          %v2394 = vadd.f32 %v2185, %v2340
          %v2395 = vadd.f32 %v2186, %v2332
          %v2396 = vadd.f32 %v2187, %v2336
          %v2397 = vadd.f32 %v2188, %v2340
          %v2398 = vadd.f32 %v2189, %v2332
          %v2399 = vadd.f32 %v2190, %v2336
          %v2400 = vadd.f32 %v2191, %v2340
          %v2401 = vadd.f32 %v2192, %v2332
          %v2402 = vadd.f32 %v2193, %v2336
          %v2403 = vadd.f32 %v2194, %v2340
          %v2404 = vadd.f32 %v2195, %v2332
          %v2405 = vadd.f32 %v2196, %v2336
          %v2406 = vadd.f32 %v2197, %v2340
          %v2407 = vadd.f32 %v2198, %v2332
          %v2408 = vadd.f32 %v2199, %v2336
          %v2409 = vadd.f32 %v2200, %v2340
          %v2410 = vadd.f32 %v2201, %v2332
          %v2411 = vadd.f32 %v2202, %v2336
          %v2412 = vadd.f32 %v2203, %v2340
          %v2413 = vadd.f32 %v2204, %v2332
          %v2414 = vadd.f32 %v2205, %v2336
          %v2415 = vadd.f32 %v2206, %v2340
          %v2416 = vadd.f32 %v2207, %v2332
          %v2417 = vadd.f32 %v2208, %v2336
          %v2418 = vadd.f32 %v2209, %v2340
          %v2419 = vadd.f32 %v2210, %v2332
          %v2420 = vadd.f32 %v2211, %v2336
          %v2421 = vadd.f32 %v2212, %v2340
          %v2422 = vadd.f32 %v2213, %v2332
          %v2423 = vadd.f32 %v2214, %v2336
          %v2424 = vadd.f32 %v2215, %v2340
          %v2425 = vadd.f32 %v2216, %v2332
          %v2426 = vadd.f32 %v2217, %v2336
          %v2427 = vadd.f32 %v2218, %v2340
          %v2428 = vadd.f32 %v2219, %v2332
          %v2429 = vadd.f32 %v2220, %v2336
          %v2430 = vadd.f32 %v2221, %v2340
          %v2431 = vadd.f32 %v2222, %v2332
          %v2432 = vadd.f32 %v2223, %v2336
          %v2433 = vadd.f32 %v2224, %v2340
          %v2434 = vadd.f32 %v2225, %v2332
          %v2435 = vadd.f32 %v2226, %v2336
          %v2436 = vadd.f32 %v2227, %v2340
          %v2437 = vadd.f32 %v2228, %v2332
          %v2438 = vadd.f32 %v2229, %v2336
          %v2439 = vadd.f32 %v2230, %v2340
          %v2440 = vadd.f32 %v2231, %v2332
          %v2441 = vadd.f32 %v2232, %v2336
          %v2442 = vadd.f32 %v2233, %v2340
          %v2443 = vadd.f32 %v2234, %v2332
          %v2444 = vadd.f32 %v2235, %v2336
          %v2445 = vadd.f32 %v2236, %v2340
          %v2446 = vadd.f32 %v2237, %v2332
          %v2447 = vadd.f32 %v2238, %v2336
          %v2448 = vadd.f32 %v2239, %v2340
          %v2449 = vadd.f32 %v2240, %v2332
          %v2450 = vadd.f32 %v2241, %v2336
          %v2451 = vadd.f32 %v2242, %v2340
          %v2452 = vadd.f32 %v2243, %v2332
          %v2453 = vadd.f32 %v2244, %v2336
          %v2454 = vadd.f32 %v2245, %v2340
          %v2455 = vadd.f32 %v2246, %v2332
          %v2456 = vadd.f32 %v2247, %v2336
          %v2457 = vadd.f32 %v2248, %v2340
          %v2458 = vadd.f32 %v2249, %v2332
          %v2459 = vadd.f32 %v2250, %v2336
          %v2460 = vadd.f32 %v2251, %v2340
          %v2461 = vadd.f32 %v2252, %v2332
          %v2462 = vadd.f32 %v2253, %v2336
          %v2463 = vadd.f32 %v2254, %v2340
          %v2464 = vadd.f32 %v2255, %v2332
          %v2465 = vadd.f32 %v2256, %v2336
          %v2466 = vadd.f32 %v2257, %v2340
          %v2467 = vadd.f32 %v2258, %v2332
          %v2468 = vadd.f32 %v2259, %v2336
          %v2469 = vadd.f32 %v2260, %v2340
          %v2470 = vadd.f32 %v2261, %v2332
          %v2471 = vadd.f32 %v2262, %v2336
          %v2472 = vadd.f32 %v2263, %v2340
          %v2473 = vadd.f32 %v2264, %v2332
          %v2474 = vadd.f32 %v2265, %v2336
          %v2475 = vadd.f32 %v2266, %v2340
          %v2476 = vadd.f32 %v2267, %v2332
          %v2477 = vadd.f32 %v2268, %v2336
          %v2478 = vadd.f32 %v2269, %v2340
          %v2479 = vadd.f32 %v2270, %v2332
          %v2480 = vadd.f32 %v2271, %v2336
          %v2481 = vadd.f32 %v2272, %v2340
          %v2482 = vadd.f32 %v2273, %v2332
          %v2483 = vadd.f32 %v2274, %v2336
          %v2484 = vadd.f32 %v2275, %v2340
          %v2485 = vadd.f32 %v2276, %v2332
          %v2486 = vadd.f32 %v2277, %v2336
          %v2487 = vadd.f32 %v2278, %v2340
          %v2488 = vadd.f32 %v2279, %v2332
          %v2489 = vadd.f32 %v2280, %v2336
          %v2490 = vadd.f32 %v2281, %v2340
          %v2491 = vadd.f32 %v2282, %v2332
          %v2492 = vadd.f32 %v2283, %v2336
          %v2493 = vadd.f32 %v2284, %v2340
          %v2494 = vadd.f32 %v2285, %v2332
          %v2495 = vadd.f32 %v2286, %v2336
          %v2496 = vadd.f32 %v2287, %v2340
          %v2497 = vadd.f32 %v2288, %v2332
          %v2498 = vadd.f32 %v2289, %v2336
          %v2499 = vadd.f32 %v2290, %v2340
          %v2500 = vadd.f32 %v2291, %v2332
          %v2501 = vadd.f32 %v2292, %v2336
          %v2502 = vadd.f32 %v2293, %v2340
          %v2503 = vadd.f32 %v2294, %v2332
          %v2504 = vadd.f32 %v2295, %v2336
          %v2505 = vadd.f32 %v2296, %v2340
          %v2506 = vadd.f32 %v2297, %v2332
          %v2507 = vadd.f32 %v2298, %v2336
          %v2508 = vadd.f32 %v2299, %v2340
          %v2509 = vadd.f32 %v2300, %v2332
          %v2510 = vadd.f32 %v2301, %v2336
          %v2511 = vadd.f32 %v2302, %v2340
          %v2512 = vadd.f32 %v2303, %v2332
          %v2513 = vadd.f32 %v2304, %v2336
          %v2514 = vadd.f32 %v2305, %v2340
          %v2515 = vadd.f32 %v2306, %v2332
          %v2516 = vadd.f32 %v2307, %v2336
          %v2517 = vadd.f32 %v2308, %v2340
          %v2518 = vadd.f32 %v2309, %v2332
          %v2519 = vadd.f32 %v2310, %v2336
          %v2520 = vadd.f32 %v2311, %v2340
          %v2521 = vadd.f32 %v2312, %v2332
          %v2522 = vadd.f32 %v2313, %v2336
          %v2523 = vadd.f32 %v2314, %v2340
          %v2524 = vadd.f32 %v2315, %v2332
          %v2525 = vadd.f32 %v2316, %v2336
          %v2526 = vadd.f32 %v2317, %v2340
          %v2527 = vadd.f32 %v2318, %v2332
          %v2528 = vadd.f32 %v2319, %v2336
          %v2529 = vadd.f32 %v2320, %v2340
          %v2530 = vadd.f32 %v2321, %v2332
          %v2531 = vadd.f32 %v2322, %v2336
          %v2532 = vadd.f32 %v2323, %v2340
          %v2533 = vadd.f32 %v2324, %v2332
          %v2534 = vadd.f32 %v2325, %v2336
          %v2535 = vadd.f32 %v2326, %v2340
          %2536 = vst [vmem:[%s294] sm:$0xff] %v2344
          %2537 = vst [vmem:[%s294 + $0x8] sm:$0xff] %v2345
          %2538 = vst [vmem:[%s294 + $0x10] sm:$0xff] %v2346
          %2539 = vst [vmem:[%s294 + $0x18] sm:$0xff] %v2347
          %2540 = vst [vmem:[%s294 + $0x20] sm:$0xff] %v2348
          %2541 = vst [vmem:[%s294 + $0x28] sm:$0xff] %v2349
          %2542 = vst [vmem:[%s294 + $0x30] sm:$0xff] %v2350
          %2543 = vst [vmem:[%s294 + $0x38] sm:$0xff] %v2351
          %2544 = vst [vmem:[%s294 + $0x40] sm:$0xff] %v2352
          %2545 = vst [vmem:[%s294 + $0x48] sm:$0xff] %v2353
          %2546 = vst [vmem:[%s294 + $0x50] sm:$0xff] %v2354
          %2547 = vst [vmem:[%s294 + $0x58] sm:$0xff] %v2355
          %2548 = vst [vmem:[%s294 + $0x60] sm:$0xff] %v2356
          %2549 = vst [vmem:[%s294 + $0x68] sm:$0xff] %v2357
          %2550 = vst [vmem:[%s294 + $0x70] sm:$0xff] %v2358
          %2551 = vst [vmem:[%s294 + $0x78] sm:$0xff] %v2359
          %2552 = vst [vmem:[%s294 + $0x80] sm:$0xff] %v2360
          %2553 = vst [vmem:[%s294 + $0x88] sm:$0xff] %v2361
          %2554 = vst [vmem:[%s294 + $0x90] sm:$0xff] %v2362
          %2555 = vst [vmem:[%s294 + $0x98] sm:$0xff] %v2363
          %2556 = vst [vmem:[%s294 + $0xa0] sm:$0xff] %v2364
          %2557 = vst [vmem:[%s294 + $0xa8] sm:$0xff] %v2365
          %2558 = vst [vmem:[%s294 + $0xb0] sm:$0xff] %v2366
          %2559 = vst [vmem:[%s294 + $0xb8] sm:$0xff] %v2367
          %2560 = vst [vmem:[%s294 + $0xc0] sm:$0xff] %v2368
          %2561 = vst [vmem:[%s294 + $0xc8] sm:$0xff] %v2369
          %2562 = vst [vmem:[%s294 + $0xd0] sm:$0xff] %v2370
          %2563 = vst [vmem:[%s294 + $0xd8] sm:$0xff] %v2371
          %2564 = vst [vmem:[%s294 + $0xe0] sm:$0xff] %v2372
          %2565 = vst [vmem:[%s294 + $0xe8] sm:$0xff] %v2373
          %2566 = vst [vmem:[%s294 + $0xf0] sm:$0xff] %v2374
          %2567 = vst [vmem:[%s294 + $0xf8] sm:$0xff] %v2375
          %2568 = vst [vmem:[%s294 + $0x100] sm:$0xff] %v2376
          %2569 = vst [vmem:[%s294 + $0x108] sm:$0xff] %v2377
          %2570 = vst [vmem:[%s294 + $0x110] sm:$0xff] %v2378
          %2571 = vst [vmem:[%s294 + $0x118] sm:$0xff] %v2379
          %2572 = vst [vmem:[%s294 + $0x120] sm:$0xff] %v2380
          %2573 = vst [vmem:[%s294 + $0x128] sm:$0xff] %v2381
          %2574 = vst [vmem:[%s294 + $0x130] sm:$0xff] %v2382
          %2575 = vst [vmem:[%s294 + $0x138] sm:$0xff] %v2383
          %2576 = vst [vmem:[%s294 + $0x140] sm:$0xff] %v2384
          %2577 = vst [vmem:[%s294 + $0x148] sm:$0xff] %v2385
          %2578 = vst [vmem:[%s294 + $0x150] sm:$0xff] %v2386
          %2579 = vst [vmem:[%s294 + $0x158] sm:$0xff] %v2387
          %2580 = vst [vmem:[%s294 + $0x160] sm:$0xff] %v2388
          %2581 = vst [vmem:[%s294 + $0x168] sm:$0xff] %v2389
          %2582 = vst [vmem:[%s294 + $0x170] sm:$0xff] %v2390
          %2583 = vst [vmem:[%s294 + $0x178] sm:$0xff] %v2391
          %2584 = vst [vmem:[%s294 + $0x180] sm:$0xff] %v2392
          %2585 = vst [vmem:[%s294 + $0x188] sm:$0xff] %v2393
          %2586 = vst [vmem:[%s294 + $0x190] sm:$0xff] %v2394
          %2587 = vst [vmem:[%s294 + $0x198] sm:$0xff] %v2395
          %2588 = vst [vmem:[%s294 + $0x1a0] sm:$0xff] %v2396
          %2589 = vst [vmem:[%s294 + $0x1a8] sm:$0xff] %v2397
          %2590 = vst [vmem:[%s294 + $0x1b0] sm:$0xff] %v2398
          %2591 = vst [vmem:[%s294 + $0x1b8] sm:$0xff] %v2399
          %2592 = vst [vmem:[%s294 + $0x1c0] sm:$0xff] %v2400
          %2593 = vst [vmem:[%s294 + $0x1c8] sm:$0xff] %v2401
          %2594 = vst [vmem:[%s294 + $0x1d0] sm:$0xff] %v2402
          %2595 = vst [vmem:[%s294 + $0x1d8] sm:$0xff] %v2403
          %2596 = vst [vmem:[%s294 + $0x1e0] sm:$0xff] %v2404
          %2597 = vst [vmem:[%s294 + $0x1e8] sm:$0xff] %v2405
          %2598 = vst [vmem:[%s294 + $0x1f0] sm:$0xff] %v2406
          %2599 = vst [vmem:[%s294 + $0x1f8] sm:$0xff] %v2407
          %2600 = vst [vmem:[%s294 + $0x200] sm:$0xff] %v2408
          %2601 = vst [vmem:[%s294 + $0x208] sm:$0xff] %v2409
          %2602 = vst [vmem:[%s294 + $0x210] sm:$0xff] %v2410
          %2603 = vst [vmem:[%s294 + $0x218] sm:$0xff] %v2411
          %2604 = vst [vmem:[%s294 + $0x220] sm:$0xff] %v2412
          %2605 = vst [vmem:[%s294 + $0x228] sm:$0xff] %v2413
          %2606 = vst [vmem:[%s294 + $0x230] sm:$0xff] %v2414
          %2607 = vst [vmem:[%s294 + $0x238] sm:$0xff] %v2415
          %2608 = vst [vmem:[%s294 + $0x240] sm:$0xff] %v2416
          %2609 = vst [vmem:[%s294 + $0x248] sm:$0xff] %v2417
          %2610 = vst [vmem:[%s294 + $0x250] sm:$0xff] %v2418
          %2611 = vst [vmem:[%s294 + $0x258] sm:$0xff] %v2419
          %2612 = vst [vmem:[%s294 + $0x260] sm:$0xff] %v2420
          %2613 = vst [vmem:[%s294 + $0x268] sm:$0xff] %v2421
          %2614 = vst [vmem:[%s294 + $0x270] sm:$0xff] %v2422
          %2615 = vst [vmem:[%s294 + $0x278] sm:$0xff] %v2423
          %2616 = vst [vmem:[%s294 + $0x280] sm:$0xff] %v2424
          %2617 = vst [vmem:[%s294 + $0x288] sm:$0xff] %v2425
          %2618 = vst [vmem:[%s294 + $0x290] sm:$0xff] %v2426
          %2619 = vst [vmem:[%s294 + $0x298] sm:$0xff] %v2427
          %2620 = vst [vmem:[%s294 + $0x2a0] sm:$0xff] %v2428
          %2621 = vst [vmem:[%s294 + $0x2a8] sm:$0xff] %v2429
          %2622 = vst [vmem:[%s294 + $0x2b0] sm:$0xff] %v2430
          %2623 = vst [vmem:[%s294 + $0x2b8] sm:$0xff] %v2431
          %2624 = vst [vmem:[%s294 + $0x2c0] sm:$0xff] %v2432
          %2625 = vst [vmem:[%s294 + $0x2c8] sm:$0xff] %v2433
          %2626 = vst [vmem:[%s294 + $0x2d0] sm:$0xff] %v2434
          %2627 = vst [vmem:[%s294 + $0x2d8] sm:$0xff] %v2435
          %2628 = vst [vmem:[%s294 + $0x2e0] sm:$0xff] %v2436
          %2629 = vst [vmem:[%s294 + $0x2e8] sm:$0xff] %v2437
          %2630 = vst [vmem:[%s294 + $0x2f0] sm:$0xff] %v2438
          %2631 = vst [vmem:[%s294 + $0x2f8] sm:$0xff] %v2439
          %2632 = vst [vmem:[%s294 + $0x300] sm:$0xff] %v2440
          %2633 = vst [vmem:[%s294 + $0x308] sm:$0xff] %v2441
          %2634 = vst [vmem:[%s294 + $0x310] sm:$0xff] %v2442
          %2635 = vst [vmem:[%s294 + $0x318] sm:$0xff] %v2443
          %2636 = vst [vmem:[%s294 + $0x320] sm:$0xff] %v2444
          %2637 = vst [vmem:[%s294 + $0x328] sm:$0xff] %v2445
          %2638 = vst [vmem:[%s294 + $0x330] sm:$0xff] %v2446
          %2639 = vst [vmem:[%s294 + $0x338] sm:$0xff] %v2447
          %2640 = vst [vmem:[%s294 + $0x340] sm:$0xff] %v2448
          %2641 = vst [vmem:[%s294 + $0x348] sm:$0xff] %v2449
          %2642 = vst [vmem:[%s294 + $0x350] sm:$0xff] %v2450
          %2643 = vst [vmem:[%s294 + $0x358] sm:$0xff] %v2451
          %2644 = vst [vmem:[%s294 + $0x360] sm:$0xff] %v2452
          %2645 = vst [vmem:[%s294 + $0x368] sm:$0xff] %v2453
          %2646 = vst [vmem:[%s294 + $0x370] sm:$0xff] %v2454
          %2647 = vst [vmem:[%s294 + $0x378] sm:$0xff] %v2455
          %2648 = vst [vmem:[%s294 + $0x380] sm:$0xff] %v2456
          %2649 = vst [vmem:[%s294 + $0x388] sm:$0xff] %v2457
          %2650 = vst [vmem:[%s294 + $0x390] sm:$0xff] %v2458
          %2651 = vst [vmem:[%s294 + $0x398] sm:$0xff] %v2459
          %2652 = vst [vmem:[%s294 + $0x3a0] sm:$0xff] %v2460
          %2653 = vst [vmem:[%s294 + $0x3a8] sm:$0xff] %v2461
          %2654 = vst [vmem:[%s294 + $0x3b0] sm:$0xff] %v2462
          %2655 = vst [vmem:[%s294 + $0x3b8] sm:$0xff] %v2463
          %2656 = vst [vmem:[%s294 + $0x3c0] sm:$0xff] %v2464
          %2657 = vst [vmem:[%s294 + $0x3c8] sm:$0xff] %v2465
          %2658 = vst [vmem:[%s294 + $0x3d0] sm:$0xff] %v2466
          %2659 = vst [vmem:[%s294 + $0x3d8] sm:$0xff] %v2467
          %2660 = vst [vmem:[%s294 + $0x3e0] sm:$0xff] %v2468
          %2661 = vst [vmem:[%s294 + $0x3e8] sm:$0xff] %v2469
          %2662 = vst [vmem:[%s294 + $0x3f0] sm:$0xff] %v2470
          %2663 = vst [vmem:[%s294 + $0x3f8] sm:$0xff] %v2471
          %2664 = vst [vmem:[%s294 + $0x400] sm:$0xff] %v2472
          %2665 = vst [vmem:[%s294 + $0x408] sm:$0xff] %v2473
          %2666 = vst [vmem:[%s294 + $0x410] sm:$0xff] %v2474
          %2667 = vst [vmem:[%s294 + $0x418] sm:$0xff] %v2475
          %2668 = vst [vmem:[%s294 + $0x420] sm:$0xff] %v2476
          %2669 = vst [vmem:[%s294 + $0x428] sm:$0xff] %v2477
          %2670 = vst [vmem:[%s294 + $0x430] sm:$0xff] %v2478
          %2671 = vst [vmem:[%s294 + $0x438] sm:$0xff] %v2479
          %2672 = vst [vmem:[%s294 + $0x440] sm:$0xff] %v2480
          %2673 = vst [vmem:[%s294 + $0x448] sm:$0xff] %v2481
          %2674 = vst [vmem:[%s294 + $0x450] sm:$0xff] %v2482
          %2675 = vst [vmem:[%s294 + $0x458] sm:$0xff] %v2483
          %2676 = vst [vmem:[%s294 + $0x460] sm:$0xff] %v2484
          %2677 = vst [vmem:[%s294 + $0x468] sm:$0xff] %v2485
          %2678 = vst [vmem:[%s294 + $0x470] sm:$0xff] %v2486
          %2679 = vst [vmem:[%s294 + $0x478] sm:$0xff] %v2487
          %2680 = vst [vmem:[%s294 + $0x480] sm:$0xff] %v2488
          %2681 = vst [vmem:[%s294 + $0x488] sm:$0xff] %v2489
          %2682 = vst [vmem:[%s294 + $0x490] sm:$0xff] %v2490
          %2683 = vst [vmem:[%s294 + $0x498] sm:$0xff] %v2491
          %2684 = vst [vmem:[%s294 + $0x4a0] sm:$0xff] %v2492
          %2685 = vst [vmem:[%s294 + $0x4a8] sm:$0xff] %v2493
          %2686 = vst [vmem:[%s294 + $0x4b0] sm:$0xff] %v2494
          %2687 = vst [vmem:[%s294 + $0x4b8] sm:$0xff] %v2495
          %2688 = vst [vmem:[%s294 + $0x4c0] sm:$0xff] %v2496
          %2689 = vst [vmem:[%s294 + $0x4c8] sm:$0xff] %v2497
          %2690 = vst [vmem:[%s294 + $0x4d0] sm:$0xff] %v2498
          %2691 = vst [vmem:[%s294 + $0x4d8] sm:$0xff] %v2499
          %2692 = vst [vmem:[%s294 + $0x4e0] sm:$0xff] %v2500
          %2693 = vst [vmem:[%s294 + $0x4e8] sm:$0xff] %v2501
          %2694 = vst [vmem:[%s294 + $0x4f0] sm:$0xff] %v2502
          %2695 = vst [vmem:[%s294 + $0x4f8] sm:$0xff] %v2503
          %2696 = vst [vmem:[%s294 + $0x500] sm:$0xff] %v2504
          %2697 = vst [vmem:[%s294 + $0x508] sm:$0xff] %v2505
          %2698 = vst [vmem:[%s294 + $0x510] sm:$0xff] %v2506
          %2699 = vst [vmem:[%s294 + $0x518] sm:$0xff] %v2507
          %2700 = vst [vmem:[%s294 + $0x520] sm:$0xff] %v2508
          %2701 = vst [vmem:[%s294 + $0x528] sm:$0xff] %v2509
          %2702 = vst [vmem:[%s294 + $0x530] sm:$0xff] %v2510
          %2703 = vst [vmem:[%s294 + $0x538] sm:$0xff] %v2511
          %2704 = vst [vmem:[%s294 + $0x540] sm:$0xff] %v2512
          %2705 = vst [vmem:[%s294 + $0x548] sm:$0xff] %v2513
          %2706 = vst [vmem:[%s294 + $0x550] sm:$0xff] %v2514
          %2707 = vst [vmem:[%s294 + $0x558] sm:$0xff] %v2515
          %2708 = vst [vmem:[%s294 + $0x560] sm:$0xff] %v2516
          %2709 = vst [vmem:[%s294 + $0x568] sm:$0xff] %v2517
          %2710 = vst [vmem:[%s294 + $0x570] sm:$0xff] %v2518
          %2711 = vst [vmem:[%s294 + $0x578] sm:$0xff] %v2519
          %2712 = vst [vmem:[%s294 + $0x580] sm:$0xff] %v2520
          %2713 = vst [vmem:[%s294 + $0x588] sm:$0xff] %v2521
          %2714 = vst [vmem:[%s294 + $0x590] sm:$0xff] %v2522
          %2715 = vst [vmem:[%s294 + $0x598] sm:$0xff] %v2523
          %2716 = vst [vmem:[%s294 + $0x5a0] sm:$0xff] %v2524
          %2717 = vst [vmem:[%s294 + $0x5a8] sm:$0xff] %v2525
          %2718 = vst [vmem:[%s294 + $0x5b0] sm:$0xff] %v2526
          %2719 = vst [vmem:[%s294 + $0x5b8] sm:$0xff] %v2527
          %2720 = vst [vmem:[%s294 + $0x5c0] sm:$0xff] %v2528
          %2721 = vst [vmem:[%s294 + $0x5c8] sm:$0xff] %v2529
          %2722 = vst [vmem:[%s294 + $0x5d0] sm:$0xff] %v2530
          %2723 = vst [vmem:[%s294 + $0x5d8] sm:$0xff] %v2531
          %2724 = vst [vmem:[%s294 + $0x5e0] sm:$0xff] %v2532
          %2725 = vst [vmem:[%s294 + $0x5e8] sm:$0xff] %v2533
          %2726 = vst [vmem:[%s294 + $0x5f0] sm:$0xff] %v2534
          %2727 = vst [vmem:[%s294 + $0x5f8] sm:$0xff] %v2535
        $region52: #{tpu_custom_call.1} parent=31 // pred_fallthru
          _
        %s2728 = sand.u32 %s134, 1
        %s2729 = scalar_lea.sflag [#allocation5], %s2728
        %s2730 = sand.u32 %s134, 1
        %s2731 = smul.addr %s2730, 1536
        %s2732 = scalar_lea.vmem [#allocation9], %s2731
        // Predicated region
        $region53: #{tpu_custom_call.1} parent=31 // pred_check
          %p2733 = pneg %p144
        $region54: #{tpu_custom_call.1} parent=31 // pred_check_branch
          %2735 = sbr.rel (%p2733) target = $region56
        $region55: #{tpu_custom_call.1} parent=31 // pred_region
          %s2736 = smul.u32 64, %s28
          %s2737 = smul.u32 3, %s29
          %s2739 = ssub.s32 24576, 24576
          %2740 = vsyncadd %s2729, %s2739
          %s2741 = smul.addr %s2736, 6
          %s2742 = sadd.s32 %s2737, %s2741
          %s2743 = smul.addr %s2742, 128
          %s2744 = scalar_lea.hbm %s3, %s2743
          %s2745 = sshll.u32 %s2732, 4
          %s2746 = int_to_ptr.vmem [resolvable:$true] %s2745
          %2751 = dma.vmem_to_hbm [thread:$0]  %s2746, 24576, %s2744, %s2729, 384, 768, 24
        $region56: #{tpu_custom_call.1} parent=31 // pred_fallthru
          _
      $region32: #{tpu_custom_call.1} parent=5 // pred_fallthru
        _
      %p2752 = scmp.le.s32.totalorder 2, %s18
      // Predicated region
      $region57: #{tpu_custom_call.1} parent=5 // pred_check
        %p2753 = pneg %p2752
      $region58: #{tpu_custom_call.1} parent=5 // pred_check_branch
        %2755 = sbr.rel (%p2753) target = $region60
      $region59: #{tpu_custom_call.1} parent=5 // pred_region
        %s2756 = ssub.s32 %s18, 2
        // Predicated region
        $region61: #{tpu_custom_call.1} parent=59 // pred_check
          %p2757 = pneg %p150
        $region62: #{tpu_custom_call.1} parent=59 // pred_check_branch
          %2759 = sbr.rel (%p2757) target = $region64
        $region63: #{tpu_custom_call.1} parent=59 // pred_region
          %s2760 = sand.u32 %s135, 1
          %s2761 = scalar_lea.sflag [#allocation5], %s2760
          %s2762 = sand.u32 %s135, 1
          %s2763 = smul.addr %s2762, 1536
          %s2764 = scalar_lea.vmem [#allocation9], %s2763
          %2765 = dma.done %s2761, 24576
        $region64: #{tpu_custom_call.1} parent=59 // pred_fallthru
          _
      $region60: #{tpu_custom_call.1} parent=5 // pred_fallthru
        _
    $region6: #{tpu_custom_call.1} parent=1 // loop_footer
      %s22 = sadd.s32 1, %s18
    $region7: #{tpu_custom_call.1} parent=1 // loop_footer_branch
      %17 = sbr.rel target = $region3
    $region8: #{tpu_custom_call.1} parent=1 // loop_exit
      _
    %2766 = vsyncpa [#allocation4], 1
    %s2767 = scalar_lea.sflag [#allocation4], 1
    %2768 = vsyncpa %s2767, 1
    %2769 = vsyncpa [#allocation7], 1
    %s2770 = scalar_lea.sflag [#allocation7], 1
    %2771 = vsyncpa %s2770, 1
    %2772 = vsyncpa [#allocation5], 1
    %s2773 = scalar_lea.sflag [#allocation5], 1
    %2774 = vsyncpa %s2773, 1

</llo_original>
